<compile_context>
chip_gen: v5e
topology: v5e:2x2
jax: 0.10.0
libtpu: 0.0.40
codegen_flags: <defaults>
</compile_context>

<pallas_src>
import math
from functools import partial

import jax
import jax.numpy as jnp
from jax import lax
from jax.experimental import pallas as pl
from jax.experimental.pallas import tpu as pltpu


_VMEM_LIMIT = 48 * 1024 * 1024   # above the v5e 16 MiB / v6e-v7x 32 MiB scoped defaults


# ---------------------------------------------------------------------------
# Pallas kernels
# ---------------------------------------------------------------------------

def _conv1x1_kernel(x_ref, w_ref, b_ref, o_ref):
    # x_ref: (1, M, K) f32   w_ref: (K, Cout) bf16   b_ref: (1, Cout) f32
    x = x_ref[0].astype(jnp.bfloat16)                                 # (M, K)
    y = jnp.dot(x, w_ref[...], preferred_element_type=jnp.float32)    # MXU, f32 acc
    o_ref[0] = y + b_ref[...]


def conv1x1(x_flat, w, b):
    """CoordConv's 1x1 conv. x_flat: (B, H*W, K) f32, w: (K, Cout) bf16, b: (1, Cout)."""
    B, M, K = x_flat.shape
    Cout = w.shape[1]
    return pl.pallas_call(
        _conv1x1_kernel,
        out_shape=jax.ShapeDtypeStruct((B, M, Cout), jnp.float32),
        grid_spec=pltpu.PrefetchScalarGridSpec(
            num_scalar_prefetch=0,
            grid=(B,),
            in_specs=[
                pl.BlockSpec((1, M, K), lambda b: (b, 0, 0)),
                pl.BlockSpec((K, Cout), lambda b: (0, 0)),
                pl.BlockSpec((1, Cout), lambda b: (0, 0)),
            ],
            out_specs=pl.BlockSpec((1, M, Cout), lambda b: (b, 0, 0)),
        ),
        compiler_params=pltpu.CompilerParams(
            dimension_semantics=("parallel",),
            vmem_limit_bytes=_VMEM_LIMIT),
    )(x_flat, w, b)


def _convblock_kernel(x_ref, sc1_ref, sh1_ref, w1_ref, sc2_ref, sh2_ref, w2_ref,
                      sc3_ref, sh3_ref, w3_ref, o_ref, acc1, acc2, acc3, *, width):
    # x_ref / o_ref: (1, M, C) with M = H*W flattened row-major (row length = width).
    _, M, C = x_ref.shape
    W = width
    C2, C4 = C // 2, C // 4

    # Column index of each flattened row: used to zero the wrapped entries produced
    # by the circular sublane rolls (i.e. the zero padding at the left/right edges).
    iota = lax.broadcasted_iota(jnp.int32, (M, 1), 0)
    col = (iota & (W - 1)) if (W & (W - 1)) == 0 else (iota % W)
    not_first_col = col != 0
    not_last_col = col != (W - 1)

    def branch(src, sc_ref, sh_ref, w_ref, acc_ref):
        # folded BN (eval-mode) + ReLU in f32 on the VPU
        y = jnp.maximum(src * sc_ref[...] + sh_ref[...], 0.0)         # (M, Cin) f32
        # dx = -1 / +1 taps via XLU roll + edge mask (no padded scratch, no
        # unaligned VMEM copies).  roll(y, 1) == y[m-1]; roll(y, M-1) == y[m+1].
        left = jnp.where(not_first_col, pltpu.roll(y, 1, axis=0), 0.0)
        right = jnp.where(not_last_col, pltpu.roll(y, M - 1, axis=0), 0.0)
        # K-stacked im2col row: (M, 3*Cin) bf16 feeds the MXU (3 matmuls, not 9).
        patch = jnp.concatenate(
            [left.astype(jnp.bfloat16), y.astype(jnp.bfloat16),
             right.astype(jnp.bfloat16)], axis=-1)
        # dy taps: aligned row shifts (multiples of W rows) of the f32 matmul
        # results, accumulated in-place into the VMEM scratch accumulator.
        acc_ref[...] = jnp.dot(patch, w_ref[1], preferred_element_type=jnp.float32)
        t_up = jnp.dot(patch, w_ref[0], preferred_element_type=jnp.float32)
        acc_ref[pl.ds(W, M - W), :] += t_up[: M - W]       # output row h <- input h-1
        t_dn = jnp.dot(patch, w_ref[2], preferred_element_type=jnp.float32)
        acc_ref[pl.ds(0, M - W), :] += t_dn[W:]            # output row h <- input h+1
        return acc_ref[...]

    out1 = branch(x_ref[0], sc1_ref, sh1_ref, w1_ref, acc1)   # (M, C/2)
    out2 = branch(out1,     sc2_ref, sh2_ref, w2_ref, acc2)   # (M, C/4)
    out3 = branch(out2,     sc3_ref, sh3_ref, w3_ref, acc3)   # (M, C/4)

    # cat(out1, out2, out3) + residual, written as direct sliced stores
    # (no extra (M, C) concat buffer; downsample is None since Cin == Cout).
    o_ref[0, :, 0:C2] = out1 + x_ref[0, :, 0:C2]
    o_ref[0, :, C2:C2 + C4] = out2 + x_ref[0, :, C2:C2 + C4]
    o_ref[0, :, C2 + C4:C] = out3 + x_ref[0, :, C2 + C4:C]


def run_convblock(bp, x_flat, width):
    """ConvBlock(C, C) forward on flattened input. x_flat: (B, H*W, C) f32."""
    B, M, C = x_flat.shape
    C2, C4 = C // 2, C // 4
    kernel = partial(_convblock_kernel, width=width)
    return pl.pallas_call(
        kernel,
        out_shape=jax.ShapeDtypeStruct((B, M, C), jnp.float32),
        grid_spec=pltpu.PrefetchScalarGridSpec(
            num_scalar_prefetch=0,
            grid=(B,),
            in_specs=[
                pl.BlockSpec((1, M, C), lambda b: (b, 0, 0)),
                pl.BlockSpec((1, C), lambda b: (0, 0)),
                pl.BlockSpec((1, C), lambda b: (0, 0)),
                pl.BlockSpec((3, 3 * C, C2), lambda b: (0, 0, 0)),
                pl.BlockSpec((1, C2), lambda b: (0, 0)),
                pl.BlockSpec((1, C2), lambda b: (0, 0)),
                pl.BlockSpec((3, 3 * C2, C4), lambda b: (0, 0, 0)),
                pl.BlockSpec((1, C4), lambda b: (0, 0)),
                pl.BlockSpec((1, C4), lambda b: (0, 0)),
                pl.BlockSpec((3, 3 * C4, C4), lambda b: (0, 0, 0)),
            ],
            out_specs=pl.BlockSpec((1, M, C), lambda b: (b, 0, 0)),
            scratch_shapes=[
                pltpu.VMEM((M, C2), jnp.float32),
                pltpu.VMEM((M, C4), jnp.float32),
                pltpu.VMEM((M, C4), jnp.float32),
            ],
        ),
        compiler_params=pltpu.CompilerParams(
            dimension_semantics=("parallel",),
            vmem_limit_bytes=_VMEM_LIMIT),
    )(x_flat, bp['s1'], bp['sh1'], bp['w1'],
              bp['s2'], bp['sh2'], bp['w2'],
              bp['s3'], bp['sh3'], bp['w3'])


def convblock_nhwc(bp, x):
    B, H, W, C = x.shape
    y = run_convblock(bp, x.reshape(B, H * W, C), W)
    return y.reshape(B, H, W, C)


# ---------------------------------------------------------------------------
# XLA glue (pool / upsample / coords / recursion)
# ---------------------------------------------------------------------------

def avg_pool2(x):
    B, H, W, C = x.shape
    return x.reshape(B, H // 2, 2, W // 2, 2, C).mean(axis=(2, 4))


def upsample2_nearest(x):
    return jnp.repeat(jnp.repeat(x, 2, axis=1), 2, axis=2)


def hg_level(params, level, inp):
    # TODO(synk): fuse avg_pool / upsample / add into the adjacent ConvBlock kernels
    # to remove the extra HBM round trips at the real 64x64x256 config.
    up1 = convblock_nhwc(params[f'b1_{level}'], inp)
    low1 = avg_pool2(inp)
    low1 = convblock_nhwc(params[f'b2_{level}'], low1)
    if level > 1:
        low2 = hg_level(params, level - 1, low1)
    else:
        low2 = convblock_nhwc(params[f'b2_plus_{level}'], low1)
    low3 = convblock_nhwc(params[f'b3_{level}'], low2)
    up2 = upsample2_nearest(low3)
    return up1 + up2


def hourglass_forward(params, x_nchw, heatmap_nchw, depth):
    """Returns (out NCHW, last_channel NCHW) matching HourGlass.forward."""
    x = jnp.transpose(x_nchw, (0, 2, 3, 1)).astype(jnp.float32)       # NHWC
    B, H, W, C = x.shape

    # ---- AddCoordsTh (with_r=True, with_boundary=True) ----
    xx_1d = (jnp.arange(H, dtype=jnp.float32) / (H - 1)) * 2.0 - 1.0  # varies along H
    yy_1d = (jnp.arange(W, dtype=jnp.float32) / (W - 1)) * 2.0 - 1.0  # varies along W
    xx = jnp.broadcast_to(xx_1d[:, None], (H, W))
    yy = jnp.broadcast_to(yy_1d[None, :], (H, W))
    rr = jnp.sqrt(xx * xx + yy * yy)
    rr = rr / jnp.max(rr)

    boundary = jnp.clip(heatmap_nchw[:, -1, :, :], 0.0, 1.0)          # (B, H, W)
    mask = boundary > 0.05
    xx_b = jnp.where(mask, xx[None], 0.0)
    yy_b = jnp.where(mask, yy[None], 0.0)

    xxB = jnp.broadcast_to(xx[None], (B, H, W))
    yyB = jnp.broadcast_to(yy[None], (B, H, W))
    rrB = jnp.broadcast_to(rr[None], (B, H, W))

    ret = jnp.concatenate(
        [x, xxB[..., None], yyB[..., None], rrB[..., None],
         xx_b[..., None], yy_b[..., None]], axis=-1)                  # (B,H,W,C+5)
    last_channel = jnp.stack([xx_b, yy_b], axis=-1)                   # (B,H,W,2)

    # pad channels up to a multiple of 8 so the matmul K dim packs cleanly
    k_pad = params['coordconv_w'].shape[0]
    ret = jnp.pad(ret, ((0, 0), (0, 0), (0, 0), (0, k_pad - ret.shape[-1])))

    # ---- CoordConv 1x1 conv (Pallas, bf16 MXU) ----
    x1 = conv1x1(ret.reshape(B, H * W, k_pad),
                 params['coordconv_w'], params['coordconv_b'])        # (B, H*W, C)
    x1 = x1.reshape(B, H, W, C)

    # ---- recursive hourglass of ConvBlocks (Pallas) ----
    out = hg_level(params, depth, x1)

    return (jnp.transpose(out, (0, 3, 1, 2)),
            jnp.transpose(last_channel, (0, 3, 1, 2)))


# ---------------------------------------------------------------------------
# Deterministic parameter initialization
# ---------------------------------------------------------------------------

def _init_bn_affine(key, c):
    k1, k2, k3, k4 = jax.random.split(key, 4)
    gamma = jax.random.uniform(k1, (c,), minval=0.5, maxval=1.5)
    beta = jax.random.normal(k2, (c,)) * 0.1
    mean = jax.random.normal(k3, (c,)) * 0.1
    var = jax.random.uniform(k4, (c,), minval=0.5, maxval=1.5)
    eps = 1e-5
    scale = gamma / jnp.sqrt(var + eps)
    shift = beta - mean * scale
    return (scale.reshape(1, c).astype(jnp.float32),
            shift.reshape(1, c).astype(jnp.float32))


def _init_conv3x3(key, cin, cout):
    w = jax.random.normal(key, (cout, cin, 3, 3), dtype=jnp.float32)
    w = w * (1.0 / math.sqrt(cin * 9))
    # (cout, cin, kh, kw) -> (kh, kw, cin, cout) -> (kh, kw*cin, cout):
    # row index within a dy slab is dx*cin + ci, matching the in-kernel
    # [left, center, right] channel stacking.  Stored in bf16 for the MXU.
    w = jnp.transpose(w, (2, 3, 1, 0)).reshape(3, 3 * cin, cout)
    return w.astype(jnp.bfloat16)


def _init_convblock(key, c):
    ks = jax.random.split(key, 6)
    s1, sh1 = _init_bn_affine(ks[0], c)
    w1 = _init_conv3x3(ks[1], c, c // 2)
    s2, sh2 = _init_bn_affine(ks[2], c // 2)
    w2 = _init_conv3x3(ks[3], c // 2, c // 4)
    s3, sh3 = _init_bn_affine(ks[4], c // 4)
    w3 = _init_conv3x3(ks[5], c // 4, c // 4)
    return dict(s1=s1, sh1=sh1, w1=w1, s2=s2, sh2=sh2, w2=w2,
                s3=s3, sh3=sh3, w3=w3)


def init_hourglass_params(key, c, depth, first_one=False):
    names = []

    def gen(level):
        names.append(f'b1_{level}')
        names.append(f'b2_{level}')
        if level > 1:
            gen(level - 1)
        else:
            names.append(f'b2_plus_{level}')
        names.append(f'b3_{level}')

    gen(depth)
    keys = jax.random.split(key, len(names) + 2)
    params = {n: _init_convblock(k, c) for n, k in zip(names, keys[:len(names)])}

    # CoordConv: in_channels = C + 2 (coords) + 1 (r) + 2 (boundary, not first_one),
    # zero-padded up to a multiple of 8 for clean K packing.
    cin = c + 2 + 1 + (0 if first_one else 2)
    k_pad = ((cin + 7) // 8) * 8
    w = jax.random.normal(keys[-2], (c, cin), jnp.float32) / math.sqrt(cin)
    w = jnp.pad(jnp.transpose(w), ((0, k_pad - cin), (0, 0)))          # (k_pad, c)
    params['coordconv_w'] = w.astype(jnp.bfloat16)
    params['coordconv_b'] = jax.random.normal(keys[-1], (1, c), jnp.float32) * 0.01
    return params


# ---------------------------------------------------------------------------
# Pure-JAX reference for one ConvBlock (sanity check of the fused kernel)
# ---------------------------------------------------------------------------

def _convblock_ref(bp, x):
    def branch(y, s, sh, w):
        a = jnp.maximum(y * s.reshape(1, 1, 1, -1) + sh.reshape(1, 1, 1, -1), 0.0)
        cin = w.shape[1] // 3
        w_hwio = w.astype(jnp.float32).reshape(3, 3, cin, -1)          # (kh, kw, in, out)
        return lax.conv_general_dilated(
            a, w_hwio, window_strides=(1, 1), padding='SAME',
            dimension_numbers=('NHWC', 'HWIO', 'NHWC'),
            precision=lax.Precision.HIGHEST)
    o1 = branch(x, bp['s1'], bp['sh1'], bp['w1'])
    o2 = branch(o1, bp['s2'], bp['sh2'], bp['w2'])
    o3 = branch(o2, bp['s3'], bp['sh3'], bp['w3'])
    return jnp.concatenate([o1, o2, o3], axis=-1) + x


# ---------------------------------------------------------------------------
# Demo
# ---------------------------------------------------------------------------

if __name__ == "__main__":
    B, C, H, W = 2, 32, 16, 16         # small stand-in for (B, 256, 64, 64)
    depth = 2
    n_heat = 4                         # heatmap channels; last one is the boundary map

    params = init_hourglass_params(jax.random.PRNGKey(0), C, depth, first_one=False)

    kx, kh = jax.random.split(jax.random.PRNGKey(0), 2)
    x = jax.random.normal(kx, (B, C, H, W), dtype=jnp.float32)
    heatmap = jax.random.uniform(kh, (B, n_heat, H, W), dtype=jnp.float32)

    # numerical sanity check of the fused ConvBlock kernel (bf16 MXU inputs vs.
    # f32 XLA reference using the same folded weights; loose bf16 tolerance)
    xt = jnp.transpose(x, (0, 2, 3, 1))
    blk = params[f'b1_{depth}']
    got = convblock_nhwc(blk, xt)
    ref = _convblock_ref(blk, xt)
    err = float(jnp.max(jnp.abs(got - ref)))
    assert err < 1e-1, f"ConvBlock kernel mismatch: max abs err = {err}"

    fwd = jax.jit(hourglass_forward, static_argnums=(3,))
    out, last_channel = fwd(params, x, heatmap, depth)
    jax.block_until_ready(out)
    jax.block_until_ready(last_channel)

    assert out.shape == (B, C, H, W)
    assert last_channel.shape == (B, 2, H, W)
    print("KERNEL_OK")
</pallas_src>

<mosaic_0001>
module attributes {stable_mosaic.version = 11 : i64} {
  func.func @_convblock_kernel(%arg0: i32, %arg1: memref<1x256x32xf32, #tpu.memory_space<vmem>>, %arg2: memref<1x32xf32, #tpu.memory_space<vmem>>, %arg3: memref<1x32xf32, #tpu.memory_space<vmem>>, %arg4: memref<3x96x16xbf16, #tpu.memory_space<vmem>>, %arg5: memref<1x16xf32, #tpu.memory_space<vmem>>, %arg6: memref<1x16xf32, #tpu.memory_space<vmem>>, %arg7: memref<3x48x8xbf16, #tpu.memory_space<vmem>>, %arg8: memref<1x8xf32, #tpu.memory_space<vmem>>, %arg9: memref<1x8xf32, #tpu.memory_space<vmem>>, %arg10: memref<3x24x8xbf16, #tpu.memory_space<vmem>>, %arg11: memref<1x256x32xf32, #tpu.memory_space<vmem>>, %arg12: memref<256x16xf32, #tpu.memory_space<vmem>>, %arg13: memref<256x8xf32, #tpu.memory_space<vmem>>, %arg14: memref<256x8xf32, #tpu.memory_space<vmem>>) attributes {dimension_semantics = [#tpu.dimension_semantics<parallel>], iteration_bounds = array<i64: 2>, scalar_prefetch = 0 : i64, scratch_operands = 3 : i64, tpu.core_type = #tpu.core_type<tc>, window_params = [{transform_indices = @transform_0, window_bounds = array<i64: 1, 256, 32>}, {pipeline_mode = #tpu.pipeline_mode<synchronous>, transform_indices = @transform_1, window_bounds = array<i64: 1, 32>}, {pipeline_mode = #tpu.pipeline_mode<synchronous>, transform_indices = @transform_2, window_bounds = array<i64: 1, 32>}, {pipeline_mode = #tpu.pipeline_mode<synchronous>, transform_indices = @transform_3, window_bounds = array<i64: 3, 96, 16>}, {pipeline_mode = #tpu.pipeline_mode<synchronous>, transform_indices = @transform_4, window_bounds = array<i64: 1, 16>}, {pipeline_mode = #tpu.pipeline_mode<synchronous>, transform_indices = @transform_5, window_bounds = array<i64: 1, 16>}, {pipeline_mode = #tpu.pipeline_mode<synchronous>, transform_indices = @transform_6, window_bounds = array<i64: 3, 48, 8>}, {pipeline_mode = #tpu.pipeline_mode<synchronous>, transform_indices = @transform_7, window_bounds = array<i64: 1, 8>}, {pipeline_mode = #tpu.pipeline_mode<synchronous>, transform_indices = @transform_8, window_bounds = array<i64: 1, 8>}, {pipeline_mode = #tpu.pipeline_mode<synchronous>, transform_indices = @transform_9, window_bounds = array<i64: 3, 24, 8>}, {transform_indices = @transform_10, window_bounds = array<i64: 1, 256, 32>}]} {
    %0 = tpu.iota {dimensions = array<i32: 0>} : vector<256x1xi32>
    %c15_i32 = arith.constant 15 : i32
    %1 = vector.broadcast %c15_i32 : i32 to vector<256x1xi32>
    %2 = arith.andi %0, %1 : vector<256x1xi32>
    %c0_i32 = arith.constant 0 : i32
    %3 = vector.broadcast %c0_i32 : i32 to vector<256x1xi32>
    %4 = arith.cmpi ne, %2, %3 : vector<256x1xi32>
    %c15_i32_0 = arith.constant 15 : i32
    %5 = vector.broadcast %c15_i32_0 : i32 to vector<256x1xi32>
    %6 = arith.cmpi ne, %2, %5 : vector<256x1xi32>
    %c0 = arith.constant 0 : index
    %c0_1 = arith.constant 0 : index
    %c0_2 = arith.constant 0 : index
    %7 = vector.load %arg1[%c0, %c0_1, %c0_2] : memref<1x256x32xf32, #tpu.memory_space<vmem>>, vector<1x256x32xf32>
    %8 = vector.shape_cast %7 : vector<1x256x32xf32> to vector<256x32xf32>
    %c0_3 = arith.constant 0 : index
    %c0_4 = arith.constant 0 : index
    %9 = vector.load %arg2[%c0_3, %c0_4] : memref<1x32xf32, #tpu.memory_space<vmem>>, vector<1x32xf32>
    %10 = vector.broadcast %9 : vector<1x32xf32> to vector<256x32xf32>
    %11 = arith.mulf %8, %10 : vector<256x32xf32>
    %c0_5 = arith.constant 0 : index
    %c0_6 = arith.constant 0 : index
    %12 = vector.load %arg3[%c0_5, %c0_6] : memref<1x32xf32, #tpu.memory_space<vmem>>, vector<1x32xf32>
    %13 = vector.broadcast %12 : vector<1x32xf32> to vector<256x32xf32>
    %14 = arith.addf %11, %13 : vector<256x32xf32>
    %cst = arith.constant 0.000000e+00 : f32
    %15 = vector.broadcast %cst : f32 to vector<256x32xf32>
    %16 = arith.maximumf %14, %15 : vector<256x32xf32>
    %c1_i32 = arith.constant 1 : i32
    %17 = tpu.dynamic_rotate %16 by %c1_i32 dim 0 : vector<256x32xf32>, i32 -> vector<256x32xf32>
    %cst_7 = arith.constant 0.000000e+00 : f32
    %18 = vector.shape_cast %4 : vector<256x1xi1> to vector<256x1xi1>
    %19 = vector.broadcast %18 : vector<256x1xi1> to vector<256x32xi1>
    %20 = vector.broadcast %cst_7 : f32 to vector<256x32xf32>
    %21 = arith.select %19, %17, %20 : vector<256x32xi1>, vector<256x32xf32>
    %c255_i32 = arith.constant 255 : i32
    %22 = tpu.dynamic_rotate %16 by %c255_i32 dim 0 : vector<256x32xf32>, i32 -> vector<256x32xf32>
    %cst_8 = arith.constant 0.000000e+00 : f32
    %23 = vector.shape_cast %6 : vector<256x1xi1> to vector<256x1xi1>
    %24 = vector.broadcast %23 : vector<256x1xi1> to vector<256x32xi1>
    %25 = vector.broadcast %cst_8 : f32 to vector<256x32xf32>
    %26 = arith.select %24, %22, %25 : vector<256x32xi1>, vector<256x32xf32>
    %27 = arith.truncf %21 : vector<256x32xf32> to vector<256x32xbf16>
    %28 = arith.truncf %16 : vector<256x32xf32> to vector<256x32xbf16>
    %29 = arith.truncf %26 : vector<256x32xf32> to vector<256x32xbf16>
    %30 = tpu.concatenate %27, %28, %29 in 1 : vector<256x32xbf16>, vector<256x32xbf16>, vector<256x32xbf16> -> vector<256x96xbf16>
    %c1 = arith.constant 1 : index
    %c0_9 = arith.constant 0 : index
    %c0_10 = arith.constant 0 : index
    %31 = vector.load %arg4[%c1, %c0_9, %c0_10] : memref<3x96x16xbf16, #tpu.memory_space<vmem>>, vector<1x96x16xbf16>
    %32 = vector.shape_cast %31 : vector<1x96x16xbf16> to vector<96x16xbf16>
    %cst_11 = arith.constant dense<0.000000e+00> : vector<256x16xf32>
    %33 = tpu.matmul %30, %32, %cst_11 {dimension_numbers = #tpu.dot_dimension_numbers<[1], [0], [0], [1], [0, 0, 1, 1], [], []>} : vector<256x96xbf16>, vector<96x16xbf16>, vector<256x16xf32> -> vector<256x16xf32>
    %c0_12 = arith.constant 0 : index
    %c0_13 = arith.constant 0 : index
    %34 = vector.load %arg12[%c0_12, %c0_13] : memref<256x16xf32, #tpu.memory_space<vmem>>, vector<256x16xf32>
    tpu.vector_store %arg12[%c0_12, %c0_13], %33 {strides = array<i32>} : memref<256x16xf32, #tpu.memory_space<vmem>>, vector<256x16xf32>,
    %c0_14 = arith.constant 0 : index
    %c0_15 = arith.constant 0 : index
    %c0_16 = arith.constant 0 : index
    %35 = vector.load %arg4[%c0_14, %c0_15, %c0_16] : memref<3x96x16xbf16, #tpu.memory_space<vmem>>, vector<1x96x16xbf16>
    %36 = vector.shape_cast %35 : vector<1x96x16xbf16> to vector<96x16xbf16>
    %cst_17 = arith.constant dense<0.000000e+00> : vector<256x16xf32>
    %37 = tpu.matmul %30, %36, %cst_17 {dimension_numbers = #tpu.dot_dimension_numbers<[1], [0], [0], [1], [0, 0, 1, 1], [], []>} : vector<256x96xbf16>, vector<96x16xbf16>, vector<256x16xf32> -> vector<256x16xf32>
    %c16 = arith.constant 16 : index
    %c0_18 = arith.constant 0 : index
    %38 = vector.load %arg12[%c16, %c0_18] : memref<256x16xf32, #tpu.memory_space<vmem>>, vector<240x16xf32>
    %39 = vector.extract_strided_slice %37 {offsets = [0, 0], sizes = [240, 16], strides = [1, 1]} : vector<256x16xf32> to vector<240x16xf32>
    %40 = arith.addf %38, %39 : vector<240x16xf32>
    %c16_19 = arith.constant 16 : index
    %c0_20 = arith.constant 0 : index
    %41 = vector.load %arg12[%c16_19, %c0_20] : memref<256x16xf32, #tpu.memory_space<vmem>>, vector<240x16xf32>
    tpu.vector_store %arg12[%c16_19, %c0_20], %40 {strides = array<i32>} : memref<256x16xf32, #tpu.memory_space<vmem>>, vector<240x16xf32>,
    %c2 = arith.constant 2 : index
    %c0_21 = arith.constant 0 : index
    %c0_22 = arith.constant 0 : index
    %42 = vector.load %arg4[%c2, %c0_21, %c0_22] : memref<3x96x16xbf16, #tpu.memory_space<vmem>>, vector<1x96x16xbf16>
    %43 = vector.shape_cast %42 : vector<1x96x16xbf16> to vector<96x16xbf16>
    %cst_23 = arith.constant dense<0.000000e+00> : vector<256x16xf32>
    %44 = tpu.matmul %30, %43, %cst_23 {dimension_numbers = #tpu.dot_dimension_numbers<[1], [0], [0], [1], [0, 0, 1, 1], [], []>} : vector<256x96xbf16>, vector<96x16xbf16>, vector<256x16xf32> -> vector<256x16xf32>
    %c0_24 = arith.constant 0 : index
    %c0_25 = arith.constant 0 : index
    %45 = vector.load %arg12[%c0_24, %c0_25] : memref<256x16xf32, #tpu.memory_space<vmem>>, vector<240x16xf32>
    %46 = vector.extract_strided_slice %44 {offsets = [16, 0], sizes = [240, 16], strides = [1, 1]} : vector<256x16xf32> to vector<240x16xf32>
    %47 = arith.addf %45, %46 : vector<240x16xf32>
    %c0_26 = arith.constant 0 : index
    %c0_27 = arith.constant 0 : index
    %48 = vector.load %arg12[%c0_26, %c0_27] : memref<256x16xf32, #tpu.memory_space<vmem>>, vector<240x16xf32>
    tpu.vector_store %arg12[%c0_26, %c0_27], %47 {strides = array<i32>} : memref<256x16xf32, #tpu.memory_space<vmem>>, vector<240x16xf32>,
    %c0_28 = arith.constant 0 : index
    %c0_29 = arith.constant 0 : index
    %49 = vector.load %arg12[%c0_28, %c0_29] : memref<256x16xf32, #tpu.memory_space<vmem>>, vector<256x16xf32>
    %c0_30 = arith.constant 0 : index
    %c0_31 = arith.constant 0 : index
    %50 = vector.load %arg5[%c0_30, %c0_31] : memref<1x16xf32, #tpu.memory_space<vmem>>, vector<1x16xf32>
    %51 = vector.broadcast %50 : vector<1x16xf32> to vector<256x16xf32>
    %52 = arith.mulf %49, %51 : vector<256x16xf32>
    %c0_32 = arith.constant 0 : index
    %c0_33 = arith.constant 0 : index
    %53 = vector.load %arg6[%c0_32, %c0_33] : memref<1x16xf32, #tpu.memory_space<vmem>>, vector<1x16xf32>
    %54 = vector.broadcast %53 : vector<1x16xf32> to vector<256x16xf32>
    %55 = arith.addf %52, %54 : vector<256x16xf32>
    %cst_34 = arith.constant 0.000000e+00 : f32
    %56 = vector.broadcast %cst_34 : f32 to vector<256x16xf32>
    %57 = arith.maximumf %55, %56 : vector<256x16xf32>
    %c1_i32_35 = arith.constant 1 : i32
    %58 = tpu.dynamic_rotate %57 by %c1_i32_35 dim 0 : vector<256x16xf32>, i32 -> vector<256x16xf32>
    %cst_36 = arith.constant 0.000000e+00 : f32
    %59 = vector.shape_cast %4 : vector<256x1xi1> to vector<256x1xi1>
    %60 = vector.broadcast %59 : vector<256x1xi1> to vector<256x16xi1>
    %61 = vector.broadcast %cst_36 : f32 to vector<256x16xf32>
    %62 = arith.select %60, %58, %61 : vector<256x16xi1>, vector<256x16xf32>
    %c255_i32_37 = arith.constant 255 : i32
    %63 = tpu.dynamic_rotate %57 by %c255_i32_37 dim 0 : vector<256x16xf32>, i32 -> vector<256x16xf32>
    %cst_38 = arith.constant 0.000000e+00 : f32
    %64 = vector.shape_cast %6 : vector<256x1xi1> to vector<256x1xi1>
    %65 = vector.broadcast %64 : vector<256x1xi1> to vector<256x16xi1>
    %66 = vector.broadcast %cst_38 : f32 to vector<256x16xf32>
    %67 = arith.select %65, %63, %66 : vector<256x16xi1>, vector<256x16xf32>
    %68 = arith.truncf %62 : vector<256x16xf32> to vector<256x16xbf16>
    %69 = arith.truncf %57 : vector<256x16xf32> to vector<256x16xbf16>
    %70 = arith.truncf %67 : vector<256x16xf32> to vector<256x16xbf16>
    %71 = tpu.concatenate %68, %69, %70 in 1 : vector<256x16xbf16>, vector<256x16xbf16>, vector<256x16xbf16> -> vector<256x48xbf16>
    %c1_39 = arith.constant 1 : index
    %c0_40 = arith.constant 0 : index
    %c0_41 = arith.constant 0 : index
    %72 = vector.load %arg7[%c1_39, %c0_40, %c0_41] : memref<3x48x8xbf16, #tpu.memory_space<vmem>>, vector<1x48x8xbf16>
    %73 = vector.shape_cast %72 : vector<1x48x8xbf16> to vector<48x8xbf16>
    %cst_42 = arith.constant dense<0.000000e+00> : vector<256x8xf32>
    %74 = tpu.matmul %71, %73, %cst_42 {dimension_numbers = #tpu.dot_dimension_numbers<[1], [0], [0], [1], [0, 0, 1, 1], [], []>} : vector<256x48xbf16>, vector<48x8xbf16>, vector<256x8xf32> -> vector<256x8xf32>
    %c0_43 = arith.constant 0 : index
    %c0_44 = arith.constant 0 : index
    %75 = vector.load %arg13[%c0_43, %c0_44] : memref<256x8xf32, #tpu.memory_space<vmem>>, vector<256x8xf32>
    tpu.vector_store %arg13[%c0_43, %c0_44], %74 {strides = array<i32>} : memref<256x8xf32, #tpu.memory_space<vmem>>, vector<256x8xf32>,
    %c0_45 = arith.constant 0 : index
    %c0_46 = arith.constant 0 : index
    %c0_47 = arith.constant 0 : index
    %76 = vector.load %arg7[%c0_45, %c0_46, %c0_47] : memref<3x48x8xbf16, #tpu.memory_space<vmem>>, vector<1x48x8xbf16>
    %77 = vector.shape_cast %76 : vector<1x48x8xbf16> to vector<48x8xbf16>
    %cst_48 = arith.constant dense<0.000000e+00> : vector<256x8xf32>
    %78 = tpu.matmul %71, %77, %cst_48 {dimension_numbers = #tpu.dot_dimension_numbers<[1], [0], [0], [1], [0, 0, 1, 1], [], []>} : vector<256x48xbf16>, vector<48x8xbf16>, vector<256x8xf32> -> vector<256x8xf32>
    %c16_49 = arith.constant 16 : index
    %c0_50 = arith.constant 0 : index
    %79 = vector.load %arg13[%c16_49, %c0_50] : memref<256x8xf32, #tpu.memory_space<vmem>>, vector<240x8xf32>
    %80 = vector.extract_strided_slice %78 {offsets = [0, 0], sizes = [240, 8], strides = [1, 1]} : vector<256x8xf32> to vector<240x8xf32>
    %81 = arith.addf %79, %80 : vector<240x8xf32>
    %c16_51 = arith.constant 16 : index
    %c0_52 = arith.constant 0 : index
    %82 = vector.load %arg13[%c16_51, %c0_52] : memref<256x8xf32, #tpu.memory_space<vmem>>, vector<240x8xf32>
    tpu.vector_store %arg13[%c16_51, %c0_52], %81 {strides = array<i32>} : memref<256x8xf32, #tpu.memory_space<vmem>>, vector<240x8xf32>,
    %c2_53 = arith.constant 2 : index
    %c0_54 = arith.constant 0 : index
    %c0_55 = arith.constant 0 : index
    %83 = vector.load %arg7[%c2_53, %c0_54, %c0_55] : memref<3x48x8xbf16, #tpu.memory_space<vmem>>, vector<1x48x8xbf16>
    %84 = vector.shape_cast %83 : vector<1x48x8xbf16> to vector<48x8xbf16>
    %cst_56 = arith.constant dense<0.000000e+00> : vector<256x8xf32>
    %85 = tpu.matmul %71, %84, %cst_56 {dimension_numbers = #tpu.dot_dimension_numbers<[1], [0], [0], [1], [0, 0, 1, 1], [], []>} : vector<256x48xbf16>, vector<48x8xbf16>, vector<256x8xf32> -> vector<256x8xf32>
    %c0_57 = arith.constant 0 : index
    %c0_58 = arith.constant 0 : index
    %86 = vector.load %arg13[%c0_57, %c0_58] : memref<256x8xf32, #tpu.memory_space<vmem>>, vector<240x8xf32>
    %87 = vector.extract_strided_slice %85 {offsets = [16, 0], sizes = [240, 8], strides = [1, 1]} : vector<256x8xf32> to vector<240x8xf32>
    %88 = arith.addf %86, %87 : vector<240x8xf32>
    %c0_59 = arith.constant 0 : index
    %c0_60 = arith.constant 0 : index
    %89 = vector.load %arg13[%c0_59, %c0_60] : memref<256x8xf32, #tpu.memory_space<vmem>>, vector<240x8xf32>
    tpu.vector_store %arg13[%c0_59, %c0_60], %88 {strides = array<i32>} : memref<256x8xf32, #tpu.memory_space<vmem>>, vector<240x8xf32>,
    %c0_61 = arith.constant 0 : index
    %c0_62 = arith.constant 0 : index
    %90 = vector.load %arg13[%c0_61, %c0_62] : memref<256x8xf32, #tpu.memory_space<vmem>>, vector<256x8xf32>
    %c0_63 = arith.constant 0 : index
    %c0_64 = arith.constant 0 : index
    %91 = vector.load %arg8[%c0_63, %c0_64] : memref<1x8xf32, #tpu.memory_space<vmem>>, vector<1x8xf32>
    %92 = vector.broadcast %91 : vector<1x8xf32> to vector<256x8xf32>
    %93 = arith.mulf %90, %92 : vector<256x8xf32>
    %c0_65 = arith.constant 0 : index
    %c0_66 = arith.constant 0 : index
    %94 = vector.load %arg9[%c0_65, %c0_66] : memref<1x8xf32, #tpu.memory_space<vmem>>, vector<1x8xf32>
    %95 = vector.broadcast %94 : vector<1x8xf32> to vector<256x8xf32>
    %96 = arith.addf %93, %95 : vector<256x8xf32>
    %cst_67 = arith.constant 0.000000e+00 : f32
    %97 = vector.broadcast %cst_67 : f32 to vector<256x8xf32>
    %98 = arith.maximumf %96, %97 : vector<256x8xf32>
    %c1_i32_68 = arith.constant 1 : i32
    %99 = tpu.dynamic_rotate %98 by %c1_i32_68 dim 0 : vector<256x8xf32>, i32 -> vector<256x8xf32>
    %cst_69 = arith.constant 0.000000e+00 : f32
    %100 = vector.shape_cast %4 : vector<256x1xi1> to vector<256x1xi1>
    %101 = vector.broadcast %100 : vector<256x1xi1> to vector<256x8xi1>
    %102 = vector.broadcast %cst_69 : f32 to vector<256x8xf32>
    %103 = arith.select %101, %99, %102 : vector<256x8xi1>, vector<256x8xf32>
    %c255_i32_70 = arith.constant 255 : i32
    %104 = tpu.dynamic_rotate %98 by %c255_i32_70 dim 0 : vector<256x8xf32>, i32 -> vector<256x8xf32>
    %cst_71 = arith.constant 0.000000e+00 : f32
    %105 = vector.shape_cast %6 : vector<256x1xi1> to vector<256x1xi1>
    %106 = vector.broadcast %105 : vector<256x1xi1> to vector<256x8xi1>
    %107 = vector.broadcast %cst_71 : f32 to vector<256x8xf32>
    %108 = arith.select %106, %104, %107 : vector<256x8xi1>, vector<256x8xf32>
    %109 = arith.truncf %103 : vector<256x8xf32> to vector<256x8xbf16>
    %110 = arith.truncf %98 : vector<256x8xf32> to vector<256x8xbf16>
    %111 = arith.truncf %108 : vector<256x8xf32> to vector<256x8xbf16>
    %112 = tpu.concatenate %109, %110, %111 in 1 : vector<256x8xbf16>, vector<256x8xbf16>, vector<256x8xbf16> -> vector<256x24xbf16>
    %c1_72 = arith.constant 1 : index
    %c0_73 = arith.constant 0 : index
    %c0_74 = arith.constant 0 : index
    %113 = vector.load %arg10[%c1_72, %c0_73, %c0_74] : memref<3x24x8xbf16, #tpu.memory_space<vmem>>, vector<1x24x8xbf16>
    %114 = vector.shape_cast %113 : vector<1x24x8xbf16> to vector<24x8xbf16>
    %cst_75 = arith.constant dense<0.000000e+00> : vector<256x8xf32>
    %115 = tpu.matmul %112, %114, %cst_75 {dimension_numbers = #tpu.dot_dimension_numbers<[1], [0], [0], [1], [0, 0, 1, 1], [], []>} : vector<256x24xbf16>, vector<24x8xbf16>, vector<256x8xf32> -> vector<256x8xf32>
    %c0_76 = arith.constant 0 : index
    %c0_77 = arith.constant 0 : index
    %116 = vector.load %arg14[%c0_76, %c0_77] : memref<256x8xf32, #tpu.memory_space<vmem>>, vector<256x8xf32>
    tpu.vector_store %arg14[%c0_76, %c0_77], %115 {strides = array<i32>} : memref<256x8xf32, #tpu.memory_space<vmem>>, vector<256x8xf32>,
    %c0_78 = arith.constant 0 : index
    %c0_79 = arith.constant 0 : index
    %c0_80 = arith.constant 0 : index
    %117 = vector.load %arg10[%c0_78, %c0_79, %c0_80] : memref<3x24x8xbf16, #tpu.memory_space<vmem>>, vector<1x24x8xbf16>
    %118 = vector.shape_cast %117 : vector<1x24x8xbf16> to vector<24x8xbf16>
    %cst_81 = arith.constant dense<0.000000e+00> : vector<256x8xf32>
    %119 = tpu.matmul %112, %118, %cst_81 {dimension_numbers = #tpu.dot_dimension_numbers<[1], [0], [0], [1], [0, 0, 1, 1], [], []>} : vector<256x24xbf16>, vector<24x8xbf16>, vector<256x8xf32> -> vector<256x8xf32>
    %c16_82 = arith.constant 16 : index
    %c0_83 = arith.constant 0 : index
    %120 = vector.load %arg14[%c16_82, %c0_83] : memref<256x8xf32, #tpu.memory_space<vmem>>, vector<240x8xf32>
    %121 = vector.extract_strided_slice %119 {offsets = [0, 0], sizes = [240, 8], strides = [1, 1]} : vector<256x8xf32> to vector<240x8xf32>
    %122 = arith.addf %120, %121 : vector<240x8xf32>
    %c16_84 = arith.constant 16 : index
    %c0_85 = arith.constant 0 : index
    %123 = vector.load %arg14[%c16_84, %c0_85] : memref<256x8xf32, #tpu.memory_space<vmem>>, vector<240x8xf32>
    tpu.vector_store %arg14[%c16_84, %c0_85], %122 {strides = array<i32>} : memref<256x8xf32, #tpu.memory_space<vmem>>, vector<240x8xf32>,
    %c2_86 = arith.constant 2 : index
    %c0_87 = arith.constant 0 : index
    %c0_88 = arith.constant 0 : index
    %124 = vector.load %arg10[%c2_86, %c0_87, %c0_88] : memref<3x24x8xbf16, #tpu.memory_space<vmem>>, vector<1x24x8xbf16>
    %125 = vector.shape_cast %124 : vector<1x24x8xbf16> to vector<24x8xbf16>
    %cst_89 = arith.constant dense<0.000000e+00> : vector<256x8xf32>
    %126 = tpu.matmul %112, %125, %cst_89 {dimension_numbers = #tpu.dot_dimension_numbers<[1], [0], [0], [1], [0, 0, 1, 1], [], []>} : vector<256x24xbf16>, vector<24x8xbf16>, vector<256x8xf32> -> vector<256x8xf32>
    %c0_90 = arith.constant 0 : index
    %c0_91 = arith.constant 0 : index
    %127 = vector.load %arg14[%c0_90, %c0_91] : memref<256x8xf32, #tpu.memory_space<vmem>>, vector<240x8xf32>
    %128 = vector.extract_strided_slice %126 {offsets = [16, 0], sizes = [240, 8], strides = [1, 1]} : vector<256x8xf32> to vector<240x8xf32>
    %129 = arith.addf %127, %128 : vector<240x8xf32>
    %c0_92 = arith.constant 0 : index
    %c0_93 = arith.constant 0 : index
    %130 = vector.load %arg14[%c0_92, %c0_93] : memref<256x8xf32, #tpu.memory_space<vmem>>, vector<240x8xf32>
    tpu.vector_store %arg14[%c0_92, %c0_93], %129 {strides = array<i32>} : memref<256x8xf32, #tpu.memory_space<vmem>>, vector<240x8xf32>,
    %c0_94 = arith.constant 0 : index
    %c0_95 = arith.constant 0 : index
    %131 = vector.load %arg14[%c0_94, %c0_95] : memref<256x8xf32, #tpu.memory_space<vmem>>, vector<256x8xf32>
    %c0_96 = arith.constant 0 : index
    %c0_97 = arith.constant 0 : index
    %c0_98 = arith.constant 0 : index
    %132 = vector.load %arg1[%c0_96, %c0_97, %c0_98] : memref<1x256x32xf32, #tpu.memory_space<vmem>>, vector<1x256x16xf32>
    %133 = vector.shape_cast %132 : vector<1x256x16xf32> to vector<256x16xf32>
    %134 = arith.addf %49, %133 : vector<256x16xf32>
    %c0_99 = arith.constant 0 : index
    %c0_100 = arith.constant 0 : index
    %c0_101 = arith.constant 0 : index
    %135 = vector.load %arg11[%c0_99, %c0_100, %c0_101] : memref<1x256x32xf32, #tpu.memory_space<vmem>>, vector<1x256x16xf32>
    %136 = vector.shape_cast %135 : vector<1x256x16xf32> to vector<256x16xf32>
    %137 = vector.shape_cast %134 : vector<256x16xf32> to vector<1x256x16xf32>
    tpu.vector_store %arg11[%c0_99, %c0_100, %c0_101], %137 {strides = array<i32>} : memref<1x256x32xf32, #tpu.memory_space<vmem>>, vector<1x256x16xf32>,
    %c0_102 = arith.constant 0 : index
    %c0_103 = arith.constant 0 : index
    %c16_104 = arith.constant 16 : index
    %138 = vector.load %arg1[%c0_102, %c0_103, %c16_104] : memref<1x256x32xf32, #tpu.memory_space<vmem>>, vector<1x256x8xf32>
    %139 = vector.shape_cast %138 : vector<1x256x8xf32> to vector<256x8xf32>
    %140 = arith.addf %90, %139 : vector<256x8xf32>
    %c0_105 = arith.constant 0 : index
    %c0_106 = arith.constant 0 : index
    %c16_107 = arith.constant 16 : index
    %141 = vector.load %arg11[%c0_105, %c0_106, %c16_107] : memref<1x256x32xf32, #tpu.memory_space<vmem>>, vector<1x256x8xf32>
    %142 = vector.shape_cast %141 : vector<1x256x8xf32> to vector<256x8xf32>
    %143 = vector.shape_cast %140 : vector<256x8xf32> to vector<1x256x8xf32>
    tpu.vector_store %arg11[%c0_105, %c0_106, %c16_107], %143 {strides = array<i32>} : memref<1x256x32xf32, #tpu.memory_space<vmem>>, vector<1x256x8xf32>,
    %c0_108 = arith.constant 0 : index
    %c0_109 = arith.constant 0 : index
    %c24 = arith.constant 24 : index
    %144 = vector.load %arg1[%c0_108, %c0_109, %c24] : memref<1x256x32xf32, #tpu.memory_space<vmem>>, vector<1x256x8xf32>
    %145 = vector.shape_cast %144 : vector<1x256x8xf32> to vector<256x8xf32>
    %146 = arith.addf %131, %145 : vector<256x8xf32>
    %c0_110 = arith.constant 0 : index
    %c0_111 = arith.constant 0 : index
    %c24_112 = arith.constant 24 : index
    %147 = vector.load %arg11[%c0_110, %c0_111, %c24_112] : memref<1x256x32xf32, #tpu.memory_space<vmem>>, vector<1x256x8xf32>
    %148 = vector.shape_cast %147 : vector<1x256x8xf32> to vector<256x8xf32>
    %149 = vector.shape_cast %146 : vector<256x8xf32> to vector<1x256x8xf32>
    tpu.vector_store %arg11[%c0_110, %c0_111, %c24_112], %149 {strides = array<i32>} : memref<1x256x32xf32, #tpu.memory_space<vmem>>, vector<1x256x8xf32>,
    return
  }
  func.func @transform_0(%arg0: i32) -> (i32, i32, i32) {
    %c0_i32 = arith.constant 0 : i32
    %c0_i32_0 = arith.constant 0 : i32
    %c0_i32_1 = arith.constant 0 : i32
    return %arg0, %c0_i32, %c0_i32_0 : i32, i32, i32
  }
  func.func @transform_1(%arg0: i32) -> (i32, i32) {
    %c0_i32 = arith.constant 0 : i32
    %c0_i32_0 = arith.constant 0 : i32
    %c0_i32_1 = arith.constant 0 : i32
    return %c0_i32, %c0_i32_0 : i32, i32
  }
  func.func @transform_2(%arg0: i32) -> (i32, i32) {
    %c0_i32 = arith.constant 0 : i32
    %c0_i32_0 = arith.constant 0 : i32
    %c0_i32_1 = arith.constant 0 : i32
    return %c0_i32, %c0_i32_0 : i32, i32
  }
  func.func @transform_3(%arg0: i32) -> (i32, i32, i32) {
    %c0_i32 = arith.constant 0 : i32
    %c0_i32_0 = arith.constant 0 : i32
    %c0_i32_1 = arith.constant 0 : i32
    %c0_i32_2 = arith.constant 0 : i32
    return %c0_i32, %c0_i32_0, %c0_i32_1 : i32, i32, i32
  }
  func.func @transform_4(%arg0: i32) -> (i32, i32) {
    %c0_i32 = arith.constant 0 : i32
    %c0_i32_0 = arith.constant 0 : i32
    %c0_i32_1 = arith.constant 0 : i32
    return %c0_i32, %c0_i32_0 : i32, i32
  }
  func.func @transform_5(%arg0: i32) -> (i32, i32) {
    %c0_i32 = arith.constant 0 : i32
    %c0_i32_0 = arith.constant 0 : i32
    %c0_i32_1 = arith.constant 0 : i32
    return %c0_i32, %c0_i32_0 : i32, i32
  }
  func.func @transform_6(%arg0: i32) -> (i32, i32, i32) {
    %c0_i32 = arith.constant 0 : i32
    %c0_i32_0 = arith.constant 0 : i32
    %c0_i32_1 = arith.constant 0 : i32
    %c0_i32_2 = arith.constant 0 : i32
    return %c0_i32, %c0_i32_0, %c0_i32_1 : i32, i32, i32
  }
  func.func @transform_7(%arg0: i32) -> (i32, i32) {
    %c0_i32 = arith.constant 0 : i32
    %c0_i32_0 = arith.constant 0 : i32
    %c0_i32_1 = arith.constant 0 : i32
    return %c0_i32, %c0_i32_0 : i32, i32
  }
  func.func @transform_8(%arg0: i32) -> (i32, i32) {
    %c0_i32 = arith.constant 0 : i32
    %c0_i32_0 = arith.constant 0 : i32
    %c0_i32_1 = arith.constant 0 : i32
    return %c0_i32, %c0_i32_0 : i32, i32
  }
  func.func @transform_9(%arg0: i32) -> (i32, i32, i32) {
    %c0_i32 = arith.constant 0 : i32
    %c0_i32_0 = arith.constant 0 : i32
    %c0_i32_1 = arith.constant 0 : i32
    %c0_i32_2 = arith.constant 0 : i32
    return %c0_i32, %c0_i32_0, %c0_i32_1 : i32, i32, i32
  }
  func.func @transform_10(%arg0: i32) -> (i32, i32, i32) {
    %c0_i32 = arith.constant 0 : i32
    %c0_i32_0 = arith.constant 0 : i32
    %c0_i32_1 = arith.constant 0 : i32
    return %arg0, %c0_i32, %c0_i32_0 : i32, i32, i32
  }
}

</mosaic_0001>

<llo_original>
// kernel: tpu_custom_call.1
$region0: #{tpu_custom_call.1}
  #allocation0 [shape = 'u32[]', space=smem, size = 0x4, offset = 0x4, fixed_abs, tag = 'smem constant byte address 0x4 - core index']
  #allocation1 [shape = 'u32[72,128]{1,0:T(1,128)}', space=vmem, size = 0x9000, scoped, tag = 'internal scratch']
  #allocation2 [shape = 'f32[256,16]{1,0:T(8,128)}', space=vmem, size = 0x20000, scoped, tag = 'scratch operand']
  #allocation3 [shape = 'f32[256,8]{1,0:T(8,128)}', space=vmem, size = 0x20000, scoped, tag = 'scratch operand']
  #allocation4 [shape = 'f32[256,8]{1,0:T(8,128)}', space=vmem, size = 0x20000, scoped, tag = 'scratch operand']
  %s0 = inlined_call_operand.vmem [shape: f32[2,256,32], index: 0, kind: input, shape index: {}]
  %s1 = inlined_call_operand.vmem [shape: f32[1,32], index: 1, kind: input, shape index: {}]
  %s2 = inlined_call_operand.vmem [shape: f32[1,32], index: 2, kind: input, shape index: {}]
  %s3 = inlined_call_operand.vmem [shape: bf16[3,96,16], index: 3, kind: input, shape index: {}]
  %s4 = inlined_call_operand.vmem [shape: f32[1,16], index: 4, kind: input, shape index: {}]
  %s5 = inlined_call_operand.vmem [shape: f32[1,16], index: 5, kind: input, shape index: {}]
  %s6 = inlined_call_operand.vmem [shape: bf16[3,48,8], index: 6, kind: input, shape index: {}]
  %s7 = inlined_call_operand.vmem [shape: f32[1,8], index: 7, kind: input, shape index: {}]
  %s8 = inlined_call_operand.vmem [shape: f32[1,8], index: 8, kind: input, shape index: {}]
  %s9 = inlined_call_operand.vmem [shape: bf16[3,24,8], index: 9, kind: input, shape index: {}]
  %s10 = inlined_call_operand.vmem [shape: f32[2,256,32], index: 10, kind: output, shape index: {}]
  %s11 = sld [smem:[#allocation0]]
  $region73: #{tpu_custom_call.1} parent=0
    _
  %s13 = ssub.s32 1, %s11
  %s14 = scalar_select 0, %s13, %s11
  loop: start=0, step=1, limit=4
  $region2: #{tpu_custom_call.1} parent=0 // loop_pre_header
    _
  $region3: #{tpu_custom_call.1} parent=0 // loop_header
    %s16 = sphi 0, %s20
    %p17 = scmp.ge.s32.totalorder %s16, 4
    %s26 = sphi 0, %s28
    %s29 = sphi 0, %s26
    %s30 = sphi 0, %s29
    %s46 = sphi 0, %s30
    %s50 = sphi 0, %s50
    %s52 = sphi 0, %s50
    %s53 = sphi 0, %s52
    %s67 = sphi 0, %s53
    %s71 = sphi 0, %s71
    %s73 = sphi 0, %s71
    %s74 = sphi 0, %s73
    %s88 = sphi 0, %s74
    %s92 = sphi 0, %s92
    %s94 = sphi 0, %s92
    %s95 = sphi 0, %s94
    %s109 = sphi 0, %s95
    %s113 = sphi 0, %s113
    %s115 = sphi 0, %s113
    %s116 = sphi 0, %s115
    %s130 = sphi 0, %s116
    %s134 = sphi 0, %s134
    %s136 = sphi 0, %s134
    %s137 = sphi 0, %s136
    %s151 = sphi 0, %s137
    %s155 = sphi 0, %s155
    %s157 = sphi 0, %s155
    %s158 = sphi 0, %s157
    %s172 = sphi 0, %s158
    %s176 = sphi 0, %s176
    %s178 = sphi 0, %s176
    %s179 = sphi 0, %s178
    %s193 = sphi 0, %s179
    %s197 = sphi 0, %s197
    %s199 = sphi 0, %s197
    %s200 = sphi 0, %s199
    %s214 = sphi 0, %s200
    %s218 = sphi 0, %s218
    %s220 = sphi 0, %s218
    %s221 = sphi 0, %s220
    %s235 = sphi 0, %s221
    %s241 = sphi 0, %s243
    %s244 = sphi 0, %s241
    %s245 = sphi 0, %s244
    %s261 = sphi 0, %s245
  $region4: #{tpu_custom_call.1} parent=0 // loop_header_branch
    %19 = sbr.rel (%p17) target = $region8
  $region5: #{tpu_custom_call.1} parent=0 // loop_body
    %s21 = ssub.s32 %s16, 1
    %s22 = ssub.s32 %s16, 2
    %s23 = sadd.s32 %s16, 1
    %s24 = ssub.s32 %s16, %s23
    %p25 = scmp.eq.s32.totalorder %s24, 0
    %s27 = sadd.s32 %s26, 1
    %s28 = scalar_select %p25, %s26, %s27
    %p31 = pneg %p25
    %p32 = scmp.eq.s32.totalorder %s16, 1
    %p33 = por %p31, %p32
    %p34 = scmp.ne.s32.totalorder %s26, %s29
    %p35 = scmp.eq.s32.totalorder %s16, 0
    %p36 = por %p34, %p35
    %p37 = scmp.ne.s32.totalorder %s26, %s29
    %p38 = scmp.eq.s32.totalorder %s21, 1
    %p39 = por %p37, %p38
    %p40 = scmp.ne.s32.totalorder %s29, %s30
    %p41 = scmp.eq.s32.totalorder %s21, 0
    %p42 = por %p40, %p41
    %p43 = scmp.ne.s32.totalorder %s29, %s30
    %p44 = scmp.eq.s32.totalorder %s22, 1
    %p45 = por %p43, %p44
    %p47 = scmp.ne.s32.totalorder %s30, %s46
    %p48 = scmp.eq.s32.totalorder %s22, 0
    %p49 = por %p47, %p48
    %s51 = sadd.s32 %s50, 1
    %p54 = scmp.eq.s32.totalorder %s16, 1
    %p55 = scmp.ne.s32.totalorder %s50, %s52
    %p56 = scmp.eq.s32.totalorder %s16, 0
    %p57 = por %p55, %p56
    %p58 = scmp.ne.s32.totalorder %s50, %s52
    %p59 = scmp.eq.s32.totalorder %s21, 1
    %p60 = por %p58, %p59
    %p61 = scmp.ne.s32.totalorder %s52, %s53
    %p62 = scmp.eq.s32.totalorder %s21, 0
    %p63 = por %p61, %p62
    %p64 = scmp.ne.s32.totalorder %s52, %s53
    %p65 = scmp.eq.s32.totalorder %s22, 1
    %p66 = por %p64, %p65
    %p68 = scmp.ne.s32.totalorder %s53, %s67
    %p69 = scmp.eq.s32.totalorder %s22, 0
    %p70 = por %p68, %p69
    %s72 = sadd.s32 %s71, 1
    %p75 = scmp.eq.s32.totalorder %s16, 1
    %p76 = scmp.ne.s32.totalorder %s71, %s73
    %p77 = scmp.eq.s32.totalorder %s16, 0
    %p78 = por %p76, %p77
    %p79 = scmp.ne.s32.totalorder %s71, %s73
    %p80 = scmp.eq.s32.totalorder %s21, 1
    %p81 = por %p79, %p80
    %p82 = scmp.ne.s32.totalorder %s73, %s74
    %p83 = scmp.eq.s32.totalorder %s21, 0
    %p84 = por %p82, %p83
    %p85 = scmp.ne.s32.totalorder %s73, %s74
    %p86 = scmp.eq.s32.totalorder %s22, 1
    %p87 = por %p85, %p86
    %p89 = scmp.ne.s32.totalorder %s74, %s88
    %p90 = scmp.eq.s32.totalorder %s22, 0
    %p91 = por %p89, %p90
    %s93 = sadd.s32 %s92, 1
    %p96 = scmp.eq.s32.totalorder %s16, 1
    %p97 = scmp.ne.s32.totalorder %s92, %s94
    %p98 = scmp.eq.s32.totalorder %s16, 0
    %p99 = por %p97, %p98
    %p100 = scmp.ne.s32.totalorder %s92, %s94
    %p101 = scmp.eq.s32.totalorder %s21, 1
    %p102 = por %p100, %p101
    %p103 = scmp.ne.s32.totalorder %s94, %s95
    %p104 = scmp.eq.s32.totalorder %s21, 0
    %p105 = por %p103, %p104
    %p106 = scmp.ne.s32.totalorder %s94, %s95
    %p107 = scmp.eq.s32.totalorder %s22, 1
    %p108 = por %p106, %p107
    %p110 = scmp.ne.s32.totalorder %s95, %s109
    %p111 = scmp.eq.s32.totalorder %s22, 0
    %p112 = por %p110, %p111
    %s114 = sadd.s32 %s113, 1
    %p117 = scmp.eq.s32.totalorder %s16, 1
    %p118 = scmp.ne.s32.totalorder %s113, %s115
    %p119 = scmp.eq.s32.totalorder %s16, 0
    %p120 = por %p118, %p119
    %p121 = scmp.ne.s32.totalorder %s113, %s115
    %p122 = scmp.eq.s32.totalorder %s21, 1
    %p123 = por %p121, %p122
    %p124 = scmp.ne.s32.totalorder %s115, %s116
    %p125 = scmp.eq.s32.totalorder %s21, 0
    %p126 = por %p124, %p125
    %p127 = scmp.ne.s32.totalorder %s115, %s116
    %p128 = scmp.eq.s32.totalorder %s22, 1
    %p129 = por %p127, %p128
    %p131 = scmp.ne.s32.totalorder %s116, %s130
    %p132 = scmp.eq.s32.totalorder %s22, 0
    %p133 = por %p131, %p132
    %s135 = sadd.s32 %s134, 1
    %p138 = scmp.eq.s32.totalorder %s16, 1
    %p139 = scmp.ne.s32.totalorder %s134, %s136
    %p140 = scmp.eq.s32.totalorder %s16, 0
    %p141 = por %p139, %p140
    %p142 = scmp.ne.s32.totalorder %s134, %s136
    %p143 = scmp.eq.s32.totalorder %s21, 1
    %p144 = por %p142, %p143
    %p145 = scmp.ne.s32.totalorder %s136, %s137
    %p146 = scmp.eq.s32.totalorder %s21, 0
    %p147 = por %p145, %p146
    %p148 = scmp.ne.s32.totalorder %s136, %s137
    %p149 = scmp.eq.s32.totalorder %s22, 1
    %p150 = por %p148, %p149
    %p152 = scmp.ne.s32.totalorder %s137, %s151
    %p153 = scmp.eq.s32.totalorder %s22, 0
    %p154 = por %p152, %p153
    %s156 = sadd.s32 %s155, 1
    %p159 = scmp.eq.s32.totalorder %s16, 1
    %p160 = scmp.ne.s32.totalorder %s155, %s157
    %p161 = scmp.eq.s32.totalorder %s16, 0
    %p162 = por %p160, %p161
    %p163 = scmp.ne.s32.totalorder %s155, %s157
    %p164 = scmp.eq.s32.totalorder %s21, 1
    %p165 = por %p163, %p164
    %p166 = scmp.ne.s32.totalorder %s157, %s158
    %p167 = scmp.eq.s32.totalorder %s21, 0
    %p168 = por %p166, %p167
    %p169 = scmp.ne.s32.totalorder %s157, %s158
    %p170 = scmp.eq.s32.totalorder %s22, 1
    %p171 = por %p169, %p170
    %p173 = scmp.ne.s32.totalorder %s158, %s172
    %p174 = scmp.eq.s32.totalorder %s22, 0
    %p175 = por %p173, %p174
    %s177 = sadd.s32 %s176, 1
    %p180 = scmp.eq.s32.totalorder %s16, 1
    %p181 = scmp.ne.s32.totalorder %s176, %s178
    %p182 = scmp.eq.s32.totalorder %s16, 0
    %p183 = por %p181, %p182
    %p184 = scmp.ne.s32.totalorder %s176, %s178
    %p185 = scmp.eq.s32.totalorder %s21, 1
    %p186 = por %p184, %p185
    %p187 = scmp.ne.s32.totalorder %s178, %s179
    %p188 = scmp.eq.s32.totalorder %s21, 0
    %p189 = por %p187, %p188
    %p190 = scmp.ne.s32.totalorder %s178, %s179
    %p191 = scmp.eq.s32.totalorder %s22, 1
    %p192 = por %p190, %p191
    %p194 = scmp.ne.s32.totalorder %s179, %s193
    %p195 = scmp.eq.s32.totalorder %s22, 0
    %p196 = por %p194, %p195
    %s198 = sadd.s32 %s197, 1
    %p201 = scmp.eq.s32.totalorder %s16, 1
    %p202 = scmp.ne.s32.totalorder %s197, %s199
    %p203 = scmp.eq.s32.totalorder %s16, 0
    %p204 = por %p202, %p203
    %p205 = scmp.ne.s32.totalorder %s197, %s199
    %p206 = scmp.eq.s32.totalorder %s21, 1
    %p207 = por %p205, %p206
    %p208 = scmp.ne.s32.totalorder %s199, %s200
    %p209 = scmp.eq.s32.totalorder %s21, 0
    %p210 = por %p208, %p209
    %p211 = scmp.ne.s32.totalorder %s199, %s200
    %p212 = scmp.eq.s32.totalorder %s22, 1
    %p213 = por %p211, %p212
    %p215 = scmp.ne.s32.totalorder %s200, %s214
    %p216 = scmp.eq.s32.totalorder %s22, 0
    %p217 = por %p215, %p216
    %s219 = sadd.s32 %s218, 1
    %p222 = scmp.eq.s32.totalorder %s16, 1
    %p223 = scmp.ne.s32.totalorder %s218, %s220
    %p224 = scmp.eq.s32.totalorder %s16, 0
    %p225 = por %p223, %p224
    %p226 = scmp.ne.s32.totalorder %s218, %s220
    %p227 = scmp.eq.s32.totalorder %s21, 1
    %p228 = por %p226, %p227
    %p229 = scmp.ne.s32.totalorder %s220, %s221
    %p230 = scmp.eq.s32.totalorder %s21, 0
    %p231 = por %p229, %p230
    %p232 = scmp.ne.s32.totalorder %s220, %s221
    %p233 = scmp.eq.s32.totalorder %s22, 1
    %p234 = por %p232, %p233
    %p236 = scmp.ne.s32.totalorder %s221, %s235
    %p237 = scmp.eq.s32.totalorder %s22, 0
    %p238 = por %p236, %p237
    %s239 = ssub.s32 %s16, %s23
    %p240 = scmp.eq.s32.totalorder %s239, 0
    %s242 = sadd.s32 %s241, 1
    %s243 = scalar_select %p240, %s241, %s242
    %p246 = pneg %p240
    %p247 = scmp.eq.s32.totalorder %s16, 1
    %p248 = por %p246, %p247
    %p249 = scmp.ne.s32.totalorder %s241, %s244
    %p250 = scmp.eq.s32.totalorder %s16, 0
    %p251 = por %p249, %p250
    %p252 = scmp.ne.s32.totalorder %s241, %s244
    %p253 = scmp.eq.s32.totalorder %s21, 1
    %p254 = por %p252, %p253
    %p255 = scmp.ne.s32.totalorder %s244, %s245
    %p256 = scmp.eq.s32.totalorder %s21, 0
    %p257 = por %p255, %p256
    %p258 = scmp.ne.s32.totalorder %s244, %s245
    %p259 = scmp.eq.s32.totalorder %s22, 1
    %p260 = por %p258, %p259
    %p262 = scmp.ne.s32.totalorder %s245, %s261
    %p263 = scmp.eq.s32.totalorder %s22, 0
    %p264 = por %p262, %p263
    %p265 = scmp.le.s32.totalorder 1, %s16
    %p266 = scmp.lt.s32.totalorder %s16, 3
    %p267 = pnand %p265, %p266
    %p268 = pneg %p267
    // Predicated region
    $region9: #{tpu_custom_call.1} parent=5 // pred_check
      _
    $region10: #{tpu_custom_call.1} parent=5 // pred_check_branch
      %270 = sbr.rel (%p267) target = $region12
    $region11: #{tpu_custom_call.1} parent=5 // pred_region
      %s271 = ssub.s32 %s16, 1
      // Predicated region
      $region13: #{tpu_custom_call.1} parent=11 // pred_check
        %p272 = pneg %p63
      $region14: #{tpu_custom_call.1} parent=11 // pred_check_branch
        %274 = sbr.rel (%p272) target = $region16
      $region15: #{tpu_custom_call.1} parent=11 // pred_region
        _
      $region16: #{tpu_custom_call.1} parent=11 // pred_fallthru
        _
      // Predicated region
      $region17: #{tpu_custom_call.1} parent=11 // pred_check
        %p275 = pneg %p84
      $region18: #{tpu_custom_call.1} parent=11 // pred_check_branch
        %277 = sbr.rel (%p275) target = $region20
      $region19: #{tpu_custom_call.1} parent=11 // pred_region
        _
      $region20: #{tpu_custom_call.1} parent=11 // pred_fallthru
        _
      // Predicated region
      $region21: #{tpu_custom_call.1} parent=11 // pred_check
        %p278 = pneg %p105
      $region22: #{tpu_custom_call.1} parent=11 // pred_check_branch
        %280 = sbr.rel (%p278) target = $region24
      $region23: #{tpu_custom_call.1} parent=11 // pred_region
        _
      $region24: #{tpu_custom_call.1} parent=11 // pred_fallthru
        _
      // Predicated region
      $region25: #{tpu_custom_call.1} parent=11 // pred_check
        %p281 = pneg %p126
      $region26: #{tpu_custom_call.1} parent=11 // pred_check_branch
        %283 = sbr.rel (%p281) target = $region28
      $region27: #{tpu_custom_call.1} parent=11 // pred_region
        _
      $region28: #{tpu_custom_call.1} parent=11 // pred_fallthru
        _
      // Predicated region
      $region29: #{tpu_custom_call.1} parent=11 // pred_check
        %p284 = pneg %p147
      $region30: #{tpu_custom_call.1} parent=11 // pred_check_branch
        %286 = sbr.rel (%p284) target = $region32
      $region31: #{tpu_custom_call.1} parent=11 // pred_region
        _
      $region32: #{tpu_custom_call.1} parent=11 // pred_fallthru
        _
      // Predicated region
      $region33: #{tpu_custom_call.1} parent=11 // pred_check
        %p287 = pneg %p168
      $region34: #{tpu_custom_call.1} parent=11 // pred_check_branch
        %289 = sbr.rel (%p287) target = $region36
      $region35: #{tpu_custom_call.1} parent=11 // pred_region
        _
      $region36: #{tpu_custom_call.1} parent=11 // pred_fallthru
        _
      // Predicated region
      $region37: #{tpu_custom_call.1} parent=11 // pred_check
        %p290 = pneg %p189
      $region38: #{tpu_custom_call.1} parent=11 // pred_check_branch
        %292 = sbr.rel (%p290) target = $region40
      $region39: #{tpu_custom_call.1} parent=11 // pred_region
        _
      $region40: #{tpu_custom_call.1} parent=11 // pred_fallthru
        _
      // Predicated region
      $region41: #{tpu_custom_call.1} parent=11 // pred_check
        %p293 = pneg %p210
      $region42: #{tpu_custom_call.1} parent=11 // pred_check_branch
        %295 = sbr.rel (%p293) target = $region44
      $region43: #{tpu_custom_call.1} parent=11 // pred_region
        _
      $region44: #{tpu_custom_call.1} parent=11 // pred_fallthru
        _
      // Predicated region
      $region45: #{tpu_custom_call.1} parent=11 // pred_check
        %p296 = pneg %p231
      $region46: #{tpu_custom_call.1} parent=11 // pred_check_branch
        %298 = sbr.rel (%p296) target = $region48
      $region47: #{tpu_custom_call.1} parent=11 // pred_region
        _
      $region48: #{tpu_custom_call.1} parent=11 // pred_fallthru
        _
    $region12: #{tpu_custom_call.1} parent=5 // pred_fallthru
      _
    %p299 = scmp.lt.s32.totalorder %s16, 2
    // Predicated region
    $region49: #{tpu_custom_call.1} parent=5 // pred_check
      %p300 = pneg %p299
    $region50: #{tpu_custom_call.1} parent=5 // pred_check_branch
      %302 = sbr.rel (%p300) target = $region52
    $region51: #{tpu_custom_call.1} parent=5 // pred_region
      // Predicated region
      $region53: #{tpu_custom_call.1} parent=51 // pred_check
        %p303 = pneg %p36
      $region54: #{tpu_custom_call.1} parent=51 // pred_check_branch
        %305 = sbr.rel (%p303) target = $region56
      $region55: #{tpu_custom_call.1} parent=51 // pred_region
        %p306 = scmp.lt.s32.totalorder %s16, 1
        %s307 = scalar_select %p306, %s16, 1
        %s308 = smul.addr %s307, 32
        %s309 = smul.addr %s308, 8
        %s310 = scalar_lea.vmem %s0, %s309
      $region56: #{tpu_custom_call.1} parent=51 // pred_fallthru
        _
    $region52: #{tpu_custom_call.1} parent=5 // pred_fallthru
      _
    %p311 = scmp.le.s32.totalorder 1, %s16
    %p312 = scmp.lt.s32.totalorder %s16, 3
    %p313 = pnand %p311, %p312
    %p314 = pneg %p313
    // Predicated region
    $region57: #{tpu_custom_call.1} parent=5 // pred_check
      _
    $region58: #{tpu_custom_call.1} parent=5 // pred_check_branch
      %316 = sbr.rel (%p313) target = $region60
    $region59: #{tpu_custom_call.1} parent=5 // pred_region
      %s317 = ssub.s32 %s16, 1
      %p318 = scmp.lt.s32.totalorder %s21, 1
      %s319 = scalar_select %p318, %s21, 1
      %s320 = smul.addr %s319, 32
      %s321 = smul.addr %s320, 8
      %s322 = scalar_lea.vmem %s0, %s321
      %p323 = pneg %p42
      %p324 = pneg %p39
      %p325 = pneg %p63
      %p326 = pneg %p60
      %p327 = pneg %p84
      %p328 = pneg %p81
      %p329 = pneg %p105
      %p330 = pneg %p102
      %p331 = pneg %p126
      %p332 = pneg %p123
      %p333 = pneg %p147
      %p334 = pneg %p144
      %p335 = pneg %p168
      %p336 = pneg %p165
      %p337 = pneg %p189
      %p338 = pneg %p186
      %p339 = pneg %p210
      %p340 = pneg %p207
      %p341 = pneg %p231
      %p342 = pneg %p228
      %p343 = pneg %p257
      %p344 = pneg %p254
      %p345 = scmp.lt.s32.totalorder %s21, 1
      %s346 = scalar_select %p345, %s21, 1
      %s347 = smul.addr %s346, 32
      %s348 = smul.addr %s347, 8
      %s349 = scalar_lea.vmem %s10, %s348
      %p350 = scmp.lt.s32.totalorder %s21, 1
      %s351 = scalar_select %p350, %s21, 1
      %s352 = smul.addr %s351, 32
      %s353 = smul.addr %s352, 8
      %s354 = scalar_lea.vmem %s0, %s353
      %p355 = scmp.lt.s32.totalorder %s21, 1
      %s356 = scalar_select %p355, %s21, 1
      %s357 = smul.addr %s356, 32
      %s358 = smul.addr %s357, 8
      %s359 = scalar_lea.vmem %s10, %s358
      %v361 = vlaneseq
      %v362 = vshrl.u32 %v361, 7
      %v363 = vadd.s32 %v362, 8
      %v364 = vadd.s32 %v362, 16
      %v365 = vadd.s32 %v362, 24
      %v366 = vadd.s32 %v362, 32
      %v367 = vadd.s32 %v362, 40
      %v368 = vadd.s32 %v362, 48
      %v369 = vadd.s32 %v362, 56
      %v370 = vadd.s32 %v362, 64
      %v371 = vadd.s32 %v362, 72
      %v372 = vadd.s32 %v362, 80
      %v373 = vadd.s32 %v362, 88
      %v374 = vadd.s32 %v362, 96
      %v375 = vadd.s32 %v362, 104
      %v376 = vadd.s32 %v362, 112
      %v377 = vadd.s32 %v362, 120
      %v378 = vadd.s32 %v362, 128
      %v379 = vadd.s32 %v362, 136
      %v380 = vadd.s32 %v362, 144
      %v381 = vadd.s32 %v362, 152
      %v382 = vadd.s32 %v362, 160
      %v383 = vadd.s32 %v362, 168
      %v384 = vadd.s32 %v362, 176
      %v385 = vadd.s32 %v362, 184
      %v386 = vadd.s32 %v362, 192
      %v387 = vadd.s32 %v362, 200
      %v388 = vadd.s32 %v362, 208
      %v389 = vadd.s32 %v362, 216
      %v390 = vadd.s32 %v362, 224
      %v391 = vadd.s32 %v362, 232
      %v392 = vadd.s32 %v362, 240
      %v393 = vadd.s32 %v362, 248
      %v394 = vand.u32 %v362, 15
      %v395 = vand.u32 %v363, 15
      %v396 = vand.u32 %v364, 15
      %v397 = vand.u32 %v365, 15
      %v398 = vand.u32 %v366, 15
      %v399 = vand.u32 %v367, 15
      %v400 = vand.u32 %v368, 15
      %v401 = vand.u32 %v369, 15
      %v402 = vand.u32 %v370, 15
      %v403 = vand.u32 %v371, 15
      %v404 = vand.u32 %v372, 15
      %v405 = vand.u32 %v373, 15
      %v406 = vand.u32 %v374, 15
      %v407 = vand.u32 %v375, 15
      %v408 = vand.u32 %v376, 15
      %v409 = vand.u32 %v377, 15
      %v410 = vand.u32 %v378, 15
      %v411 = vand.u32 %v379, 15
      %v412 = vand.u32 %v380, 15
      %v413 = vand.u32 %v381, 15
      %v414 = vand.u32 %v382, 15
      %v415 = vand.u32 %v383, 15
      %v416 = vand.u32 %v384, 15
      %v417 = vand.u32 %v385, 15
      %v418 = vand.u32 %v386, 15
      %v419 = vand.u32 %v387, 15
      %v420 = vand.u32 %v388, 15
      %v421 = vand.u32 %v389, 15
      %v422 = vand.u32 %v390, 15
      %v423 = vand.u32 %v391, 15
      %v424 = vand.u32 %v392, 15
      %v425 = vand.u32 %v393, 15
      %vm426 = vcmp.ne.s32.totalorder %v394, 0
      %vm427 = vcmp.ne.s32.totalorder %v395, 0
      %vm428 = vcmp.ne.s32.totalorder %v396, 0
      %vm429 = vcmp.ne.s32.totalorder %v397, 0
      %vm430 = vcmp.ne.s32.totalorder %v398, 0
      %vm431 = vcmp.ne.s32.totalorder %v399, 0
      %vm432 = vcmp.ne.s32.totalorder %v400, 0
      %vm433 = vcmp.ne.s32.totalorder %v401, 0
      %vm434 = vcmp.ne.s32.totalorder %v402, 0
      %vm435 = vcmp.ne.s32.totalorder %v403, 0
      %vm436 = vcmp.ne.s32.totalorder %v404, 0
      %vm437 = vcmp.ne.s32.totalorder %v405, 0
      %vm438 = vcmp.ne.s32.totalorder %v406, 0
      %vm439 = vcmp.ne.s32.totalorder %v407, 0
      %vm440 = vcmp.ne.s32.totalorder %v408, 0
      %vm441 = vcmp.ne.s32.totalorder %v409, 0
      %vm442 = vcmp.ne.s32.totalorder %v410, 0
      %vm443 = vcmp.ne.s32.totalorder %v411, 0
      %vm444 = vcmp.ne.s32.totalorder %v412, 0
      %vm445 = vcmp.ne.s32.totalorder %v413, 0
      %vm446 = vcmp.ne.s32.totalorder %v414, 0
      %vm447 = vcmp.ne.s32.totalorder %v415, 0
      %vm448 = vcmp.ne.s32.totalorder %v416, 0
      %vm449 = vcmp.ne.s32.totalorder %v417, 0
      %vm450 = vcmp.ne.s32.totalorder %v418, 0
      %vm451 = vcmp.ne.s32.totalorder %v419, 0
      %vm452 = vcmp.ne.s32.totalorder %v420, 0
      %vm453 = vcmp.ne.s32.totalorder %v421, 0
      %vm454 = vcmp.ne.s32.totalorder %v422, 0
      %vm455 = vcmp.ne.s32.totalorder %v423, 0
      %vm456 = vcmp.ne.s32.totalorder %v424, 0
      %vm457 = vcmp.ne.s32.totalorder %v425, 0
      %vm458 = vcmp.ne.s32.totalorder %v394, 15
      %vm459 = vcmp.ne.s32.totalorder %v395, 15
      %vm460 = vcmp.ne.s32.totalorder %v396, 15
      %vm461 = vcmp.ne.s32.totalorder %v397, 15
      %vm462 = vcmp.ne.s32.totalorder %v398, 15
      %vm463 = vcmp.ne.s32.totalorder %v399, 15
      %vm464 = vcmp.ne.s32.totalorder %v400, 15
      %vm465 = vcmp.ne.s32.totalorder %v401, 15
      %vm466 = vcmp.ne.s32.totalorder %v402, 15
      %vm467 = vcmp.ne.s32.totalorder %v403, 15
      %vm468 = vcmp.ne.s32.totalorder %v404, 15
      %vm469 = vcmp.ne.s32.totalorder %v405, 15
      %vm470 = vcmp.ne.s32.totalorder %v406, 15
      %vm471 = vcmp.ne.s32.totalorder %v407, 15
      %vm472 = vcmp.ne.s32.totalorder %v408, 15
      %vm473 = vcmp.ne.s32.totalorder %v409, 15
      %vm474 = vcmp.ne.s32.totalorder %v410, 15
      %vm475 = vcmp.ne.s32.totalorder %v411, 15
      %vm476 = vcmp.ne.s32.totalorder %v412, 15
      %vm477 = vcmp.ne.s32.totalorder %v413, 15
      %vm478 = vcmp.ne.s32.totalorder %v414, 15
      %vm479 = vcmp.ne.s32.totalorder %v415, 15
      %vm480 = vcmp.ne.s32.totalorder %v416, 15
      %vm481 = vcmp.ne.s32.totalorder %v417, 15
      %vm482 = vcmp.ne.s32.totalorder %v418, 15
      %vm483 = vcmp.ne.s32.totalorder %v419, 15
      %vm484 = vcmp.ne.s32.totalorder %v420, 15
      %vm485 = vcmp.ne.s32.totalorder %v421, 15
      %vm486 = vcmp.ne.s32.totalorder %v422, 15
      %vm487 = vcmp.ne.s32.totalorder %v423, 15
      %vm488 = vcmp.ne.s32.totalorder %v424, 15
      %vm489 = vcmp.ne.s32.totalorder %v425, 15
      %v490 = vld [vmem:[%s354] sm:$0xff]
      %v491 = vld [vmem:[%s354 + $0x8] sm:$0xff]
      %v492 = vld [vmem:[%s354 + $0x10] sm:$0xff]
      %v493 = vld [vmem:[%s354 + $0x18] sm:$0xff]
      %v494 = vld [vmem:[%s354 + $0x20] sm:$0xff]
      %v495 = vld [vmem:[%s354 + $0x28] sm:$0xff]
      %v496 = vld [vmem:[%s354 + $0x30] sm:$0xff]
      %v497 = vld [vmem:[%s354 + $0x38] sm:$0xff]
      %v498 = vld [vmem:[%s354 + $0x40] sm:$0xff]
      %v499 = vld [vmem:[%s354 + $0x48] sm:$0xff]
      %v500 = vld [vmem:[%s354 + $0x50] sm:$0xff]
      %v501 = vld [vmem:[%s354 + $0x58] sm:$0xff]
      %v502 = vld [vmem:[%s354 + $0x60] sm:$0xff]
      %v503 = vld [vmem:[%s354 + $0x68] sm:$0xff]
      %v504 = vld [vmem:[%s354 + $0x70] sm:$0xff]
      %v505 = vld [vmem:[%s354 + $0x78] sm:$0xff]
      %v506 = vld [vmem:[%s354 + $0x80] sm:$0xff]
      %v507 = vld [vmem:[%s354 + $0x88] sm:$0xff]
      %v508 = vld [vmem:[%s354 + $0x90] sm:$0xff]
      %v509 = vld [vmem:[%s354 + $0x98] sm:$0xff]
      %v510 = vld [vmem:[%s354 + $0xa0] sm:$0xff]
      %v511 = vld [vmem:[%s354 + $0xa8] sm:$0xff]
      %v512 = vld [vmem:[%s354 + $0xb0] sm:$0xff]
      %v513 = vld [vmem:[%s354 + $0xb8] sm:$0xff]
      %v514 = vld [vmem:[%s354 + $0xc0] sm:$0xff]
      %v515 = vld [vmem:[%s354 + $0xc8] sm:$0xff]
      %v516 = vld [vmem:[%s354 + $0xd0] sm:$0xff]
      %v517 = vld [vmem:[%s354 + $0xd8] sm:$0xff]
      %v518 = vld [vmem:[%s354 + $0xe0] sm:$0xff]
      %v519 = vld [vmem:[%s354 + $0xe8] sm:$0xff]
      %v520 = vld [vmem:[%s354 + $0xf0] sm:$0xff]
      %v521 = vld [vmem:[%s354 + $0xf8] sm:$0xff]
      %v522 = vld [vmem:[%s1] sm:$0x1]
      %v524 = vperm.slane %v522, 0
      %v526 = vmul.f32 %v490, %v524
      %v527 = vmul.f32 %v491, %v524
      %v528 = vmul.f32 %v492, %v524
      %v529 = vmul.f32 %v493, %v524
      %v530 = vmul.f32 %v494, %v524
      %v531 = vmul.f32 %v495, %v524
      %v532 = vmul.f32 %v496, %v524
      %v533 = vmul.f32 %v497, %v524
      %v534 = vmul.f32 %v498, %v524
      %v535 = vmul.f32 %v499, %v524
      %v536 = vmul.f32 %v500, %v524
      %v537 = vmul.f32 %v501, %v524
      %v538 = vmul.f32 %v502, %v524
      %v539 = vmul.f32 %v503, %v524
      %v540 = vmul.f32 %v504, %v524
      %v541 = vmul.f32 %v505, %v524
      %v542 = vmul.f32 %v506, %v524
      %v543 = vmul.f32 %v507, %v524
      %v544 = vmul.f32 %v508, %v524
      %v545 = vmul.f32 %v509, %v524
      %v546 = vmul.f32 %v510, %v524
      %v547 = vmul.f32 %v511, %v524
      %v548 = vmul.f32 %v512, %v524
      %v549 = vmul.f32 %v513, %v524
      %v550 = vmul.f32 %v514, %v524
      %v551 = vmul.f32 %v515, %v524
      %v552 = vmul.f32 %v516, %v524
      %v553 = vmul.f32 %v517, %v524
      %v554 = vmul.f32 %v518, %v524
      %v555 = vmul.f32 %v519, %v524
      %v556 = vmul.f32 %v520, %v524
      %v557 = vmul.f32 %v521, %v524
      %v558 = vld [vmem:[%s2] sm:$0x1]
      %v560 = vperm.slane %v558, 0
      %v562 = vadd.f32 %v526, %v560
      %v563 = vadd.f32 %v527, %v560
      %v564 = vadd.f32 %v528, %v560
      %v565 = vadd.f32 %v529, %v560
      %v566 = vadd.f32 %v530, %v560
      %v567 = vadd.f32 %v531, %v560
      %v568 = vadd.f32 %v532, %v560
      %v569 = vadd.f32 %v533, %v560
      %v570 = vadd.f32 %v534, %v560
      %v571 = vadd.f32 %v535, %v560
      %v572 = vadd.f32 %v536, %v560
      %v573 = vadd.f32 %v537, %v560
      %v574 = vadd.f32 %v538, %v560
      %v575 = vadd.f32 %v539, %v560
      %v576 = vadd.f32 %v540, %v560
      %v577 = vadd.f32 %v541, %v560
      %v578 = vadd.f32 %v542, %v560
      %v579 = vadd.f32 %v543, %v560
      %v580 = vadd.f32 %v544, %v560
      %v581 = vadd.f32 %v545, %v560
      %v582 = vadd.f32 %v546, %v560
      %v583 = vadd.f32 %v547, %v560
      %v584 = vadd.f32 %v548, %v560
      %v585 = vadd.f32 %v549, %v560
      %v586 = vadd.f32 %v550, %v560
      %v587 = vadd.f32 %v551, %v560
      %v588 = vadd.f32 %v552, %v560
      %v589 = vadd.f32 %v553, %v560
      %v590 = vadd.f32 %v554, %v560
      %v591 = vadd.f32 %v555, %v560
      %v592 = vadd.f32 %v556, %v560
      %v593 = vadd.f32 %v557, %v560
      %v594 = vmax.f32 %v562, 0.0
      %v595 = vmax.f32 %v563, 0.0
      %v596 = vmax.f32 %v564, 0.0
      %v597 = vmax.f32 %v565, 0.0
      %v598 = vmax.f32 %v566, 0.0
      %v599 = vmax.f32 %v567, 0.0
      %v600 = vmax.f32 %v568, 0.0
      %v601 = vmax.f32 %v569, 0.0
      %v602 = vmax.f32 %v570, 0.0
      %v603 = vmax.f32 %v571, 0.0
      %v604 = vmax.f32 %v572, 0.0
      %v605 = vmax.f32 %v573, 0.0
      %v606 = vmax.f32 %v574, 0.0
      %v607 = vmax.f32 %v575, 0.0
      %v608 = vmax.f32 %v576, 0.0
      %v609 = vmax.f32 %v577, 0.0
      %v610 = vmax.f32 %v578, 0.0
      %v611 = vmax.f32 %v579, 0.0
      %v612 = vmax.f32 %v580, 0.0
      %v613 = vmax.f32 %v581, 0.0
      %v614 = vmax.f32 %v582, 0.0
      %v615 = vmax.f32 %v583, 0.0
      %v616 = vmax.f32 %v584, 0.0
      %v617 = vmax.f32 %v585, 0.0
      %v618 = vmax.f32 %v586, 0.0
      %v619 = vmax.f32 %v587, 0.0
      %v620 = vmax.f32 %v588, 0.0
      %v621 = vmax.f32 %v589, 0.0
      %v622 = vmax.f32 %v590, 0.0
      %v623 = vmax.f32 %v591, 0.0
      %v624 = vmax.f32 %v592, 0.0
      %v625 = vmax.f32 %v593, 0.0
      %v626 = vrot.slane %v594, 7
      %v627 = vrot.slane %v595, 7
      %v628 = vrot.slane %v596, 7
      %v629 = vrot.slane %v597, 7
      %v630 = vrot.slane %v598, 7
      %v631 = vrot.slane %v599, 7
      %v632 = vrot.slane %v600, 7
      %v633 = vrot.slane %v601, 7
      %v634 = vrot.slane %v602, 7
      %v635 = vrot.slane %v603, 7
      %v636 = vrot.slane %v604, 7
      %v637 = vrot.slane %v605, 7
      %v638 = vrot.slane %v606, 7
      %v639 = vrot.slane %v607, 7
      %v640 = vrot.slane %v608, 7
      %v641 = vrot.slane %v609, 7
      %v642 = vrot.slane %v610, 7
      %v643 = vrot.slane %v611, 7
      %v644 = vrot.slane %v612, 7
      %v645 = vrot.slane %v613, 7
      %v646 = vrot.slane %v614, 7
      %v647 = vrot.slane %v615, 7
      %v648 = vrot.slane %v616, 7
      %v649 = vrot.slane %v617, 7
      %v650 = vrot.slane %v618, 7
      %v651 = vrot.slane %v619, 7
      %v652 = vrot.slane %v620, 7
      %v653 = vrot.slane %v621, 7
      %v654 = vrot.slane %v622, 7
      %v655 = vrot.slane %v623, 7
      %v656 = vrot.slane %v624, 7
      %v657 = vrot.slane %v625, 7
      %vm658 = vcmp.lt.s32.totalorder %v362, 1
      %v659 = vsel %vm658, %v656, %v657
      %v660 = vsel %vm658, %v655, %v656
      %v661 = vsel %vm658, %v654, %v655
      %v662 = vsel %vm658, %v653, %v654
      %v663 = vsel %vm658, %v652, %v653
      %v664 = vsel %vm658, %v651, %v652
      %v665 = vsel %vm658, %v650, %v651
      %v666 = vsel %vm658, %v649, %v650
      %v667 = vsel %vm658, %v648, %v649
      %v668 = vsel %vm658, %v647, %v648
      %v669 = vsel %vm658, %v646, %v647
      %v670 = vsel %vm658, %v645, %v646
      %v671 = vsel %vm658, %v644, %v645
      %v672 = vsel %vm658, %v643, %v644
      %v673 = vsel %vm658, %v642, %v643
      %v674 = vsel %vm658, %v641, %v642
      %v675 = vsel %vm658, %v640, %v641
      %v676 = vsel %vm658, %v639, %v640
      %v677 = vsel %vm658, %v638, %v639
      %v678 = vsel %vm658, %v637, %v638
      %v679 = vsel %vm658, %v636, %v637
      %v680 = vsel %vm658, %v635, %v636
      %v681 = vsel %vm658, %v634, %v635
      %v682 = vsel %vm658, %v633, %v634
      %v683 = vsel %vm658, %v632, %v633
      %v684 = vsel %vm658, %v631, %v632
      %v685 = vsel %vm658, %v630, %v631
      %v686 = vsel %vm658, %v629, %v630
      %v687 = vsel %vm658, %v628, %v629
      %v688 = vsel %vm658, %v627, %v628
      %v689 = vsel %vm658, %v626, %v627
      %v690 = vsel %vm658, %v657, %v626
      %v691 = vsel %vm426, 1, 0
      %v692 = vsel %vm427, 1, 0
      %v693 = vsel %vm428, 1, 0
      %v694 = vsel %vm429, 1, 0
      %v695 = vsel %vm430, 1, 0
      %v696 = vsel %vm431, 1, 0
      %v697 = vsel %vm432, 1, 0
      %v698 = vsel %vm433, 1, 0
      %v699 = vsel %vm434, 1, 0
      %v700 = vsel %vm435, 1, 0
      %v701 = vsel %vm436, 1, 0
      %v702 = vsel %vm437, 1, 0
      %v703 = vsel %vm438, 1, 0
      %v704 = vsel %vm439, 1, 0
      %v705 = vsel %vm440, 1, 0
      %v706 = vsel %vm441, 1, 0
      %v707 = vsel %vm442, 1, 0
      %v708 = vsel %vm443, 1, 0
      %v709 = vsel %vm444, 1, 0
      %v710 = vsel %vm445, 1, 0
      %v711 = vsel %vm446, 1, 0
      %v712 = vsel %vm447, 1, 0
      %v713 = vsel %vm448, 1, 0
      %v714 = vsel %vm449, 1, 0
      %v715 = vsel %vm450, 1, 0
      %v716 = vsel %vm451, 1, 0
      %v717 = vsel %vm452, 1, 0
      %v718 = vsel %vm453, 1, 0
      %v719 = vsel %vm454, 1, 0
      %v720 = vsel %vm455, 1, 0
      %v721 = vsel %vm456, 1, 0
      %v722 = vsel %vm457, 1, 0
      %vm723 = vcmp.eq.s32.totalorder %v691, 1
      %vm724 = vcmp.eq.s32.totalorder %v692, 1
      %vm725 = vcmp.eq.s32.totalorder %v693, 1
      %vm726 = vcmp.eq.s32.totalorder %v694, 1
      %vm727 = vcmp.eq.s32.totalorder %v695, 1
      %vm728 = vcmp.eq.s32.totalorder %v696, 1
      %vm729 = vcmp.eq.s32.totalorder %v697, 1
      %vm730 = vcmp.eq.s32.totalorder %v698, 1
      %vm731 = vcmp.eq.s32.totalorder %v699, 1
      %vm732 = vcmp.eq.s32.totalorder %v700, 1
      %vm733 = vcmp.eq.s32.totalorder %v701, 1
      %vm734 = vcmp.eq.s32.totalorder %v702, 1
      %vm735 = vcmp.eq.s32.totalorder %v703, 1
      %vm736 = vcmp.eq.s32.totalorder %v704, 1
      %vm737 = vcmp.eq.s32.totalorder %v705, 1
      %vm738 = vcmp.eq.s32.totalorder %v706, 1
      %vm739 = vcmp.eq.s32.totalorder %v707, 1
      %vm740 = vcmp.eq.s32.totalorder %v708, 1
      %vm741 = vcmp.eq.s32.totalorder %v709, 1
      %vm742 = vcmp.eq.s32.totalorder %v710, 1
      %vm743 = vcmp.eq.s32.totalorder %v711, 1
      %vm744 = vcmp.eq.s32.totalorder %v712, 1
      %vm745 = vcmp.eq.s32.totalorder %v713, 1
      %vm746 = vcmp.eq.s32.totalorder %v714, 1
      %vm747 = vcmp.eq.s32.totalorder %v715, 1
      %vm748 = vcmp.eq.s32.totalorder %v716, 1
      %vm749 = vcmp.eq.s32.totalorder %v717, 1
      %vm750 = vcmp.eq.s32.totalorder %v718, 1
      %vm751 = vcmp.eq.s32.totalorder %v719, 1
      %vm752 = vcmp.eq.s32.totalorder %v720, 1
      %vm753 = vcmp.eq.s32.totalorder %v721, 1
      %vm754 = vcmp.eq.s32.totalorder %v722, 1
      %v755 = vsel %vm723, %v690, 0.0
      %v756 = vsel %vm724, %v689, 0.0
      %v757 = vsel %vm725, %v688, 0.0
      %v758 = vsel %vm726, %v687, 0.0
      %v759 = vsel %vm727, %v686, 0.0
      %v760 = vsel %vm728, %v685, 0.0
      %v761 = vsel %vm729, %v684, 0.0
      %v762 = vsel %vm730, %v683, 0.0
      %v763 = vsel %vm731, %v682, 0.0
      %v764 = vsel %vm732, %v681, 0.0
      %v765 = vsel %vm733, %v680, 0.0
      %v766 = vsel %vm734, %v679, 0.0
      %v767 = vsel %vm735, %v678, 0.0
      %v768 = vsel %vm736, %v677, 0.0
      %v769 = vsel %vm737, %v676, 0.0
      %v770 = vsel %vm738, %v675, 0.0
      %v771 = vsel %vm739, %v674, 0.0
      %v772 = vsel %vm740, %v673, 0.0
      %v773 = vsel %vm741, %v672, 0.0
      %v774 = vsel %vm742, %v671, 0.0
      %v775 = vsel %vm743, %v670, 0.0
      %v776 = vsel %vm744, %v669, 0.0
      %v777 = vsel %vm745, %v668, 0.0
      %v778 = vsel %vm746, %v667, 0.0
      %v779 = vsel %vm747, %v666, 0.0
      %v780 = vsel %vm748, %v665, 0.0
      %v781 = vsel %vm749, %v664, 0.0
      %v782 = vsel %vm750, %v663, 0.0
      %v783 = vsel %vm751, %v662, 0.0
      %v784 = vsel %vm752, %v661, 0.0
      %v785 = vsel %vm753, %v660, 0.0
      %v786 = vsel %vm754, %v659, 0.0
      %v787 = vrot.slane %v594, 1
      %v788 = vrot.slane %v595, 1
      %v789 = vrot.slane %v596, 1
      %v790 = vrot.slane %v597, 1
      %v791 = vrot.slane %v598, 1
      %v792 = vrot.slane %v599, 1
      %v793 = vrot.slane %v600, 1
      %v794 = vrot.slane %v601, 1
      %v795 = vrot.slane %v602, 1
      %v796 = vrot.slane %v603, 1
      %v797 = vrot.slane %v604, 1
      %v798 = vrot.slane %v605, 1
      %v799 = vrot.slane %v606, 1
      %v800 = vrot.slane %v607, 1
      %v801 = vrot.slane %v608, 1
      %v802 = vrot.slane %v609, 1
      %v803 = vrot.slane %v610, 1
      %v804 = vrot.slane %v611, 1
      %v805 = vrot.slane %v612, 1
      %v806 = vrot.slane %v613, 1
      %v807 = vrot.slane %v614, 1
      %v808 = vrot.slane %v615, 1
      %v809 = vrot.slane %v616, 1
      %v810 = vrot.slane %v617, 1
      %v811 = vrot.slane %v618, 1
      %v812 = vrot.slane %v619, 1
      %v813 = vrot.slane %v620, 1
      %v814 = vrot.slane %v621, 1
      %v815 = vrot.slane %v622, 1
      %v816 = vrot.slane %v623, 1
      %v817 = vrot.slane %v624, 1
      %v818 = vrot.slane %v625, 1
      %vm819 = vcmp.lt.s32.totalorder %v362, 7
      %v820 = vsel %vm819, %v817, %v818
      %v821 = vsel %vm819, %v816, %v817
      %v822 = vsel %vm819, %v815, %v816
      %v823 = vsel %vm819, %v814, %v815
      %v824 = vsel %vm819, %v813, %v814
      %v825 = vsel %vm819, %v812, %v813
      %v826 = vsel %vm819, %v811, %v812
      %v827 = vsel %vm819, %v810, %v811
      %v828 = vsel %vm819, %v809, %v810
      %v829 = vsel %vm819, %v808, %v809
      %v830 = vsel %vm819, %v807, %v808
      %v831 = vsel %vm819, %v806, %v807
      %v832 = vsel %vm819, %v805, %v806
      %v833 = vsel %vm819, %v804, %v805
      %v834 = vsel %vm819, %v803, %v804
      %v835 = vsel %vm819, %v802, %v803
      %v836 = vsel %vm819, %v801, %v802
      %v837 = vsel %vm819, %v800, %v801
      %v838 = vsel %vm819, %v799, %v800
      %v839 = vsel %vm819, %v798, %v799
      %v840 = vsel %vm819, %v797, %v798
      %v841 = vsel %vm819, %v796, %v797
      %v842 = vsel %vm819, %v795, %v796
      %v843 = vsel %vm819, %v794, %v795
      %v844 = vsel %vm819, %v793, %v794
      %v845 = vsel %vm819, %v792, %v793
      %v846 = vsel %vm819, %v791, %v792
      %v847 = vsel %vm819, %v790, %v791
      %v848 = vsel %vm819, %v789, %v790
      %v849 = vsel %vm819, %v788, %v789
      %v850 = vsel %vm819, %v787, %v788
      %v851 = vsel %vm819, %v818, %v787
      %v852 = vsel %vm458, 1, 0
      %v853 = vsel %vm459, 1, 0
      %v854 = vsel %vm460, 1, 0
      %v855 = vsel %vm461, 1, 0
      %v856 = vsel %vm462, 1, 0
      %v857 = vsel %vm463, 1, 0
      %v858 = vsel %vm464, 1, 0
      %v859 = vsel %vm465, 1, 0
      %v860 = vsel %vm466, 1, 0
      %v861 = vsel %vm467, 1, 0
      %v862 = vsel %vm468, 1, 0
      %v863 = vsel %vm469, 1, 0
      %v864 = vsel %vm470, 1, 0
      %v865 = vsel %vm471, 1, 0
      %v866 = vsel %vm472, 1, 0
      %v867 = vsel %vm473, 1, 0
      %v868 = vsel %vm474, 1, 0
      %v869 = vsel %vm475, 1, 0
      %v870 = vsel %vm476, 1, 0
      %v871 = vsel %vm477, 1, 0
      %v872 = vsel %vm478, 1, 0
      %v873 = vsel %vm479, 1, 0
      %v874 = vsel %vm480, 1, 0
      %v875 = vsel %vm481, 1, 0
      %v876 = vsel %vm482, 1, 0
      %v877 = vsel %vm483, 1, 0
      %v878 = vsel %vm484, 1, 0
      %v879 = vsel %vm485, 1, 0
      %v880 = vsel %vm486, 1, 0
      %v881 = vsel %vm487, 1, 0
      %v882 = vsel %vm488, 1, 0
      %v883 = vsel %vm489, 1, 0
      %vm884 = vcmp.eq.s32.totalorder %v852, 1
      %vm885 = vcmp.eq.s32.totalorder %v853, 1
      %vm886 = vcmp.eq.s32.totalorder %v854, 1
      %vm887 = vcmp.eq.s32.totalorder %v855, 1
      %vm888 = vcmp.eq.s32.totalorder %v856, 1
      %vm889 = vcmp.eq.s32.totalorder %v857, 1
      %vm890 = vcmp.eq.s32.totalorder %v858, 1
      %vm891 = vcmp.eq.s32.totalorder %v859, 1
      %vm892 = vcmp.eq.s32.totalorder %v860, 1
      %vm893 = vcmp.eq.s32.totalorder %v861, 1
      %vm894 = vcmp.eq.s32.totalorder %v862, 1
      %vm895 = vcmp.eq.s32.totalorder %v863, 1
      %vm896 = vcmp.eq.s32.totalorder %v864, 1
      %vm897 = vcmp.eq.s32.totalorder %v865, 1
      %vm898 = vcmp.eq.s32.totalorder %v866, 1
      %vm899 = vcmp.eq.s32.totalorder %v867, 1
      %vm900 = vcmp.eq.s32.totalorder %v868, 1
      %vm901 = vcmp.eq.s32.totalorder %v869, 1
      %vm902 = vcmp.eq.s32.totalorder %v870, 1
      %vm903 = vcmp.eq.s32.totalorder %v871, 1
      %vm904 = vcmp.eq.s32.totalorder %v872, 1
      %vm905 = vcmp.eq.s32.totalorder %v873, 1
      %vm906 = vcmp.eq.s32.totalorder %v874, 1
      %vm907 = vcmp.eq.s32.totalorder %v875, 1
      %vm908 = vcmp.eq.s32.totalorder %v876, 1
      %vm909 = vcmp.eq.s32.totalorder %v877, 1
      %vm910 = vcmp.eq.s32.totalorder %v878, 1
      %vm911 = vcmp.eq.s32.totalorder %v879, 1
      %vm912 = vcmp.eq.s32.totalorder %v880, 1
      %vm913 = vcmp.eq.s32.totalorder %v881, 1
      %vm914 = vcmp.eq.s32.totalorder %v882, 1
      %vm915 = vcmp.eq.s32.totalorder %v883, 1
      %v916 = vsel %vm884, %v850, 0.0
      %v917 = vsel %vm885, %v849, 0.0
      %v918 = vsel %vm886, %v848, 0.0
      %v919 = vsel %vm887, %v847, 0.0
      %v920 = vsel %vm888, %v846, 0.0
      %v921 = vsel %vm889, %v845, 0.0
      %v922 = vsel %vm890, %v844, 0.0
      %v923 = vsel %vm891, %v843, 0.0
      %v924 = vsel %vm892, %v842, 0.0
      %v925 = vsel %vm893, %v841, 0.0
      %v926 = vsel %vm894, %v840, 0.0
      %v927 = vsel %vm895, %v839, 0.0
      %v928 = vsel %vm896, %v838, 0.0
      %v929 = vsel %vm897, %v837, 0.0
      %v930 = vsel %vm898, %v836, 0.0
      %v931 = vsel %vm899, %v835, 0.0
      %v932 = vsel %vm900, %v834, 0.0
      %v933 = vsel %vm901, %v833, 0.0
      %v934 = vsel %vm902, %v832, 0.0
      %v935 = vsel %vm903, %v831, 0.0
      %v936 = vsel %vm904, %v830, 0.0
      %v937 = vsel %vm905, %v829, 0.0
      %v938 = vsel %vm906, %v828, 0.0
      %v939 = vsel %vm907, %v827, 0.0
      %v940 = vsel %vm908, %v826, 0.0
      %v941 = vsel %vm909, %v825, 0.0
      %v942 = vsel %vm910, %v824, 0.0
      %v943 = vsel %vm911, %v823, 0.0
      %v944 = vsel %vm912, %v822, 0.0
      %v945 = vsel %vm913, %v821, 0.0
      %v946 = vsel %vm914, %v820, 0.0
      %v947 = vsel %vm915, %v851, 0.0
      %v948 = vpack.c.bf16 %v755, %v755
      %v949 = vpack.c.bf16 %v756, %v756
      %v950 = vpack.c.bf16 %v757, %v757
      %v951 = vpack.c.bf16 %v758, %v758
      %v952 = vpack.c.bf16 %v759, %v759
      %v953 = vpack.c.bf16 %v760, %v760
      %v954 = vpack.c.bf16 %v761, %v761
      %v955 = vpack.c.bf16 %v762, %v762
      %v956 = vpack.c.bf16 %v763, %v763
      %v957 = vpack.c.bf16 %v764, %v764
      %v958 = vpack.c.bf16 %v765, %v765
      %v959 = vpack.c.bf16 %v766, %v766
      %v960 = vpack.c.bf16 %v767, %v767
      %v961 = vpack.c.bf16 %v768, %v768
      %v962 = vpack.c.bf16 %v769, %v769
      %v963 = vpack.c.bf16 %v770, %v770
      %v964 = vpack.c.bf16 %v771, %v771
      %v965 = vpack.c.bf16 %v772, %v772
      %v966 = vpack.c.bf16 %v773, %v773
      %v967 = vpack.c.bf16 %v774, %v774
      %v968 = vpack.c.bf16 %v775, %v775
      %v969 = vpack.c.bf16 %v776, %v776
      %v970 = vpack.c.bf16 %v777, %v777
      %v971 = vpack.c.bf16 %v778, %v778
      %v972 = vpack.c.bf16 %v779, %v779
      %v973 = vpack.c.bf16 %v780, %v780
      %v974 = vpack.c.bf16 %v781, %v781
      %v975 = vpack.c.bf16 %v782, %v782
      %v976 = vpack.c.bf16 %v783, %v783
      %v977 = vpack.c.bf16 %v784, %v784
      %v978 = vpack.c.bf16 %v785, %v785
      %v979 = vpack.c.bf16 %v786, %v786
      %v980 = vpack.c.bf16 %v594, %v594
      %v981 = vpack.c.bf16 %v595, %v595
      %v982 = vpack.c.bf16 %v596, %v596
      %v983 = vpack.c.bf16 %v597, %v597
      %v984 = vpack.c.bf16 %v598, %v598
      %v985 = vpack.c.bf16 %v599, %v599
      %v986 = vpack.c.bf16 %v600, %v600
      %v987 = vpack.c.bf16 %v601, %v601
      %v988 = vpack.c.bf16 %v602, %v602
      %v989 = vpack.c.bf16 %v603, %v603
      %v990 = vpack.c.bf16 %v604, %v604
      %v991 = vpack.c.bf16 %v605, %v605
      %v992 = vpack.c.bf16 %v606, %v606
      %v993 = vpack.c.bf16 %v607, %v607
      %v994 = vpack.c.bf16 %v608, %v608
      %v995 = vpack.c.bf16 %v609, %v609
      %v996 = vpack.c.bf16 %v610, %v610
      %v997 = vpack.c.bf16 %v611, %v611
      %v998 = vpack.c.bf16 %v612, %v612
      %v999 = vpack.c.bf16 %v613, %v613
      %v1000 = vpack.c.bf16 %v614, %v614
      %v1001 = vpack.c.bf16 %v615, %v615
      %v1002 = vpack.c.bf16 %v616, %v616
      %v1003 = vpack.c.bf16 %v617, %v617
      %v1004 = vpack.c.bf16 %v618, %v618
      %v1005 = vpack.c.bf16 %v619, %v619
      %v1006 = vpack.c.bf16 %v620, %v620
      %v1007 = vpack.c.bf16 %v621, %v621
      %v1008 = vpack.c.bf16 %v622, %v622
      %v1009 = vpack.c.bf16 %v623, %v623
      %v1010 = vpack.c.bf16 %v624, %v624
      %v1011 = vpack.c.bf16 %v625, %v625
      %v1012 = vpack.c.bf16 %v916, %v916
      %v1013 = vpack.c.bf16 %v917, %v917
      %v1014 = vpack.c.bf16 %v918, %v918
      %v1015 = vpack.c.bf16 %v919, %v919
      %v1016 = vpack.c.bf16 %v920, %v920
      %v1017 = vpack.c.bf16 %v921, %v921
      %v1018 = vpack.c.bf16 %v922, %v922
      %v1019 = vpack.c.bf16 %v923, %v923
      %v1020 = vpack.c.bf16 %v924, %v924
      %v1021 = vpack.c.bf16 %v925, %v925
      %v1022 = vpack.c.bf16 %v926, %v926
      %v1023 = vpack.c.bf16 %v927, %v927
      %v1024 = vpack.c.bf16 %v928, %v928
      %v1025 = vpack.c.bf16 %v929, %v929
      %v1026 = vpack.c.bf16 %v930, %v930
      %v1027 = vpack.c.bf16 %v931, %v931
      %v1028 = vpack.c.bf16 %v932, %v932
      %v1029 = vpack.c.bf16 %v933, %v933
      %v1030 = vpack.c.bf16 %v934, %v934
      %v1031 = vpack.c.bf16 %v935, %v935
      %v1032 = vpack.c.bf16 %v936, %v936
      %v1033 = vpack.c.bf16 %v937, %v937
      %v1034 = vpack.c.bf16 %v938, %v938
      %v1035 = vpack.c.bf16 %v939, %v939
      %v1036 = vpack.c.bf16 %v940, %v940
      %v1037 = vpack.c.bf16 %v941, %v941
      %v1038 = vpack.c.bf16 %v942, %v942
      %v1039 = vpack.c.bf16 %v943, %v943
      %v1040 = vpack.c.bf16 %v944, %v944
      %v1041 = vpack.c.bf16 %v945, %v945
      %v1042 = vpack.c.bf16 %v946, %v946
      %v1043 = vpack.c.bf16 %v947, %v947
      %v1076 = vunpack.c.l.b16 %v948
      %v1077 = vunpack.c.l.b16 %v949
      %v1078 = vunpack.c.l.b16 %v950
      %v1079 = vunpack.c.l.b16 %v951
      %v1080 = vunpack.c.l.b16 %v952
      %v1081 = vunpack.c.l.b16 %v953
      %v1082 = vunpack.c.l.b16 %v954
      %v1083 = vunpack.c.l.b16 %v955
      %v1084 = vunpack.c.l.b16 %v956
      %v1085 = vunpack.c.l.b16 %v957
      %v1086 = vunpack.c.l.b16 %v958
      %v1087 = vunpack.c.l.b16 %v959
      %v1088 = vunpack.c.l.b16 %v960
      %v1089 = vunpack.c.l.b16 %v961
      %v1090 = vunpack.c.l.b16 %v962
      %v1091 = vunpack.c.l.b16 %v963
      %v1092 = vunpack.c.l.b16 %v964
      %v1093 = vunpack.c.l.b16 %v965
      %v1094 = vunpack.c.l.b16 %v966
      %v1095 = vunpack.c.l.b16 %v967
      %v1096 = vunpack.c.l.b16 %v968
      %v1097 = vunpack.c.l.b16 %v969
      %v1098 = vunpack.c.l.b16 %v970
      %v1099 = vunpack.c.l.b16 %v971
      %v1100 = vunpack.c.l.b16 %v972
      %v1101 = vunpack.c.l.b16 %v973
      %v1102 = vunpack.c.l.b16 %v974
      %v1103 = vunpack.c.l.b16 %v975
      %v1104 = vunpack.c.l.b16 %v976
      %v1105 = vunpack.c.l.b16 %v977
      %v1106 = vunpack.c.l.b16 %v978
      %v1107 = vunpack.c.l.b16 %v979
      %v1108 = vpack.c.b16 %v1077, %v1076
      %v1109 = vpack.c.b16 %v1079, %v1078
      %v1110 = vpack.c.b16 %v1081, %v1080
      %v1111 = vpack.c.b16 %v1083, %v1082
      %v1112 = vpack.c.b16 %v1085, %v1084
      %v1113 = vpack.c.b16 %v1087, %v1086
      %v1114 = vpack.c.b16 %v1089, %v1088
      %v1115 = vpack.c.b16 %v1091, %v1090
      %v1116 = vpack.c.b16 %v1093, %v1092
      %v1117 = vpack.c.b16 %v1095, %v1094
      %v1118 = vpack.c.b16 %v1097, %v1096
      %v1119 = vpack.c.b16 %v1099, %v1098
      %v1120 = vpack.c.b16 %v1101, %v1100
      %v1121 = vpack.c.b16 %v1103, %v1102
      %v1122 = vpack.c.b16 %v1105, %v1104
      %v1123 = vpack.c.b16 %v1107, %v1106
      %v1156 = vunpack.c.l.b16 %v980
      %v1157 = vunpack.c.l.b16 %v981
      %v1158 = vunpack.c.l.b16 %v982
      %v1159 = vunpack.c.l.b16 %v983
      %v1160 = vunpack.c.l.b16 %v984
      %v1161 = vunpack.c.l.b16 %v985
      %v1162 = vunpack.c.l.b16 %v986
      %v1163 = vunpack.c.l.b16 %v987
      %v1164 = vunpack.c.l.b16 %v988
      %v1165 = vunpack.c.l.b16 %v989
      %v1166 = vunpack.c.l.b16 %v990
      %v1167 = vunpack.c.l.b16 %v991
      %v1168 = vunpack.c.l.b16 %v992
      %v1169 = vunpack.c.l.b16 %v993
      %v1170 = vunpack.c.l.b16 %v994
      %v1171 = vunpack.c.l.b16 %v995
      %v1172 = vunpack.c.l.b16 %v996
      %v1173 = vunpack.c.l.b16 %v997
      %v1174 = vunpack.c.l.b16 %v998
      %v1175 = vunpack.c.l.b16 %v999
      %v1176 = vunpack.c.l.b16 %v1000
      %v1177 = vunpack.c.l.b16 %v1001
      %v1178 = vunpack.c.l.b16 %v1002
      %v1179 = vunpack.c.l.b16 %v1003
      %v1180 = vunpack.c.l.b16 %v1004
      %v1181 = vunpack.c.l.b16 %v1005
      %v1182 = vunpack.c.l.b16 %v1006
      %v1183 = vunpack.c.l.b16 %v1007
      %v1184 = vunpack.c.l.b16 %v1008
      %v1185 = vunpack.c.l.b16 %v1009
      %v1186 = vunpack.c.l.b16 %v1010
      %v1187 = vunpack.c.l.b16 %v1011
      %v1188 = vpack.c.b16 %v1157, %v1156
      %v1189 = vpack.c.b16 %v1159, %v1158
      %v1190 = vpack.c.b16 %v1161, %v1160
      %v1191 = vpack.c.b16 %v1163, %v1162
      %v1192 = vpack.c.b16 %v1165, %v1164
      %v1193 = vpack.c.b16 %v1167, %v1166
      %v1194 = vpack.c.b16 %v1169, %v1168
      %v1195 = vpack.c.b16 %v1171, %v1170
      %v1196 = vpack.c.b16 %v1173, %v1172
      %v1197 = vpack.c.b16 %v1175, %v1174
      %v1198 = vpack.c.b16 %v1177, %v1176
      %v1199 = vpack.c.b16 %v1179, %v1178
      %v1200 = vpack.c.b16 %v1181, %v1180
      %v1201 = vpack.c.b16 %v1183, %v1182
      %v1202 = vpack.c.b16 %v1185, %v1184
      %v1203 = vpack.c.b16 %v1187, %v1186
      %1204 = vrot.lane.b32.xlu0 %v1188, 32
      %v1205 = vpop.permute.xlu0 %1204
      %1206 = vrot.lane.b32.xlu0 %v1189, 32
      %v1207 = vpop.permute.xlu0 %1206
      %1208 = vrot.lane.b32.xlu0 %v1190, 32
      %v1209 = vpop.permute.xlu0 %1208
      %1210 = vrot.lane.b32.xlu0 %v1191, 32
      %v1211 = vpop.permute.xlu0 %1210
      %1212 = vrot.lane.b32.xlu0 %v1192, 32
      %v1213 = vpop.permute.xlu0 %1212
      %1214 = vrot.lane.b32.xlu0 %v1193, 32
      %v1215 = vpop.permute.xlu0 %1214
      %1216 = vrot.lane.b32.xlu0 %v1194, 32
      %v1217 = vpop.permute.xlu0 %1216
      %1218 = vrot.lane.b32.xlu0 %v1195, 32
      %v1219 = vpop.permute.xlu0 %1218
      %1220 = vrot.lane.b32.xlu0 %v1196, 32
      %v1221 = vpop.permute.xlu0 %1220
      %1222 = vrot.lane.b32.xlu0 %v1197, 32
      %v1223 = vpop.permute.xlu0 %1222
      %1224 = vrot.lane.b32.xlu0 %v1198, 32
      %v1225 = vpop.permute.xlu0 %1224
      %1226 = vrot.lane.b32.xlu0 %v1199, 32
      %v1227 = vpop.permute.xlu0 %1226
      %1228 = vrot.lane.b32.xlu0 %v1200, 32
      %v1229 = vpop.permute.xlu0 %1228
      %1230 = vrot.lane.b32.xlu0 %v1201, 32
      %v1231 = vpop.permute.xlu0 %1230
      %1232 = vrot.lane.b32.xlu0 %v1202, 32
      %v1233 = vpop.permute.xlu0 %1232
      %1234 = vrot.lane.b32.xlu0 %v1203, 32
      %v1235 = vpop.permute.xlu0 %1234
      %v1268 = vunpack.c.l.b16 %v1012
      %v1269 = vunpack.c.l.b16 %v1013
      %v1270 = vunpack.c.l.b16 %v1014
      %v1271 = vunpack.c.l.b16 %v1015
      %v1272 = vunpack.c.l.b16 %v1016
      %v1273 = vunpack.c.l.b16 %v1017
      %v1274 = vunpack.c.l.b16 %v1018
      %v1275 = vunpack.c.l.b16 %v1019
      %v1276 = vunpack.c.l.b16 %v1020
      %v1277 = vunpack.c.l.b16 %v1021
      %v1278 = vunpack.c.l.b16 %v1022
      %v1279 = vunpack.c.l.b16 %v1023
      %v1280 = vunpack.c.l.b16 %v1024
      %v1281 = vunpack.c.l.b16 %v1025
      %v1282 = vunpack.c.l.b16 %v1026
      %v1283 = vunpack.c.l.b16 %v1027
      %v1284 = vunpack.c.l.b16 %v1028
      %v1285 = vunpack.c.l.b16 %v1029
      %v1286 = vunpack.c.l.b16 %v1030
      %v1287 = vunpack.c.l.b16 %v1031
      %v1288 = vunpack.c.l.b16 %v1032
      %v1289 = vunpack.c.l.b16 %v1033
      %v1290 = vunpack.c.l.b16 %v1034
      %v1291 = vunpack.c.l.b16 %v1035
      %v1292 = vunpack.c.l.b16 %v1036
      %v1293 = vunpack.c.l.b16 %v1037
      %v1294 = vunpack.c.l.b16 %v1038
      %v1295 = vunpack.c.l.b16 %v1039
      %v1296 = vunpack.c.l.b16 %v1040
      %v1297 = vunpack.c.l.b16 %v1041
      %v1298 = vunpack.c.l.b16 %v1042
      %v1299 = vunpack.c.l.b16 %v1043
      %v1300 = vpack.c.b16 %v1269, %v1268
      %v1301 = vpack.c.b16 %v1271, %v1270
      %v1302 = vpack.c.b16 %v1273, %v1272
      %v1303 = vpack.c.b16 %v1275, %v1274
      %v1304 = vpack.c.b16 %v1277, %v1276
      %v1305 = vpack.c.b16 %v1279, %v1278
      %v1306 = vpack.c.b16 %v1281, %v1280
      %v1307 = vpack.c.b16 %v1283, %v1282
      %v1308 = vpack.c.b16 %v1285, %v1284
      %v1309 = vpack.c.b16 %v1287, %v1286
      %v1310 = vpack.c.b16 %v1289, %v1288
      %v1311 = vpack.c.b16 %v1291, %v1290
      %v1312 = vpack.c.b16 %v1293, %v1292
      %v1313 = vpack.c.b16 %v1295, %v1294
      %v1314 = vpack.c.b16 %v1297, %v1296
      %v1315 = vpack.c.b16 %v1299, %v1298
      %1316 = vrot.lane.b32.xlu0 %v1300, 64
      %v1317 = vpop.permute.xlu0 %1316
      %1318 = vrot.lane.b32.xlu0 %v1301, 64
      %v1319 = vpop.permute.xlu0 %1318
      %1320 = vrot.lane.b32.xlu0 %v1302, 64
      %v1321 = vpop.permute.xlu0 %1320
      %1322 = vrot.lane.b32.xlu0 %v1303, 64
      %v1323 = vpop.permute.xlu0 %1322
      %1324 = vrot.lane.b32.xlu0 %v1304, 64
      %v1325 = vpop.permute.xlu0 %1324
      %1326 = vrot.lane.b32.xlu0 %v1305, 64
      %v1327 = vpop.permute.xlu0 %1326
      %1328 = vrot.lane.b32.xlu0 %v1306, 64
      %v1329 = vpop.permute.xlu0 %1328
      %1330 = vrot.lane.b32.xlu0 %v1307, 64
      %v1331 = vpop.permute.xlu0 %1330
      %1332 = vrot.lane.b32.xlu0 %v1308, 64
      %v1333 = vpop.permute.xlu0 %1332
      %1334 = vrot.lane.b32.xlu0 %v1309, 64
      %v1335 = vpop.permute.xlu0 %1334
      %1336 = vrot.lane.b32.xlu0 %v1310, 64
      %v1337 = vpop.permute.xlu0 %1336
      %1338 = vrot.lane.b32.xlu0 %v1311, 64
      %v1339 = vpop.permute.xlu0 %1338
      %1340 = vrot.lane.b32.xlu0 %v1312, 64
      %v1341 = vpop.permute.xlu0 %1340
      %1342 = vrot.lane.b32.xlu0 %v1313, 64
      %v1343 = vpop.permute.xlu0 %1342
      %1344 = vrot.lane.b32.xlu0 %v1314, 64
      %v1345 = vpop.permute.xlu0 %1344
      %1346 = vrot.lane.b32.xlu0 %v1315, 64
      %v1347 = vpop.permute.xlu0 %1346
      %vm1348 = vcmask 261120
      %v1351 = vsel %vm1348, %v1108, %v1205
      %v1354 = vsel %vm1348, %v1109, %v1207
      %v1357 = vsel %vm1348, %v1110, %v1209
      %v1360 = vsel %vm1348, %v1111, %v1211
      %v1363 = vsel %vm1348, %v1112, %v1213
      %v1366 = vsel %vm1348, %v1113, %v1215
      %v1369 = vsel %vm1348, %v1114, %v1217
      %v1372 = vsel %vm1348, %v1115, %v1219
      %v1375 = vsel %vm1348, %v1116, %v1221
      %v1378 = vsel %vm1348, %v1117, %v1223
      %v1381 = vsel %vm1348, %v1118, %v1225
      %v1384 = vsel %vm1348, %v1119, %v1227
      %v1387 = vsel %vm1348, %v1120, %v1229
      %v1390 = vsel %vm1348, %v1121, %v1231
      %v1393 = vsel %vm1348, %v1122, %v1233
      %v1396 = vsel %vm1348, %v1123, %v1235
      %vm1397 = vcmask 523264
      %v1399 = vsel %vm1397, %v1351, %v1317
      %v1401 = vsel %vm1397, %v1354, %v1319
      %v1403 = vsel %vm1397, %v1357, %v1321
      %v1405 = vsel %vm1397, %v1360, %v1323
      %v1407 = vsel %vm1397, %v1363, %v1325
      %v1409 = vsel %vm1397, %v1366, %v1327
      %v1411 = vsel %vm1397, %v1369, %v1329
      %v1413 = vsel %vm1397, %v1372, %v1331
      %v1415 = vsel %vm1397, %v1375, %v1333
      %v1417 = vsel %vm1397, %v1378, %v1335
      %v1419 = vsel %vm1397, %v1381, %v1337
      %v1421 = vsel %vm1397, %v1384, %v1339
      %v1423 = vsel %vm1397, %v1387, %v1341
      %v1425 = vsel %vm1397, %v1390, %v1343
      %v1427 = vsel %vm1397, %v1393, %v1345
      %v1429 = vsel %vm1397, %v1396, %v1347
      %s1430 = scalar_lea.vmem %s3, 48
      %v1431 = vld [vmem:[%s1430] sm:$0xf]
      %v1432 = vld [vmem:[%s1430 + $0x4] sm:$0xf]
      %v1433 = vld [vmem:[%s1430 + $0x8] sm:$0xf]
      %v1434 = vld [vmem:[%s1430 + $0xc] sm:$0xf]
      %v1435 = vld [vmem:[%s1430 + $0x10] sm:$0xf]
      %v1436 = vld [vmem:[%s1430 + $0x14] sm:$0xf]
      %v1437 = vld [vmem:[%s1430 + $0x18] sm:$0xf]
      %v1438 = vld [vmem:[%s1430 + $0x1c] sm:$0xf]
      %v1439 = vld [vmem:[%s1430 + $0x20] sm:$0xf]
      %v1440 = vld [vmem:[%s1430 + $0x24] sm:$0xf]
      %v1441 = vld [vmem:[%s1430 + $0x28] sm:$0xf]
      %v1442 = vld [vmem:[%s1430 + $0x2c] sm:$0xf]
      %v1455 = vunpack.c.l.b16 %v1431
      %v1456 = vunpack.c.l.b16 %v1432
      %v1457 = vunpack.c.l.b16 %v1433
      %v1458 = vunpack.c.l.b16 %v1434
      %v1459 = vunpack.c.l.b16 %v1435
      %v1460 = vunpack.c.l.b16 %v1436
      %v1461 = vunpack.c.l.b16 %v1437
      %v1462 = vunpack.c.l.b16 %v1438
      %v1463 = vunpack.c.l.b16 %v1439
      %v1464 = vunpack.c.l.b16 %v1440
      %v1465 = vunpack.c.l.b16 %v1441
      %v1466 = vunpack.c.l.b16 %v1442
      %v1467 = vpack.c.b16 %v1456, %v1455
      %v1468 = vpack.c.b16 %v1458, %v1457
      %v1469 = vpack.c.b16 %v1460, %v1459
      %v1470 = vpack.c.b16 %v1462, %v1461
      %v1471 = vpack.c.b16 %v1464, %v1463
      %v1472 = vpack.c.b16 %v1466, %v1465
      %vm1479 = vcmask 785408
      %v1480 = vsel %vm1479, %v1399, 0
      %v1482 = vsel %vm1479, %v1401, 0
      %v1484 = vsel %vm1479, %v1403, 0
      %v1486 = vsel %vm1479, %v1405, 0
      %v1488 = vsel %vm1479, %v1407, 0
      %v1490 = vsel %vm1479, %v1409, 0
      %v1492 = vsel %vm1479, %v1411, 0
      %v1494 = vsel %vm1479, %v1413, 0
      %v1496 = vsel %vm1479, %v1415, 0
      %v1498 = vsel %vm1479, %v1417, 0
      %v1500 = vsel %vm1479, %v1419, 0
      %v1502 = vsel %vm1479, %v1421, 0
      %v1504 = vsel %vm1479, %v1423, 0
      %v1506 = vsel %vm1479, %v1425, 0
      %v1508 = vsel %vm1479, %v1427, 0
      %v1510 = vsel %vm1479, %v1429, 0
      %1512 = vmatpush.bf16.msra.mxu0 0
      %1513 = vmatpush.bf16.msra.mxu0 0
      %1514 = vmatpush.bf16.msra.mxu0 %v1472
      %1515 = vmatpush.bf16.msra.mxu0 %v1471
      %1516 = vmatpush.bf16.msra.mxu0 %v1470
      %1517 = vmatpush.bf16.msra.mxu0 %v1469
      %1518 = vmatpush.bf16.msra.mxu0 %v1468
      %1519 = vmatpush.bf16.msra.mxu0 %v1467
      %1520 = vmatmul.bf16.gmra.mxu0 %v1480
      %v1521 = vpop.f32.mrf.mxu0
      %v1522 = vadd.f32 0.0, %v1521
      %v1523 = vpop.f32.mrf.mxu0
      %v1524 = vadd.f32 0.0, %v1523
      %1525 = vmatmul.bf16.gmra.mxu0 %v1482
      %v1526 = vpop.f32.mrf.mxu0
      %v1527 = vadd.f32 0.0, %v1526
      %v1528 = vpop.f32.mrf.mxu0
      %v1529 = vadd.f32 0.0, %v1528
      %1530 = vmatmul.bf16.gmra.mxu0 %v1484
      %v1531 = vpop.f32.mrf.mxu0
      %v1532 = vadd.f32 0.0, %v1531
      %v1533 = vpop.f32.mrf.mxu0
      %v1534 = vadd.f32 0.0, %v1533
      %1535 = vmatmul.bf16.gmra.mxu0 %v1486
      %v1536 = vpop.f32.mrf.mxu0
      %v1537 = vadd.f32 0.0, %v1536
      %v1538 = vpop.f32.mrf.mxu0
      %v1539 = vadd.f32 0.0, %v1538
      %1540 = vmatmul.bf16.gmra.mxu0 %v1488
      %v1541 = vpop.f32.mrf.mxu0
      %v1542 = vadd.f32 0.0, %v1541
      %v1543 = vpop.f32.mrf.mxu0
      %v1544 = vadd.f32 0.0, %v1543
      %1545 = vmatmul.bf16.gmra.mxu0 %v1490
      %v1546 = vpop.f32.mrf.mxu0
      %v1547 = vadd.f32 0.0, %v1546
      %v1548 = vpop.f32.mrf.mxu0
      %v1549 = vadd.f32 0.0, %v1548
      %1550 = vmatmul.bf16.gmra.mxu0 %v1492
      %v1551 = vpop.f32.mrf.mxu0
      %v1552 = vadd.f32 0.0, %v1551
      %v1553 = vpop.f32.mrf.mxu0
      %v1554 = vadd.f32 0.0, %v1553
      %1555 = vmatmul.bf16.gmra.mxu0 %v1494
      %v1556 = vpop.f32.mrf.mxu0
      %v1557 = vadd.f32 0.0, %v1556
      %v1558 = vpop.f32.mrf.mxu0
      %v1559 = vadd.f32 0.0, %v1558
      %1560 = vmatmul.bf16.gmra.mxu0 %v1496
      %v1561 = vpop.f32.mrf.mxu0
      %v1562 = vadd.f32 0.0, %v1561
      %v1563 = vpop.f32.mrf.mxu0
      %v1564 = vadd.f32 0.0, %v1563
      %1565 = vmatmul.bf16.gmra.mxu0 %v1498
      %v1566 = vpop.f32.mrf.mxu0
      %v1567 = vadd.f32 0.0, %v1566
      %v1568 = vpop.f32.mrf.mxu0
      %v1569 = vadd.f32 0.0, %v1568
      %1570 = vmatmul.bf16.gmra.mxu0 %v1500
      %v1571 = vpop.f32.mrf.mxu0
      %v1572 = vadd.f32 0.0, %v1571
      %v1573 = vpop.f32.mrf.mxu0
      %v1574 = vadd.f32 0.0, %v1573
      %1575 = vmatmul.bf16.gmra.mxu0 %v1502
      %v1576 = vpop.f32.mrf.mxu0
      %v1577 = vadd.f32 0.0, %v1576
      %v1578 = vpop.f32.mrf.mxu0
      %v1579 = vadd.f32 0.0, %v1578
      %1580 = vmatmul.bf16.gmra.mxu0 %v1504
      %v1581 = vpop.f32.mrf.mxu0
      %v1582 = vadd.f32 0.0, %v1581
      %v1583 = vpop.f32.mrf.mxu0
      %v1584 = vadd.f32 0.0, %v1583
      %1585 = vmatmul.bf16.gmra.mxu0 %v1506
      %v1586 = vpop.f32.mrf.mxu0
      %v1587 = vadd.f32 0.0, %v1586
      %v1588 = vpop.f32.mrf.mxu0
      %v1589 = vadd.f32 0.0, %v1588
      %1590 = vmatmul.bf16.gmra.mxu0 %v1508
      %v1591 = vpop.f32.mrf.mxu0
      %v1592 = vadd.f32 0.0, %v1591
      %v1593 = vpop.f32.mrf.mxu0
      %v1594 = vadd.f32 0.0, %v1593
      %1595 = vmatmul.bf16.gmra.mxu0 %v1510
      %v1596 = vpop.f32.mrf.mxu0
      %v1597 = vadd.f32 0.0, %v1596
      %v1598 = vpop.f32.mrf.mxu0
      %v1599 = vadd.f32 0.0, %v1598
      %1600 = vdwg.mxu0
      %vm1601 = vcmask 130048
      %1602 = vst.msk [vmem:[#allocation2] sm:$0xff] %vm1601, %v1522
      %1603 = vst.msk [vmem:[#allocation2 + $0x8] sm:$0xff] %vm1601, %v1524
      %1604 = vst.msk [vmem:[#allocation2 + $0x10] sm:$0xff] %vm1601, %v1527
      %1605 = vst.msk [vmem:[#allocation2 + $0x18] sm:$0xff] %vm1601, %v1529
      %1606 = vst.msk [vmem:[#allocation2 + $0x20] sm:$0xff] %vm1601, %v1532
      %1607 = vst.msk [vmem:[#allocation2 + $0x28] sm:$0xff] %vm1601, %v1534
      %1608 = vst.msk [vmem:[#allocation2 + $0x30] sm:$0xff] %vm1601, %v1537
      %1609 = vst.msk [vmem:[#allocation2 + $0x38] sm:$0xff] %vm1601, %v1539
      %1610 = vst.msk [vmem:[#allocation2 + $0x40] sm:$0xff] %vm1601, %v1542
      %1611 = vst.msk [vmem:[#allocation2 + $0x48] sm:$0xff] %vm1601, %v1544
      %1612 = vst.msk [vmem:[#allocation2 + $0x50] sm:$0xff] %vm1601, %v1547
      %1613 = vst.msk [vmem:[#allocation2 + $0x58] sm:$0xff] %vm1601, %v1549
      %1614 = vst.msk [vmem:[#allocation2 + $0x60] sm:$0xff] %vm1601, %v1552
      %1615 = vst.msk [vmem:[#allocation2 + $0x68] sm:$0xff] %vm1601, %v1554
      %1616 = vst.msk [vmem:[#allocation2 + $0x70] sm:$0xff] %vm1601, %v1557
      %1617 = vst.msk [vmem:[#allocation2 + $0x78] sm:$0xff] %vm1601, %v1559
      %1618 = vst.msk [vmem:[#allocation2 + $0x80] sm:$0xff] %vm1601, %v1562
      %1619 = vst.msk [vmem:[#allocation2 + $0x88] sm:$0xff] %vm1601, %v1564
      %1620 = vst.msk [vmem:[#allocation2 + $0x90] sm:$0xff] %vm1601, %v1567
      %1621 = vst.msk [vmem:[#allocation2 + $0x98] sm:$0xff] %vm1601, %v1569
      %1622 = vst.msk [vmem:[#allocation2 + $0xa0] sm:$0xff] %vm1601, %v1572
      %1623 = vst.msk [vmem:[#allocation2 + $0xa8] sm:$0xff] %vm1601, %v1574
      %1624 = vst.msk [vmem:[#allocation2 + $0xb0] sm:$0xff] %vm1601, %v1577
      %1625 = vst.msk [vmem:[#allocation2 + $0xb8] sm:$0xff] %vm1601, %v1579
      %1626 = vst.msk [vmem:[#allocation2 + $0xc0] sm:$0xff] %vm1601, %v1582
      %1627 = vst.msk [vmem:[#allocation2 + $0xc8] sm:$0xff] %vm1601, %v1584
      %1628 = vst.msk [vmem:[#allocation2 + $0xd0] sm:$0xff] %vm1601, %v1587
      %1629 = vst.msk [vmem:[#allocation2 + $0xd8] sm:$0xff] %vm1601, %v1589
      %1630 = vst.msk [vmem:[#allocation2 + $0xe0] sm:$0xff] %vm1601, %v1592
      %1631 = vst.msk [vmem:[#allocation2 + $0xe8] sm:$0xff] %vm1601, %v1594
      %1632 = vst.msk [vmem:[#allocation2 + $0xf0] sm:$0xff] %vm1601, %v1597
      %1633 = vst.msk [vmem:[#allocation2 + $0xf8] sm:$0xff] %vm1601, %v1599
      %v1634 = vld [vmem:[%s3] sm:$0xf]
      %v1635 = vld [vmem:[%s3 + $0x4] sm:$0xf]
      %v1636 = vld [vmem:[%s3 + $0x8] sm:$0xf]
      %v1637 = vld [vmem:[%s3 + $0xc] sm:$0xf]
      %v1638 = vld [vmem:[%s3 + $0x10] sm:$0xf]
      %v1639 = vld [vmem:[%s3 + $0x14] sm:$0xf]
      %v1640 = vld [vmem:[%s3 + $0x18] sm:$0xf]
      %v1641 = vld [vmem:[%s3 + $0x1c] sm:$0xf]
      %v1642 = vld [vmem:[%s3 + $0x20] sm:$0xf]
      %v1643 = vld [vmem:[%s3 + $0x24] sm:$0xf]
      %v1644 = vld [vmem:[%s3 + $0x28] sm:$0xf]
      %v1645 = vld [vmem:[%s3 + $0x2c] sm:$0xf]
      %v1658 = vunpack.c.l.b16 %v1634
      %v1659 = vunpack.c.l.b16 %v1635
      %v1660 = vunpack.c.l.b16 %v1636
      %v1661 = vunpack.c.l.b16 %v1637
      %v1662 = vunpack.c.l.b16 %v1638
      %v1663 = vunpack.c.l.b16 %v1639
      %v1664 = vunpack.c.l.b16 %v1640
      %v1665 = vunpack.c.l.b16 %v1641
      %v1666 = vunpack.c.l.b16 %v1642
      %v1667 = vunpack.c.l.b16 %v1643
      %v1668 = vunpack.c.l.b16 %v1644
      %v1669 = vunpack.c.l.b16 %v1645
      %v1670 = vpack.c.b16 %v1659, %v1658
      %v1671 = vpack.c.b16 %v1661, %v1660
      %v1672 = vpack.c.b16 %v1663, %v1662
      %v1673 = vpack.c.b16 %v1665, %v1664
      %v1674 = vpack.c.b16 %v1667, %v1666
      %v1675 = vpack.c.b16 %v1669, %v1668
      %1682 = vmatpush.bf16.msra.mxu0 0
      %1683 = vmatpush.bf16.msra.mxu0 0
      %1684 = vmatpush.bf16.msra.mxu0 %v1675
      %1685 = vmatpush.bf16.msra.mxu0 %v1674
      %1686 = vmatpush.bf16.msra.mxu0 %v1673
      %1687 = vmatpush.bf16.msra.mxu0 %v1672
      %1688 = vmatpush.bf16.msra.mxu0 %v1671
      %1689 = vmatpush.bf16.msra.mxu0 %v1670
      %1690 = vmatmul.bf16.gmra.mxu0 %v1480
      %v1691 = vpop.f32.mrf.mxu0
      %v1692 = vadd.f32 0.0, %v1691
      %v1693 = vpop.f32.mrf.mxu0
      %v1694 = vadd.f32 0.0, %v1693
      %1695 = vmatmul.bf16.gmra.mxu0 %v1482
      %v1696 = vpop.f32.mrf.mxu0
      %v1697 = vadd.f32 0.0, %v1696
      %v1698 = vpop.f32.mrf.mxu0
      %v1699 = vadd.f32 0.0, %v1698
      %1700 = vmatmul.bf16.gmra.mxu0 %v1484
      %v1701 = vpop.f32.mrf.mxu0
      %v1702 = vadd.f32 0.0, %v1701
      %v1703 = vpop.f32.mrf.mxu0
      %v1704 = vadd.f32 0.0, %v1703
      %1705 = vmatmul.bf16.gmra.mxu0 %v1486
      %v1706 = vpop.f32.mrf.mxu0
      %v1707 = vadd.f32 0.0, %v1706
      %v1708 = vpop.f32.mrf.mxu0
      %v1709 = vadd.f32 0.0, %v1708
      %1710 = vmatmul.bf16.gmra.mxu0 %v1488
      %v1711 = vpop.f32.mrf.mxu0
      %v1712 = vadd.f32 0.0, %v1711
      %v1713 = vpop.f32.mrf.mxu0
      %v1714 = vadd.f32 0.0, %v1713
      %1715 = vmatmul.bf16.gmra.mxu0 %v1490
      %v1716 = vpop.f32.mrf.mxu0
      %v1717 = vadd.f32 0.0, %v1716
      %v1718 = vpop.f32.mrf.mxu0
      %v1719 = vadd.f32 0.0, %v1718
      %1720 = vmatmul.bf16.gmra.mxu0 %v1492
      %v1721 = vpop.f32.mrf.mxu0
      %v1722 = vadd.f32 0.0, %v1721
      %v1723 = vpop.f32.mrf.mxu0
      %v1724 = vadd.f32 0.0, %v1723
      %1725 = vmatmul.bf16.gmra.mxu0 %v1494
      %v1726 = vpop.f32.mrf.mxu0
      %v1727 = vadd.f32 0.0, %v1726
      %v1728 = vpop.f32.mrf.mxu0
      %v1729 = vadd.f32 0.0, %v1728
      %1730 = vmatmul.bf16.gmra.mxu0 %v1496
      %v1731 = vpop.f32.mrf.mxu0
      %v1732 = vadd.f32 0.0, %v1731
      %v1733 = vpop.f32.mrf.mxu0
      %v1734 = vadd.f32 0.0, %v1733
      %1735 = vmatmul.bf16.gmra.mxu0 %v1498
      %v1736 = vpop.f32.mrf.mxu0
      %v1737 = vadd.f32 0.0, %v1736
      %v1738 = vpop.f32.mrf.mxu0
      %v1739 = vadd.f32 0.0, %v1738
      %1740 = vmatmul.bf16.gmra.mxu0 %v1500
      %v1741 = vpop.f32.mrf.mxu0
      %v1742 = vadd.f32 0.0, %v1741
      %v1743 = vpop.f32.mrf.mxu0
      %v1744 = vadd.f32 0.0, %v1743
      %1745 = vmatmul.bf16.gmra.mxu0 %v1502
      %v1746 = vpop.f32.mrf.mxu0
      %v1747 = vadd.f32 0.0, %v1746
      %v1748 = vpop.f32.mrf.mxu0
      %v1749 = vadd.f32 0.0, %v1748
      %1750 = vmatmul.bf16.gmra.mxu0 %v1504
      %v1751 = vpop.f32.mrf.mxu0
      %v1752 = vadd.f32 0.0, %v1751
      %v1753 = vpop.f32.mrf.mxu0
      %v1754 = vadd.f32 0.0, %v1753
      %1755 = vmatmul.bf16.gmra.mxu0 %v1506
      %v1756 = vpop.f32.mrf.mxu0
      %v1757 = vadd.f32 0.0, %v1756
      %v1758 = vpop.f32.mrf.mxu0
      %v1759 = vadd.f32 0.0, %v1758
      %1760 = vmatmul.bf16.gmra.mxu0 %v1508
      %v1761 = vpop.f32.mrf.mxu0
      %v1762 = vadd.f32 0.0, %v1761
      %v1763 = vpop.f32.mrf.mxu0
      %v1764 = vadd.f32 0.0, %v1763
      %1765 = vmatmul.bf16.gmra.mxu0 %v1510
      %v1766 = vpop.f32.mrf.mxu0
      %v1767 = vpop.f32.mrf.mxu0
      %1768 = vdwg.mxu0
      %v1769 = vld [vmem:[#allocation2 + $0x10] sm:$0xff]
      %v1770 = vld [vmem:[#allocation2 + $0x18] sm:$0xff]
      %v1771 = vld [vmem:[#allocation2 + $0x20] sm:$0xff]
      %v1772 = vld [vmem:[#allocation2 + $0x28] sm:$0xff]
      %v1773 = vld [vmem:[#allocation2 + $0x30] sm:$0xff]
      %v1774 = vld [vmem:[#allocation2 + $0x38] sm:$0xff]
      %v1775 = vld [vmem:[#allocation2 + $0x40] sm:$0xff]
      %v1776 = vld [vmem:[#allocation2 + $0x48] sm:$0xff]
      %v1777 = vld [vmem:[#allocation2 + $0x50] sm:$0xff]
      %v1778 = vld [vmem:[#allocation2 + $0x58] sm:$0xff]
      %v1779 = vld [vmem:[#allocation2 + $0x60] sm:$0xff]
      %v1780 = vld [vmem:[#allocation2 + $0x68] sm:$0xff]
      %v1781 = vld [vmem:[#allocation2 + $0x70] sm:$0xff]
      %v1782 = vld [vmem:[#allocation2 + $0x78] sm:$0xff]
      %v1783 = vld [vmem:[#allocation2 + $0x80] sm:$0xff]
      %v1784 = vld [vmem:[#allocation2 + $0x88] sm:$0xff]
      %v1785 = vld [vmem:[#allocation2 + $0x90] sm:$0xff]
      %v1786 = vld [vmem:[#allocation2 + $0x98] sm:$0xff]
      %v1787 = vld [vmem:[#allocation2 + $0xa0] sm:$0xff]
      %v1788 = vld [vmem:[#allocation2 + $0xa8] sm:$0xff]
      %v1789 = vld [vmem:[#allocation2 + $0xb0] sm:$0xff]
      %v1790 = vld [vmem:[#allocation2 + $0xb8] sm:$0xff]
      %v1791 = vld [vmem:[#allocation2 + $0xc0] sm:$0xff]
      %v1792 = vld [vmem:[#allocation2 + $0xc8] sm:$0xff]
      %v1793 = vld [vmem:[#allocation2 + $0xd0] sm:$0xff]
      %v1794 = vld [vmem:[#allocation2 + $0xd8] sm:$0xff]
      %v1795 = vld [vmem:[#allocation2 + $0xe0] sm:$0xff]
      %v1796 = vld [vmem:[#allocation2 + $0xe8] sm:$0xff]
      %v1797 = vld [vmem:[#allocation2 + $0xf0] sm:$0xff]
      %v1798 = vld [vmem:[#allocation2 + $0xf8] sm:$0xff]
      %v1799 = vadd.f32 %v1769, %v1692
      %v1800 = vadd.f32 %v1770, %v1694
      %v1801 = vadd.f32 %v1771, %v1697
      %v1802 = vadd.f32 %v1772, %v1699
      %v1803 = vadd.f32 %v1773, %v1702
      %v1804 = vadd.f32 %v1774, %v1704
      %v1805 = vadd.f32 %v1775, %v1707
      %v1806 = vadd.f32 %v1776, %v1709
      %v1807 = vadd.f32 %v1777, %v1712
      %v1808 = vadd.f32 %v1778, %v1714
      %v1809 = vadd.f32 %v1779, %v1717
      %v1810 = vadd.f32 %v1780, %v1719
      %v1811 = vadd.f32 %v1781, %v1722
      %v1812 = vadd.f32 %v1782, %v1724
      %v1813 = vadd.f32 %v1783, %v1727
      %v1814 = vadd.f32 %v1784, %v1729
      %v1815 = vadd.f32 %v1785, %v1732
      %v1816 = vadd.f32 %v1786, %v1734
      %v1817 = vadd.f32 %v1787, %v1737
      %v1818 = vadd.f32 %v1788, %v1739
      %v1819 = vadd.f32 %v1789, %v1742
      %v1820 = vadd.f32 %v1790, %v1744
      %v1821 = vadd.f32 %v1791, %v1747
      %v1822 = vadd.f32 %v1792, %v1749
      %v1823 = vadd.f32 %v1793, %v1752
      %v1824 = vadd.f32 %v1794, %v1754
      %v1825 = vadd.f32 %v1795, %v1757
      %v1826 = vadd.f32 %v1796, %v1759
      %v1827 = vadd.f32 %v1797, %v1762
      %v1828 = vadd.f32 %v1798, %v1764
      %1829 = vst.msk [vmem:[#allocation2 + $0x10] sm:$0xff] %vm1601, %v1799
      %1830 = vst.msk [vmem:[#allocation2 + $0x18] sm:$0xff] %vm1601, %v1800
      %1831 = vst.msk [vmem:[#allocation2 + $0x20] sm:$0xff] %vm1601, %v1801
      %1832 = vst.msk [vmem:[#allocation2 + $0x28] sm:$0xff] %vm1601, %v1802
      %1833 = vst.msk [vmem:[#allocation2 + $0x30] sm:$0xff] %vm1601, %v1803
      %1834 = vst.msk [vmem:[#allocation2 + $0x38] sm:$0xff] %vm1601, %v1804
      %1835 = vst.msk [vmem:[#allocation2 + $0x40] sm:$0xff] %vm1601, %v1805
      %1836 = vst.msk [vmem:[#allocation2 + $0x48] sm:$0xff] %vm1601, %v1806
      %1837 = vst.msk [vmem:[#allocation2 + $0x50] sm:$0xff] %vm1601, %v1807
      %1838 = vst.msk [vmem:[#allocation2 + $0x58] sm:$0xff] %vm1601, %v1808
      %1839 = vst.msk [vmem:[#allocation2 + $0x60] sm:$0xff] %vm1601, %v1809
      %1840 = vst.msk [vmem:[#allocation2 + $0x68] sm:$0xff] %vm1601, %v1810
      %1841 = vst.msk [vmem:[#allocation2 + $0x70] sm:$0xff] %vm1601, %v1811
      %1842 = vst.msk [vmem:[#allocation2 + $0x78] sm:$0xff] %vm1601, %v1812
      %1843 = vst.msk [vmem:[#allocation2 + $0x80] sm:$0xff] %vm1601, %v1813
      %1844 = vst.msk [vmem:[#allocation2 + $0x88] sm:$0xff] %vm1601, %v1814
      %1845 = vst.msk [vmem:[#allocation2 + $0x90] sm:$0xff] %vm1601, %v1815
      %1846 = vst.msk [vmem:[#allocation2 + $0x98] sm:$0xff] %vm1601, %v1816
      %1847 = vst.msk [vmem:[#allocation2 + $0xa0] sm:$0xff] %vm1601, %v1817
      %1848 = vst.msk [vmem:[#allocation2 + $0xa8] sm:$0xff] %vm1601, %v1818
      %1849 = vst.msk [vmem:[#allocation2 + $0xb0] sm:$0xff] %vm1601, %v1819
      %1850 = vst.msk [vmem:[#allocation2 + $0xb8] sm:$0xff] %vm1601, %v1820
      %1851 = vst.msk [vmem:[#allocation2 + $0xc0] sm:$0xff] %vm1601, %v1821
      %1852 = vst.msk [vmem:[#allocation2 + $0xc8] sm:$0xff] %vm1601, %v1822
      %1853 = vst.msk [vmem:[#allocation2 + $0xd0] sm:$0xff] %vm1601, %v1823
      %1854 = vst.msk [vmem:[#allocation2 + $0xd8] sm:$0xff] %vm1601, %v1824
      %1855 = vst.msk [vmem:[#allocation2 + $0xe0] sm:$0xff] %vm1601, %v1825
      %1856 = vst.msk [vmem:[#allocation2 + $0xe8] sm:$0xff] %vm1601, %v1826
      %1857 = vst.msk [vmem:[#allocation2 + $0xf0] sm:$0xff] %vm1601, %v1827
      %1858 = vst.msk [vmem:[#allocation2 + $0xf8] sm:$0xff] %vm1601, %v1828
      %s1859 = scalar_lea.vmem %s3, 96
      %v1860 = vld [vmem:[%s1859] sm:$0xf]
      %v1861 = vld [vmem:[%s1859 + $0x4] sm:$0xf]
      %v1862 = vld [vmem:[%s1859 + $0x8] sm:$0xf]
      %v1863 = vld [vmem:[%s1859 + $0xc] sm:$0xf]
      %v1864 = vld [vmem:[%s1859 + $0x10] sm:$0xf]
      %v1865 = vld [vmem:[%s1859 + $0x14] sm:$0xf]
      %v1866 = vld [vmem:[%s1859 + $0x18] sm:$0xf]
      %v1867 = vld [vmem:[%s1859 + $0x1c] sm:$0xf]
      %v1868 = vld [vmem:[%s1859 + $0x20] sm:$0xf]
      %v1869 = vld [vmem:[%s1859 + $0x24] sm:$0xf]
      %v1870 = vld [vmem:[%s1859 + $0x28] sm:$0xf]
      %v1871 = vld [vmem:[%s1859 + $0x2c] sm:$0xf]
      %v1884 = vunpack.c.l.b16 %v1860
      %v1885 = vunpack.c.l.b16 %v1861
      %v1886 = vunpack.c.l.b16 %v1862
      %v1887 = vunpack.c.l.b16 %v1863
      %v1888 = vunpack.c.l.b16 %v1864
      %v1889 = vunpack.c.l.b16 %v1865
      %v1890 = vunpack.c.l.b16 %v1866
      %v1891 = vunpack.c.l.b16 %v1867
      %v1892 = vunpack.c.l.b16 %v1868
      %v1893 = vunpack.c.l.b16 %v1869
      %v1894 = vunpack.c.l.b16 %v1870
      %v1895 = vunpack.c.l.b16 %v1871
      %v1896 = vpack.c.b16 %v1885, %v1884
      %v1897 = vpack.c.b16 %v1887, %v1886
      %v1898 = vpack.c.b16 %v1889, %v1888
      %v1899 = vpack.c.b16 %v1891, %v1890
      %v1900 = vpack.c.b16 %v1893, %v1892
      %v1901 = vpack.c.b16 %v1895, %v1894
      %1908 = vmatpush.bf16.msra.mxu0 0
      %1909 = vmatpush.bf16.msra.mxu0 0
      %1910 = vmatpush.bf16.msra.mxu0 %v1901
      %1911 = vmatpush.bf16.msra.mxu0 %v1900
      %1912 = vmatpush.bf16.msra.mxu0 %v1899
      %1913 = vmatpush.bf16.msra.mxu0 %v1898
      %1914 = vmatpush.bf16.msra.mxu0 %v1897
      %1915 = vmatpush.bf16.msra.mxu0 %v1896
      %1916 = vmatmul.bf16.gmra.mxu0 %v1480
      %v1917 = vpop.f32.mrf.mxu0
      %v1918 = vpop.f32.mrf.mxu0
      %1919 = vmatmul.bf16.gmra.mxu0 %v1482
      %v1920 = vpop.f32.mrf.mxu0
      %v1921 = vadd.f32 0.0, %v1920
      %v1922 = vpop.f32.mrf.mxu0
      %v1923 = vadd.f32 0.0, %v1922
      %1924 = vmatmul.bf16.gmra.mxu0 %v1484
      %v1925 = vpop.f32.mrf.mxu0
      %v1926 = vadd.f32 0.0, %v1925
      %v1927 = vpop.f32.mrf.mxu0
      %v1928 = vadd.f32 0.0, %v1927
      %1929 = vmatmul.bf16.gmra.mxu0 %v1486
      %v1930 = vpop.f32.mrf.mxu0
      %v1931 = vadd.f32 0.0, %v1930
      %v1932 = vpop.f32.mrf.mxu0
      %v1933 = vadd.f32 0.0, %v1932
      %1934 = vmatmul.bf16.gmra.mxu0 %v1488
      %v1935 = vpop.f32.mrf.mxu0
      %v1936 = vadd.f32 0.0, %v1935
      %v1937 = vpop.f32.mrf.mxu0
      %v1938 = vadd.f32 0.0, %v1937
      %1939 = vmatmul.bf16.gmra.mxu0 %v1490
      %v1940 = vpop.f32.mrf.mxu0
      %v1941 = vadd.f32 0.0, %v1940
      %v1942 = vpop.f32.mrf.mxu0
      %v1943 = vadd.f32 0.0, %v1942
      %1944 = vmatmul.bf16.gmra.mxu0 %v1492
      %v1945 = vpop.f32.mrf.mxu0
      %v1946 = vadd.f32 0.0, %v1945
      %v1947 = vpop.f32.mrf.mxu0
      %v1948 = vadd.f32 0.0, %v1947
      %1949 = vmatmul.bf16.gmra.mxu0 %v1494
      %v1950 = vpop.f32.mrf.mxu0
      %v1951 = vadd.f32 0.0, %v1950
      %v1952 = vpop.f32.mrf.mxu0
      %v1953 = vadd.f32 0.0, %v1952
      %1954 = vmatmul.bf16.gmra.mxu0 %v1496
      %v1955 = vpop.f32.mrf.mxu0
      %v1956 = vadd.f32 0.0, %v1955
      %v1957 = vpop.f32.mrf.mxu0
      %v1958 = vadd.f32 0.0, %v1957
      %1959 = vmatmul.bf16.gmra.mxu0 %v1498
      %v1960 = vpop.f32.mrf.mxu0
      %v1961 = vadd.f32 0.0, %v1960
      %v1962 = vpop.f32.mrf.mxu0
      %v1963 = vadd.f32 0.0, %v1962
      %1964 = vmatmul.bf16.gmra.mxu0 %v1500
      %v1965 = vpop.f32.mrf.mxu0
      %v1966 = vadd.f32 0.0, %v1965
      %v1967 = vpop.f32.mrf.mxu0
      %v1968 = vadd.f32 0.0, %v1967
      %1969 = vmatmul.bf16.gmra.mxu0 %v1502
      %v1970 = vpop.f32.mrf.mxu0
      %v1971 = vadd.f32 0.0, %v1970
      %v1972 = vpop.f32.mrf.mxu0
      %v1973 = vadd.f32 0.0, %v1972
      %1974 = vmatmul.bf16.gmra.mxu0 %v1504
      %v1975 = vpop.f32.mrf.mxu0
      %v1976 = vadd.f32 0.0, %v1975
      %v1977 = vpop.f32.mrf.mxu0
      %v1978 = vadd.f32 0.0, %v1977
      %1979 = vmatmul.bf16.gmra.mxu0 %v1506
      %v1980 = vpop.f32.mrf.mxu0
      %v1981 = vadd.f32 0.0, %v1980
      %v1982 = vpop.f32.mrf.mxu0
      %v1983 = vadd.f32 0.0, %v1982
      %1984 = vmatmul.bf16.gmra.mxu0 %v1508
      %v1985 = vpop.f32.mrf.mxu0
      %v1986 = vadd.f32 0.0, %v1985
      %v1987 = vpop.f32.mrf.mxu0
      %v1988 = vadd.f32 0.0, %v1987
      %1989 = vmatmul.bf16.gmra.mxu0 %v1510
      %v1990 = vpop.f32.mrf.mxu0
      %v1991 = vadd.f32 0.0, %v1990
      %v1992 = vpop.f32.mrf.mxu0
      %v1993 = vadd.f32 0.0, %v1992
      %1994 = vdwg.mxu0
      %v1995 = vld [vmem:[#allocation2] sm:$0xff]
      %v1996 = vld [vmem:[#allocation2 + $0x8] sm:$0xff]
      %v1997 = vld [vmem:[#allocation2 + $0x10] sm:$0xff]
      %v1998 = vld [vmem:[#allocation2 + $0x18] sm:$0xff]
      %v1999 = vld [vmem:[#allocation2 + $0x20] sm:$0xff]
      %v2000 = vld [vmem:[#allocation2 + $0x28] sm:$0xff]
      %v2001 = vld [vmem:[#allocation2 + $0x30] sm:$0xff]
      %v2002 = vld [vmem:[#allocation2 + $0x38] sm:$0xff]
      %v2003 = vld [vmem:[#allocation2 + $0x40] sm:$0xff]
      %v2004 = vld [vmem:[#allocation2 + $0x48] sm:$0xff]
      %v2005 = vld [vmem:[#allocation2 + $0x50] sm:$0xff]
      %v2006 = vld [vmem:[#allocation2 + $0x58] sm:$0xff]
      %v2007 = vld [vmem:[#allocation2 + $0x60] sm:$0xff]
      %v2008 = vld [vmem:[#allocation2 + $0x68] sm:$0xff]
      %v2009 = vld [vmem:[#allocation2 + $0x70] sm:$0xff]
      %v2010 = vld [vmem:[#allocation2 + $0x78] sm:$0xff]
      %v2011 = vld [vmem:[#allocation2 + $0x80] sm:$0xff]
      %v2012 = vld [vmem:[#allocation2 + $0x88] sm:$0xff]
      %v2013 = vld [vmem:[#allocation2 + $0x90] sm:$0xff]
      %v2014 = vld [vmem:[#allocation2 + $0x98] sm:$0xff]
      %v2015 = vld [vmem:[#allocation2 + $0xa0] sm:$0xff]
      %v2016 = vld [vmem:[#allocation2 + $0xa8] sm:$0xff]
      %v2017 = vld [vmem:[#allocation2 + $0xb0] sm:$0xff]
      %v2018 = vld [vmem:[#allocation2 + $0xb8] sm:$0xff]
      %v2019 = vld [vmem:[#allocation2 + $0xc0] sm:$0xff]
      %v2020 = vld [vmem:[#allocation2 + $0xc8] sm:$0xff]
      %v2021 = vld [vmem:[#allocation2 + $0xd0] sm:$0xff]
      %v2022 = vld [vmem:[#allocation2 + $0xd8] sm:$0xff]
      %v2023 = vld [vmem:[#allocation2 + $0xe0] sm:$0xff]
      %v2024 = vld [vmem:[#allocation2 + $0xe8] sm:$0xff]
      %v2025 = vadd.f32 %v1995, %v1921
      %v2026 = vadd.f32 %v1996, %v1923
      %v2027 = vadd.f32 %v1997, %v1926
      %v2028 = vadd.f32 %v1998, %v1928
      %v2029 = vadd.f32 %v1999, %v1931
      %v2030 = vadd.f32 %v2000, %v1933
      %v2031 = vadd.f32 %v2001, %v1936
      %v2032 = vadd.f32 %v2002, %v1938
      %v2033 = vadd.f32 %v2003, %v1941
      %v2034 = vadd.f32 %v2004, %v1943
      %v2035 = vadd.f32 %v2005, %v1946
      %v2036 = vadd.f32 %v2006, %v1948
      %v2037 = vadd.f32 %v2007, %v1951
      %v2038 = vadd.f32 %v2008, %v1953
      %v2039 = vadd.f32 %v2009, %v1956
      %v2040 = vadd.f32 %v2010, %v1958
      %v2041 = vadd.f32 %v2011, %v1961
      %v2042 = vadd.f32 %v2012, %v1963
      %v2043 = vadd.f32 %v2013, %v1966
      %v2044 = vadd.f32 %v2014, %v1968
      %v2045 = vadd.f32 %v2015, %v1971
      %v2046 = vadd.f32 %v2016, %v1973
      %v2047 = vadd.f32 %v2017, %v1976
      %v2048 = vadd.f32 %v2018, %v1978
      %v2049 = vadd.f32 %v2019, %v1981
      %v2050 = vadd.f32 %v2020, %v1983
      %v2051 = vadd.f32 %v2021, %v1986
      %v2052 = vadd.f32 %v2022, %v1988
      %v2053 = vadd.f32 %v2023, %v1991
      %v2054 = vadd.f32 %v2024, %v1993
      %2055 = vst.msk [vmem:[#allocation2] sm:$0xff] %vm1601, %v2025
      %2056 = vst.msk [vmem:[#allocation2 + $0x8] sm:$0xff] %vm1601, %v2026
      %2057 = vst.msk [vmem:[#allocation2 + $0x10] sm:$0xff] %vm1601, %v2027
      %2058 = vst.msk [vmem:[#allocation2 + $0x18] sm:$0xff] %vm1601, %v2028
      %2059 = vst.msk [vmem:[#allocation2 + $0x20] sm:$0xff] %vm1601, %v2029
      %2060 = vst.msk [vmem:[#allocation2 + $0x28] sm:$0xff] %vm1601, %v2030
      %2061 = vst.msk [vmem:[#allocation2 + $0x30] sm:$0xff] %vm1601, %v2031
      %2062 = vst.msk [vmem:[#allocation2 + $0x38] sm:$0xff] %vm1601, %v2032
      %2063 = vst.msk [vmem:[#allocation2 + $0x40] sm:$0xff] %vm1601, %v2033
      %2064 = vst.msk [vmem:[#allocation2 + $0x48] sm:$0xff] %vm1601, %v2034
      %2065 = vst.msk [vmem:[#allocation2 + $0x50] sm:$0xff] %vm1601, %v2035
      %2066 = vst.msk [vmem:[#allocation2 + $0x58] sm:$0xff] %vm1601, %v2036
      %2067 = vst.msk [vmem:[#allocation2 + $0x60] sm:$0xff] %vm1601, %v2037
      %2068 = vst.msk [vmem:[#allocation2 + $0x68] sm:$0xff] %vm1601, %v2038
      %2069 = vst.msk [vmem:[#allocation2 + $0x70] sm:$0xff] %vm1601, %v2039
      %2070 = vst.msk [vmem:[#allocation2 + $0x78] sm:$0xff] %vm1601, %v2040
      %2071 = vst.msk [vmem:[#allocation2 + $0x80] sm:$0xff] %vm1601, %v2041
      %2072 = vst.msk [vmem:[#allocation2 + $0x88] sm:$0xff] %vm1601, %v2042
      %2073 = vst.msk [vmem:[#allocation2 + $0x90] sm:$0xff] %vm1601, %v2043
      %2074 = vst.msk [vmem:[#allocation2 + $0x98] sm:$0xff] %vm1601, %v2044
      %2075 = vst.msk [vmem:[#allocation2 + $0xa0] sm:$0xff] %vm1601, %v2045
      %2076 = vst.msk [vmem:[#allocation2 + $0xa8] sm:$0xff] %vm1601, %v2046
      %2077 = vst.msk [vmem:[#allocation2 + $0xb0] sm:$0xff] %vm1601, %v2047
      %2078 = vst.msk [vmem:[#allocation2 + $0xb8] sm:$0xff] %vm1601, %v2048
      %2079 = vst.msk [vmem:[#allocation2 + $0xc0] sm:$0xff] %vm1601, %v2049
      %2080 = vst.msk [vmem:[#allocation2 + $0xc8] sm:$0xff] %vm1601, %v2050
      %2081 = vst.msk [vmem:[#allocation2 + $0xd0] sm:$0xff] %vm1601, %v2051
      %2082 = vst.msk [vmem:[#allocation2 + $0xd8] sm:$0xff] %vm1601, %v2052
      %2083 = vst.msk [vmem:[#allocation2 + $0xe0] sm:$0xff] %vm1601, %v2053
      %2084 = vst.msk [vmem:[#allocation2 + $0xe8] sm:$0xff] %vm1601, %v2054
      %v2085 = vld [vmem:[#allocation2] sm:$0xff]
      %v2086 = vld [vmem:[#allocation2 + $0x8] sm:$0xff]
      %v2087 = vld [vmem:[#allocation2 + $0x10] sm:$0xff]
      %v2088 = vld [vmem:[#allocation2 + $0x18] sm:$0xff]
      %v2089 = vld [vmem:[#allocation2 + $0x20] sm:$0xff]
      %v2090 = vld [vmem:[#allocation2 + $0x28] sm:$0xff]
      %v2091 = vld [vmem:[#allocation2 + $0x30] sm:$0xff]
      %v2092 = vld [vmem:[#allocation2 + $0x38] sm:$0xff]
      %v2093 = vld [vmem:[#allocation2 + $0x40] sm:$0xff]
      %v2094 = vld [vmem:[#allocation2 + $0x48] sm:$0xff]
      %v2095 = vld [vmem:[#allocation2 + $0x50] sm:$0xff]
      %v2096 = vld [vmem:[#allocation2 + $0x58] sm:$0xff]
      %v2097 = vld [vmem:[#allocation2 + $0x60] sm:$0xff]
      %v2098 = vld [vmem:[#allocation2 + $0x68] sm:$0xff]
      %v2099 = vld [vmem:[#allocation2 + $0x70] sm:$0xff]
      %v2100 = vld [vmem:[#allocation2 + $0x78] sm:$0xff]
      %v2101 = vld [vmem:[#allocation2 + $0x80] sm:$0xff]
      %v2102 = vld [vmem:[#allocation2 + $0x88] sm:$0xff]
      %v2103 = vld [vmem:[#allocation2 + $0x90] sm:$0xff]
      %v2104 = vld [vmem:[#allocation2 + $0x98] sm:$0xff]
      %v2105 = vld [vmem:[#allocation2 + $0xa0] sm:$0xff]
      %v2106 = vld [vmem:[#allocation2 + $0xa8] sm:$0xff]
      %v2107 = vld [vmem:[#allocation2 + $0xb0] sm:$0xff]
      %v2108 = vld [vmem:[#allocation2 + $0xb8] sm:$0xff]
      %v2109 = vld [vmem:[#allocation2 + $0xc0] sm:$0xff]
      %v2110 = vld [vmem:[#allocation2 + $0xc8] sm:$0xff]
      %v2111 = vld [vmem:[#allocation2 + $0xd0] sm:$0xff]
      %v2112 = vld [vmem:[#allocation2 + $0xd8] sm:$0xff]
      %v2113 = vld [vmem:[#allocation2 + $0xe0] sm:$0xff]
      %v2114 = vld [vmem:[#allocation2 + $0xe8] sm:$0xff]
      %v2115 = vld [vmem:[#allocation2 + $0xf0] sm:$0xff]
      %v2116 = vld [vmem:[#allocation2 + $0xf8] sm:$0xff]
      %v2117 = vld [vmem:[%s4] sm:$0x1]
      %v2119 = vperm.slane %v2117, 0
      %v2121 = vmul.f32 %v2085, %v2119
      %v2122 = vmul.f32 %v2086, %v2119
      %v2123 = vmul.f32 %v2087, %v2119
      %v2124 = vmul.f32 %v2088, %v2119
      %v2125 = vmul.f32 %v2089, %v2119
      %v2126 = vmul.f32 %v2090, %v2119
      %v2127 = vmul.f32 %v2091, %v2119
      %v2128 = vmul.f32 %v2092, %v2119
      %v2129 = vmul.f32 %v2093, %v2119
      %v2130 = vmul.f32 %v2094, %v2119
      %v2131 = vmul.f32 %v2095, %v2119
      %v2132 = vmul.f32 %v2096, %v2119
      %v2133 = vmul.f32 %v2097, %v2119
      %v2134 = vmul.f32 %v2098, %v2119
      %v2135 = vmul.f32 %v2099, %v2119
      %v2136 = vmul.f32 %v2100, %v2119
      %v2137 = vmul.f32 %v2101, %v2119
      %v2138 = vmul.f32 %v2102, %v2119
      %v2139 = vmul.f32 %v2103, %v2119
      %v2140 = vmul.f32 %v2104, %v2119
      %v2141 = vmul.f32 %v2105, %v2119
      %v2142 = vmul.f32 %v2106, %v2119
      %v2143 = vmul.f32 %v2107, %v2119
      %v2144 = vmul.f32 %v2108, %v2119
      %v2145 = vmul.f32 %v2109, %v2119
      %v2146 = vmul.f32 %v2110, %v2119
      %v2147 = vmul.f32 %v2111, %v2119
      %v2148 = vmul.f32 %v2112, %v2119
      %v2149 = vmul.f32 %v2113, %v2119
      %v2150 = vmul.f32 %v2114, %v2119
      %v2151 = vmul.f32 %v2115, %v2119
      %v2152 = vmul.f32 %v2116, %v2119
      %v2153 = vld [vmem:[%s5] sm:$0x1]
      %v2155 = vperm.slane %v2153, 0
      %v2157 = vadd.f32 %v2121, %v2155
      %v2158 = vadd.f32 %v2122, %v2155
      %v2159 = vadd.f32 %v2123, %v2155
      %v2160 = vadd.f32 %v2124, %v2155
      %v2161 = vadd.f32 %v2125, %v2155
      %v2162 = vadd.f32 %v2126, %v2155
      %v2163 = vadd.f32 %v2127, %v2155
      %v2164 = vadd.f32 %v2128, %v2155
      %v2165 = vadd.f32 %v2129, %v2155
      %v2166 = vadd.f32 %v2130, %v2155
      %v2167 = vadd.f32 %v2131, %v2155
      %v2168 = vadd.f32 %v2132, %v2155
      %v2169 = vadd.f32 %v2133, %v2155
      %v2170 = vadd.f32 %v2134, %v2155
      %v2171 = vadd.f32 %v2135, %v2155
      %v2172 = vadd.f32 %v2136, %v2155
      %v2173 = vadd.f32 %v2137, %v2155
      %v2174 = vadd.f32 %v2138, %v2155
      %v2175 = vadd.f32 %v2139, %v2155
      %v2176 = vadd.f32 %v2140, %v2155
      %v2177 = vadd.f32 %v2141, %v2155
      %v2178 = vadd.f32 %v2142, %v2155
      %v2179 = vadd.f32 %v2143, %v2155
      %v2180 = vadd.f32 %v2144, %v2155
      %v2181 = vadd.f32 %v2145, %v2155
      %v2182 = vadd.f32 %v2146, %v2155
      %v2183 = vadd.f32 %v2147, %v2155
      %v2184 = vadd.f32 %v2148, %v2155
      %v2185 = vadd.f32 %v2149, %v2155
      %v2186 = vadd.f32 %v2150, %v2155
      %v2187 = vadd.f32 %v2151, %v2155
      %v2188 = vadd.f32 %v2152, %v2155
      %v2189 = vmax.f32 %v2157, 0.0
      %v2190 = vmax.f32 %v2158, 0.0
      %v2191 = vmax.f32 %v2159, 0.0
      %v2192 = vmax.f32 %v2160, 0.0
      %v2193 = vmax.f32 %v2161, 0.0
      %v2194 = vmax.f32 %v2162, 0.0
      %v2195 = vmax.f32 %v2163, 0.0
      %v2196 = vmax.f32 %v2164, 0.0
      %v2197 = vmax.f32 %v2165, 0.0
      %v2198 = vmax.f32 %v2166, 0.0
      %v2199 = vmax.f32 %v2167, 0.0
      %v2200 = vmax.f32 %v2168, 0.0
      %v2201 = vmax.f32 %v2169, 0.0
      %v2202 = vmax.f32 %v2170, 0.0
      %v2203 = vmax.f32 %v2171, 0.0
      %v2204 = vmax.f32 %v2172, 0.0
      %v2205 = vmax.f32 %v2173, 0.0
      %v2206 = vmax.f32 %v2174, 0.0
      %v2207 = vmax.f32 %v2175, 0.0
      %v2208 = vmax.f32 %v2176, 0.0
      %v2209 = vmax.f32 %v2177, 0.0
      %v2210 = vmax.f32 %v2178, 0.0
      %v2211 = vmax.f32 %v2179, 0.0
      %v2212 = vmax.f32 %v2180, 0.0
      %v2213 = vmax.f32 %v2181, 0.0
      %v2214 = vmax.f32 %v2182, 0.0
      %v2215 = vmax.f32 %v2183, 0.0
      %v2216 = vmax.f32 %v2184, 0.0
      %v2217 = vmax.f32 %v2185, 0.0
      %v2218 = vmax.f32 %v2186, 0.0
      %v2219 = vmax.f32 %v2187, 0.0
      %v2220 = vmax.f32 %v2188, 0.0
      %v2221 = vrot.slane %v2189, 7
      %v2222 = vrot.slane %v2190, 7
      %v2223 = vrot.slane %v2191, 7
      %v2224 = vrot.slane %v2192, 7
      %v2225 = vrot.slane %v2193, 7
      %v2226 = vrot.slane %v2194, 7
      %v2227 = vrot.slane %v2195, 7
      %v2228 = vrot.slane %v2196, 7
      %v2229 = vrot.slane %v2197, 7
      %v2230 = vrot.slane %v2198, 7
      %v2231 = vrot.slane %v2199, 7
      %v2232 = vrot.slane %v2200, 7
      %v2233 = vrot.slane %v2201, 7
      %v2234 = vrot.slane %v2202, 7
      %v2235 = vrot.slane %v2203, 7
      %v2236 = vrot.slane %v2204, 7
      %v2237 = vrot.slane %v2205, 7
      %v2238 = vrot.slane %v2206, 7
      %v2239 = vrot.slane %v2207, 7
      %v2240 = vrot.slane %v2208, 7
      %v2241 = vrot.slane %v2209, 7
      %v2242 = vrot.slane %v2210, 7
      %v2243 = vrot.slane %v2211, 7
      %v2244 = vrot.slane %v2212, 7
      %v2245 = vrot.slane %v2213, 7
      %v2246 = vrot.slane %v2214, 7
      %v2247 = vrot.slane %v2215, 7
      %v2248 = vrot.slane %v2216, 7
      %v2249 = vrot.slane %v2217, 7
      %v2250 = vrot.slane %v2218, 7
      %v2251 = vrot.slane %v2219, 7
      %v2252 = vrot.slane %v2220, 7
      %v2253 = vsel %vm658, %v2251, %v2252
      %v2254 = vsel %vm658, %v2250, %v2251
      %v2255 = vsel %vm658, %v2249, %v2250
      %v2256 = vsel %vm658, %v2248, %v2249
      %v2257 = vsel %vm658, %v2247, %v2248
      %v2258 = vsel %vm658, %v2246, %v2247
      %v2259 = vsel %vm658, %v2245, %v2246
      %v2260 = vsel %vm658, %v2244, %v2245
      %v2261 = vsel %vm658, %v2243, %v2244
      %v2262 = vsel %vm658, %v2242, %v2243
      %v2263 = vsel %vm658, %v2241, %v2242
      %v2264 = vsel %vm658, %v2240, %v2241
      %v2265 = vsel %vm658, %v2239, %v2240
      %v2266 = vsel %vm658, %v2238, %v2239
      %v2267 = vsel %vm658, %v2237, %v2238
      %v2268 = vsel %vm658, %v2236, %v2237
      %v2269 = vsel %vm658, %v2235, %v2236
      %v2270 = vsel %vm658, %v2234, %v2235
      %v2271 = vsel %vm658, %v2233, %v2234
      %v2272 = vsel %vm658, %v2232, %v2233
      %v2273 = vsel %vm658, %v2231, %v2232
      %v2274 = vsel %vm658, %v2230, %v2231
      %v2275 = vsel %vm658, %v2229, %v2230
      %v2276 = vsel %vm658, %v2228, %v2229
      %v2277 = vsel %vm658, %v2227, %v2228
      %v2278 = vsel %vm658, %v2226, %v2227
      %v2279 = vsel %vm658, %v2225, %v2226
      %v2280 = vsel %vm658, %v2224, %v2225
      %v2281 = vsel %vm658, %v2223, %v2224
      %v2282 = vsel %vm658, %v2222, %v2223
      %v2283 = vsel %vm658, %v2221, %v2222
      %v2284 = vsel %vm658, %v2252, %v2221
      %v2285 = vsel %vm723, %v2284, 0.0
      %v2286 = vsel %vm724, %v2283, 0.0
      %v2287 = vsel %vm725, %v2282, 0.0
      %v2288 = vsel %vm726, %v2281, 0.0
      %v2289 = vsel %vm727, %v2280, 0.0
      %v2290 = vsel %vm728, %v2279, 0.0
      %v2291 = vsel %vm729, %v2278, 0.0
      %v2292 = vsel %vm730, %v2277, 0.0
      %v2293 = vsel %vm731, %v2276, 0.0
      %v2294 = vsel %vm732, %v2275, 0.0
      %v2295 = vsel %vm733, %v2274, 0.0
      %v2296 = vsel %vm734, %v2273, 0.0
      %v2297 = vsel %vm735, %v2272, 0.0
      %v2298 = vsel %vm736, %v2271, 0.0
      %v2299 = vsel %vm737, %v2270, 0.0
      %v2300 = vsel %vm738, %v2269, 0.0
      %v2301 = vsel %vm739, %v2268, 0.0
      %v2302 = vsel %vm740, %v2267, 0.0
      %v2303 = vsel %vm741, %v2266, 0.0
      %v2304 = vsel %vm742, %v2265, 0.0
      %v2305 = vsel %vm743, %v2264, 0.0
      %v2306 = vsel %vm744, %v2263, 0.0
      %v2307 = vsel %vm745, %v2262, 0.0
      %v2308 = vsel %vm746, %v2261, 0.0
      %v2309 = vsel %vm747, %v2260, 0.0
      %v2310 = vsel %vm748, %v2259, 0.0
      %v2311 = vsel %vm749, %v2258, 0.0
      %v2312 = vsel %vm750, %v2257, 0.0
      %v2313 = vsel %vm751, %v2256, 0.0
      %v2314 = vsel %vm752, %v2255, 0.0
      %v2315 = vsel %vm753, %v2254, 0.0
      %v2316 = vsel %vm754, %v2253, 0.0
      %v2317 = vrot.slane %v2189, 1
      %v2318 = vrot.slane %v2190, 1
      %v2319 = vrot.slane %v2191, 1
      %v2320 = vrot.slane %v2192, 1
      %v2321 = vrot.slane %v2193, 1
      %v2322 = vrot.slane %v2194, 1
      %v2323 = vrot.slane %v2195, 1
      %v2324 = vrot.slane %v2196, 1
      %v2325 = vrot.slane %v2197, 1
      %v2326 = vrot.slane %v2198, 1
      %v2327 = vrot.slane %v2199, 1
      %v2328 = vrot.slane %v2200, 1
      %v2329 = vrot.slane %v2201, 1
      %v2330 = vrot.slane %v2202, 1
      %v2331 = vrot.slane %v2203, 1
      %v2332 = vrot.slane %v2204, 1
      %v2333 = vrot.slane %v2205, 1
      %v2334 = vrot.slane %v2206, 1
      %v2335 = vrot.slane %v2207, 1
      %v2336 = vrot.slane %v2208, 1
      %v2337 = vrot.slane %v2209, 1
      %v2338 = vrot.slane %v2210, 1
      %v2339 = vrot.slane %v2211, 1
      %v2340 = vrot.slane %v2212, 1
      %v2341 = vrot.slane %v2213, 1
      %v2342 = vrot.slane %v2214, 1
      %v2343 = vrot.slane %v2215, 1
      %v2344 = vrot.slane %v2216, 1
      %v2345 = vrot.slane %v2217, 1
      %v2346 = vrot.slane %v2218, 1
      %v2347 = vrot.slane %v2219, 1
      %v2348 = vrot.slane %v2220, 1
      %v2349 = vsel %vm819, %v2347, %v2348
      %v2350 = vsel %vm819, %v2346, %v2347
      %v2351 = vsel %vm819, %v2345, %v2346
      %v2352 = vsel %vm819, %v2344, %v2345
      %v2353 = vsel %vm819, %v2343, %v2344
      %v2354 = vsel %vm819, %v2342, %v2343
      %v2355 = vsel %vm819, %v2341, %v2342
      %v2356 = vsel %vm819, %v2340, %v2341
      %v2357 = vsel %vm819, %v2339, %v2340
      %v2358 = vsel %vm819, %v2338, %v2339
      %v2359 = vsel %vm819, %v2337, %v2338
      %v2360 = vsel %vm819, %v2336, %v2337
      %v2361 = vsel %vm819, %v2335, %v2336
      %v2362 = vsel %vm819, %v2334, %v2335
      %v2363 = vsel %vm819, %v2333, %v2334
      %v2364 = vsel %vm819, %v2332, %v2333
      %v2365 = vsel %vm819, %v2331, %v2332
      %v2366 = vsel %vm819, %v2330, %v2331
      %v2367 = vsel %vm819, %v2329, %v2330
      %v2368 = vsel %vm819, %v2328, %v2329
      %v2369 = vsel %vm819, %v2327, %v2328
      %v2370 = vsel %vm819, %v2326, %v2327
      %v2371 = vsel %vm819, %v2325, %v2326
      %v2372 = vsel %vm819, %v2324, %v2325
      %v2373 = vsel %vm819, %v2323, %v2324
      %v2374 = vsel %vm819, %v2322, %v2323
      %v2375 = vsel %vm819, %v2321, %v2322
      %v2376 = vsel %vm819, %v2320, %v2321
      %v2377 = vsel %vm819, %v2319, %v2320
      %v2378 = vsel %vm819, %v2318, %v2319
      %v2379 = vsel %vm819, %v2317, %v2318
      %v2380 = vsel %vm819, %v2348, %v2317
      %v2381 = vsel %vm884, %v2379, 0.0
      %v2382 = vsel %vm885, %v2378, 0.0
      %v2383 = vsel %vm886, %v2377, 0.0
      %v2384 = vsel %vm887, %v2376, 0.0
      %v2385 = vsel %vm888, %v2375, 0.0
      %v2386 = vsel %vm889, %v2374, 0.0
      %v2387 = vsel %vm890, %v2373, 0.0
      %v2388 = vsel %vm891, %v2372, 0.0
      %v2389 = vsel %vm892, %v2371, 0.0
      %v2390 = vsel %vm893, %v2370, 0.0
      %v2391 = vsel %vm894, %v2369, 0.0
      %v2392 = vsel %vm895, %v2368, 0.0
      %v2393 = vsel %vm896, %v2367, 0.0
      %v2394 = vsel %vm897, %v2366, 0.0
      %v2395 = vsel %vm898, %v2365, 0.0
      %v2396 = vsel %vm899, %v2364, 0.0
      %v2397 = vsel %vm900, %v2363, 0.0
      %v2398 = vsel %vm901, %v2362, 0.0
      %v2399 = vsel %vm902, %v2361, 0.0
      %v2400 = vsel %vm903, %v2360, 0.0
      %v2401 = vsel %vm904, %v2359, 0.0
      %v2402 = vsel %vm905, %v2358, 0.0
      %v2403 = vsel %vm906, %v2357, 0.0
      %v2404 = vsel %vm907, %v2356, 0.0
      %v2405 = vsel %vm908, %v2355, 0.0
      %v2406 = vsel %vm909, %v2354, 0.0
      %v2407 = vsel %vm910, %v2353, 0.0
      %v2408 = vsel %vm911, %v2352, 0.0
      %v2409 = vsel %vm912, %v2351, 0.0
      %v2410 = vsel %vm913, %v2350, 0.0
      %v2411 = vsel %vm914, %v2349, 0.0
      %v2412 = vsel %vm915, %v2380, 0.0
      %v2413 = vpack.c.bf16 %v2285, %v2285
      %v2414 = vpack.c.bf16 %v2286, %v2286
      %v2415 = vpack.c.bf16 %v2287, %v2287
      %v2416 = vpack.c.bf16 %v2288, %v2288
      %v2417 = vpack.c.bf16 %v2289, %v2289
      %v2418 = vpack.c.bf16 %v2290, %v2290
      %v2419 = vpack.c.bf16 %v2291, %v2291
      %v2420 = vpack.c.bf16 %v2292, %v2292
      %v2421 = vpack.c.bf16 %v2293, %v2293
      %v2422 = vpack.c.bf16 %v2294, %v2294
      %v2423 = vpack.c.bf16 %v2295, %v2295
      %v2424 = vpack.c.bf16 %v2296, %v2296
      %v2425 = vpack.c.bf16 %v2297, %v2297
      %v2426 = vpack.c.bf16 %v2298, %v2298
      %v2427 = vpack.c.bf16 %v2299, %v2299
      %v2428 = vpack.c.bf16 %v2300, %v2300
      %v2429 = vpack.c.bf16 %v2301, %v2301
      %v2430 = vpack.c.bf16 %v2302, %v2302
      %v2431 = vpack.c.bf16 %v2303, %v2303
      %v2432 = vpack.c.bf16 %v2304, %v2304
      %v2433 = vpack.c.bf16 %v2305, %v2305
      %v2434 = vpack.c.bf16 %v2306, %v2306
      %v2435 = vpack.c.bf16 %v2307, %v2307
      %v2436 = vpack.c.bf16 %v2308, %v2308
      %v2437 = vpack.c.bf16 %v2309, %v2309
      %v2438 = vpack.c.bf16 %v2310, %v2310
      %v2439 = vpack.c.bf16 %v2311, %v2311
      %v2440 = vpack.c.bf16 %v2312, %v2312
      %v2441 = vpack.c.bf16 %v2313, %v2313
      %v2442 = vpack.c.bf16 %v2314, %v2314
      %v2443 = vpack.c.bf16 %v2315, %v2315
      %v2444 = vpack.c.bf16 %v2316, %v2316
      %v2445 = vpack.c.bf16 %v2189, %v2189
      %v2446 = vpack.c.bf16 %v2190, %v2190
      %v2447 = vpack.c.bf16 %v2191, %v2191
      %v2448 = vpack.c.bf16 %v2192, %v2192
      %v2449 = vpack.c.bf16 %v2193, %v2193
      %v2450 = vpack.c.bf16 %v2194, %v2194
      %v2451 = vpack.c.bf16 %v2195, %v2195
      %v2452 = vpack.c.bf16 %v2196, %v2196
      %v2453 = vpack.c.bf16 %v2197, %v2197
      %v2454 = vpack.c.bf16 %v2198, %v2198
      %v2455 = vpack.c.bf16 %v2199, %v2199
      %v2456 = vpack.c.bf16 %v2200, %v2200
      %v2457 = vpack.c.bf16 %v2201, %v2201
      %v2458 = vpack.c.bf16 %v2202, %v2202
      %v2459 = vpack.c.bf16 %v2203, %v2203
      %v2460 = vpack.c.bf16 %v2204, %v2204
      %v2461 = vpack.c.bf16 %v2205, %v2205
      %v2462 = vpack.c.bf16 %v2206, %v2206
      %v2463 = vpack.c.bf16 %v2207, %v2207
      %v2464 = vpack.c.bf16 %v2208, %v2208
      %v2465 = vpack.c.bf16 %v2209, %v2209
      %v2466 = vpack.c.bf16 %v2210, %v2210
      %v2467 = vpack.c.bf16 %v2211, %v2211
      %v2468 = vpack.c.bf16 %v2212, %v2212
      %v2469 = vpack.c.bf16 %v2213, %v2213
      %v2470 = vpack.c.bf16 %v2214, %v2214
      %v2471 = vpack.c.bf16 %v2215, %v2215
      %v2472 = vpack.c.bf16 %v2216, %v2216
      %v2473 = vpack.c.bf16 %v2217, %v2217
      %v2474 = vpack.c.bf16 %v2218, %v2218
      %v2475 = vpack.c.bf16 %v2219, %v2219
      %v2476 = vpack.c.bf16 %v2220, %v2220
      %v2477 = vpack.c.bf16 %v2381, %v2381
      %v2478 = vpack.c.bf16 %v2382, %v2382
      %v2479 = vpack.c.bf16 %v2383, %v2383
      %v2480 = vpack.c.bf16 %v2384, %v2384
      %v2481 = vpack.c.bf16 %v2385, %v2385
      %v2482 = vpack.c.bf16 %v2386, %v2386
      %v2483 = vpack.c.bf16 %v2387, %v2387
      %v2484 = vpack.c.bf16 %v2388, %v2388
      %v2485 = vpack.c.bf16 %v2389, %v2389
      %v2486 = vpack.c.bf16 %v2390, %v2390
      %v2487 = vpack.c.bf16 %v2391, %v2391
      %v2488 = vpack.c.bf16 %v2392, %v2392
      %v2489 = vpack.c.bf16 %v2393, %v2393
      %v2490 = vpack.c.bf16 %v2394, %v2394
      %v2491 = vpack.c.bf16 %v2395, %v2395
      %v2492 = vpack.c.bf16 %v2396, %v2396
      %v2493 = vpack.c.bf16 %v2397, %v2397
      %v2494 = vpack.c.bf16 %v2398, %v2398
      %v2495 = vpack.c.bf16 %v2399, %v2399
      %v2496 = vpack.c.bf16 %v2400, %v2400
      %v2497 = vpack.c.bf16 %v2401, %v2401
      %v2498 = vpack.c.bf16 %v2402, %v2402
      %v2499 = vpack.c.bf16 %v2403, %v2403
      %v2500 = vpack.c.bf16 %v2404, %v2404
      %v2501 = vpack.c.bf16 %v2405, %v2405
      %v2502 = vpack.c.bf16 %v2406, %v2406
      %v2503 = vpack.c.bf16 %v2407, %v2407
      %v2504 = vpack.c.bf16 %v2408, %v2408
      %v2505 = vpack.c.bf16 %v2409, %v2409
      %v2506 = vpack.c.bf16 %v2410, %v2410
      %v2507 = vpack.c.bf16 %v2411, %v2411
      %v2508 = vpack.c.bf16 %v2412, %v2412
      %v2541 = vunpack.c.l.b16 %v2413
      %v2542 = vunpack.c.l.b16 %v2414
      %v2543 = vunpack.c.l.b16 %v2415
      %v2544 = vunpack.c.l.b16 %v2416
      %v2545 = vunpack.c.l.b16 %v2417
      %v2546 = vunpack.c.l.b16 %v2418
      %v2547 = vunpack.c.l.b16 %v2419
      %v2548 = vunpack.c.l.b16 %v2420
      %v2549 = vunpack.c.l.b16 %v2421
      %v2550 = vunpack.c.l.b16 %v2422
      %v2551 = vunpack.c.l.b16 %v2423
      %v2552 = vunpack.c.l.b16 %v2424
      %v2553 = vunpack.c.l.b16 %v2425
      %v2554 = vunpack.c.l.b16 %v2426
      %v2555 = vunpack.c.l.b16 %v2427
      %v2556 = vunpack.c.l.b16 %v2428
      %v2557 = vunpack.c.l.b16 %v2429
      %v2558 = vunpack.c.l.b16 %v2430
      %v2559 = vunpack.c.l.b16 %v2431
      %v2560 = vunpack.c.l.b16 %v2432
      %v2561 = vunpack.c.l.b16 %v2433
      %v2562 = vunpack.c.l.b16 %v2434
      %v2563 = vunpack.c.l.b16 %v2435
      %v2564 = vunpack.c.l.b16 %v2436
      %v2565 = vunpack.c.l.b16 %v2437
      %v2566 = vunpack.c.l.b16 %v2438
      %v2567 = vunpack.c.l.b16 %v2439
      %v2568 = vunpack.c.l.b16 %v2440
      %v2569 = vunpack.c.l.b16 %v2441
      %v2570 = vunpack.c.l.b16 %v2442
      %v2571 = vunpack.c.l.b16 %v2443
      %v2572 = vunpack.c.l.b16 %v2444
      %v2573 = vpack.c.b16 %v2542, %v2541
      %v2574 = vpack.c.b16 %v2544, %v2543
      %v2575 = vpack.c.b16 %v2546, %v2545
      %v2576 = vpack.c.b16 %v2548, %v2547
      %v2577 = vpack.c.b16 %v2550, %v2549
      %v2578 = vpack.c.b16 %v2552, %v2551
      %v2579 = vpack.c.b16 %v2554, %v2553
      %v2580 = vpack.c.b16 %v2556, %v2555
      %v2581 = vpack.c.b16 %v2558, %v2557
      %v2582 = vpack.c.b16 %v2560, %v2559
      %v2583 = vpack.c.b16 %v2562, %v2561
      %v2584 = vpack.c.b16 %v2564, %v2563
      %v2585 = vpack.c.b16 %v2566, %v2565
      %v2586 = vpack.c.b16 %v2568, %v2567
      %v2587 = vpack.c.b16 %v2570, %v2569
      %v2588 = vpack.c.b16 %v2572, %v2571
      %v2621 = vunpack.c.l.b16 %v2445
      %v2622 = vunpack.c.l.b16 %v2446
      %v2623 = vunpack.c.l.b16 %v2447
      %v2624 = vunpack.c.l.b16 %v2448
      %v2625 = vunpack.c.l.b16 %v2449
      %v2626 = vunpack.c.l.b16 %v2450
      %v2627 = vunpack.c.l.b16 %v2451
      %v2628 = vunpack.c.l.b16 %v2452
      %v2629 = vunpack.c.l.b16 %v2453
      %v2630 = vunpack.c.l.b16 %v2454
      %v2631 = vunpack.c.l.b16 %v2455
      %v2632 = vunpack.c.l.b16 %v2456
      %v2633 = vunpack.c.l.b16 %v2457
      %v2634 = vunpack.c.l.b16 %v2458
      %v2635 = vunpack.c.l.b16 %v2459
      %v2636 = vunpack.c.l.b16 %v2460
      %v2637 = vunpack.c.l.b16 %v2461
      %v2638 = vunpack.c.l.b16 %v2462
      %v2639 = vunpack.c.l.b16 %v2463
      %v2640 = vunpack.c.l.b16 %v2464
      %v2641 = vunpack.c.l.b16 %v2465
      %v2642 = vunpack.c.l.b16 %v2466
      %v2643 = vunpack.c.l.b16 %v2467
      %v2644 = vunpack.c.l.b16 %v2468
      %v2645 = vunpack.c.l.b16 %v2469
      %v2646 = vunpack.c.l.b16 %v2470
      %v2647 = vunpack.c.l.b16 %v2471
      %v2648 = vunpack.c.l.b16 %v2472
      %v2649 = vunpack.c.l.b16 %v2473
      %v2650 = vunpack.c.l.b16 %v2474
      %v2651 = vunpack.c.l.b16 %v2475
      %v2652 = vunpack.c.l.b16 %v2476
      %v2653 = vpack.c.b16 %v2622, %v2621
      %v2654 = vpack.c.b16 %v2624, %v2623
      %v2655 = vpack.c.b16 %v2626, %v2625
      %v2656 = vpack.c.b16 %v2628, %v2627
      %v2657 = vpack.c.b16 %v2630, %v2629
      %v2658 = vpack.c.b16 %v2632, %v2631
      %v2659 = vpack.c.b16 %v2634, %v2633
      %v2660 = vpack.c.b16 %v2636, %v2635
      %v2661 = vpack.c.b16 %v2638, %v2637
      %v2662 = vpack.c.b16 %v2640, %v2639
      %v2663 = vpack.c.b16 %v2642, %v2641
      %v2664 = vpack.c.b16 %v2644, %v2643
      %v2665 = vpack.c.b16 %v2646, %v2645
      %v2666 = vpack.c.b16 %v2648, %v2647
      %v2667 = vpack.c.b16 %v2650, %v2649
      %v2668 = vpack.c.b16 %v2652, %v2651
      %2669 = vrot.lane.b32.xlu0 %v2653, 16
      %v2670 = vpop.permute.xlu0 %2669
      %2671 = vrot.lane.b32.xlu0 %v2654, 16
      %v2672 = vpop.permute.xlu0 %2671
      %2673 = vrot.lane.b32.xlu0 %v2655, 16
      %v2674 = vpop.permute.xlu0 %2673
      %2675 = vrot.lane.b32.xlu0 %v2656, 16
      %v2676 = vpop.permute.xlu0 %2675
      %2677 = vrot.lane.b32.xlu0 %v2657, 16
      %v2678 = vpop.permute.xlu0 %2677
      %2679 = vrot.lane.b32.xlu0 %v2658, 16
      %v2680 = vpop.permute.xlu0 %2679
      %2681 = vrot.lane.b32.xlu0 %v2659, 16
      %v2682 = vpop.permute.xlu0 %2681
      %2683 = vrot.lane.b32.xlu0 %v2660, 16
      %v2684 = vpop.permute.xlu0 %2683
      %2685 = vrot.lane.b32.xlu0 %v2661, 16
      %v2686 = vpop.permute.xlu0 %2685
      %2687 = vrot.lane.b32.xlu0 %v2662, 16
      %v2688 = vpop.permute.xlu0 %2687
      %2689 = vrot.lane.b32.xlu0 %v2663, 16
      %v2690 = vpop.permute.xlu0 %2689
      %2691 = vrot.lane.b32.xlu0 %v2664, 16
      %v2692 = vpop.permute.xlu0 %2691
      %2693 = vrot.lane.b32.xlu0 %v2665, 16
      %v2694 = vpop.permute.xlu0 %2693
      %2695 = vrot.lane.b32.xlu0 %v2666, 16
      %v2696 = vpop.permute.xlu0 %2695
      %2697 = vrot.lane.b32.xlu0 %v2667, 16
      %v2698 = vpop.permute.xlu0 %2697
      %2699 = vrot.lane.b32.xlu0 %v2668, 16
      %v2700 = vpop.permute.xlu0 %2699
      %v2733 = vunpack.c.l.b16 %v2477
      %v2734 = vunpack.c.l.b16 %v2478
      %v2735 = vunpack.c.l.b16 %v2479
      %v2736 = vunpack.c.l.b16 %v2480
      %v2737 = vunpack.c.l.b16 %v2481
      %v2738 = vunpack.c.l.b16 %v2482
      %v2739 = vunpack.c.l.b16 %v2483
      %v2740 = vunpack.c.l.b16 %v2484
      %v2741 = vunpack.c.l.b16 %v2485
      %v2742 = vunpack.c.l.b16 %v2486
      %v2743 = vunpack.c.l.b16 %v2487
      %v2744 = vunpack.c.l.b16 %v2488
      %v2745 = vunpack.c.l.b16 %v2489
      %v2746 = vunpack.c.l.b16 %v2490
      %v2747 = vunpack.c.l.b16 %v2491
      %v2748 = vunpack.c.l.b16 %v2492
      %v2749 = vunpack.c.l.b16 %v2493
      %v2750 = vunpack.c.l.b16 %v2494
      %v2751 = vunpack.c.l.b16 %v2495
      %v2752 = vunpack.c.l.b16 %v2496
      %v2753 = vunpack.c.l.b16 %v2497
      %v2754 = vunpack.c.l.b16 %v2498
      %v2755 = vunpack.c.l.b16 %v2499
      %v2756 = vunpack.c.l.b16 %v2500
      %v2757 = vunpack.c.l.b16 %v2501
      %v2758 = vunpack.c.l.b16 %v2502
      %v2759 = vunpack.c.l.b16 %v2503
      %v2760 = vunpack.c.l.b16 %v2504
      %v2761 = vunpack.c.l.b16 %v2505
      %v2762 = vunpack.c.l.b16 %v2506
      %v2763 = vunpack.c.l.b16 %v2507
      %v2764 = vunpack.c.l.b16 %v2508
      %v2765 = vpack.c.b16 %v2734, %v2733
      %v2766 = vpack.c.b16 %v2736, %v2735
      %v2767 = vpack.c.b16 %v2738, %v2737
      %v2768 = vpack.c.b16 %v2740, %v2739
      %v2769 = vpack.c.b16 %v2742, %v2741
      %v2770 = vpack.c.b16 %v2744, %v2743
      %v2771 = vpack.c.b16 %v2746, %v2745
      %v2772 = vpack.c.b16 %v2748, %v2747
      %v2773 = vpack.c.b16 %v2750, %v2749
      %v2774 = vpack.c.b16 %v2752, %v2751
      %v2775 = vpack.c.b16 %v2754, %v2753
      %v2776 = vpack.c.b16 %v2756, %v2755
      %v2777 = vpack.c.b16 %v2758, %v2757
      %v2778 = vpack.c.b16 %v2760, %v2759
      %v2779 = vpack.c.b16 %v2762, %v2761
      %v2780 = vpack.c.b16 %v2764, %v2763
      %2781 = vrot.lane.b32.xlu0 %v2765, 32
      %v2782 = vpop.permute.xlu0 %2781
      %2783 = vrot.lane.b32.xlu0 %v2766, 32
      %v2784 = vpop.permute.xlu0 %2783
      %2785 = vrot.lane.b32.xlu0 %v2767, 32
      %v2786 = vpop.permute.xlu0 %2785
      %2787 = vrot.lane.b32.xlu0 %v2768, 32
      %v2788 = vpop.permute.xlu0 %2787
      %2789 = vrot.lane.b32.xlu0 %v2769, 32
      %v2790 = vpop.permute.xlu0 %2789
      %2791 = vrot.lane.b32.xlu0 %v2770, 32
      %v2792 = vpop.permute.xlu0 %2791
      %2793 = vrot.lane.b32.xlu0 %v2771, 32
      %v2794 = vpop.permute.xlu0 %2793
      %2795 = vrot.lane.b32.xlu0 %v2772, 32
      %v2796 = vpop.permute.xlu0 %2795
      %2797 = vrot.lane.b32.xlu0 %v2773, 32
      %v2798 = vpop.permute.xlu0 %2797
      %2799 = vrot.lane.b32.xlu0 %v2774, 32
      %v2800 = vpop.permute.xlu0 %2799
      %2801 = vrot.lane.b32.xlu0 %v2775, 32
      %v2802 = vpop.permute.xlu0 %2801
      %2803 = vrot.lane.b32.xlu0 %v2776, 32
      %v2804 = vpop.permute.xlu0 %2803
      %2805 = vrot.lane.b32.xlu0 %v2777, 32
      %v2806 = vpop.permute.xlu0 %2805
      %2807 = vrot.lane.b32.xlu0 %v2778, 32
      %v2808 = vpop.permute.xlu0 %2807
      %2809 = vrot.lane.b32.xlu0 %v2779, 32
      %v2810 = vpop.permute.xlu0 %2809
      %2811 = vrot.lane.b32.xlu0 %v2780, 32
      %v2812 = vpop.permute.xlu0 %2811
      %v2815 = vsel %vm1601, %v2573, %v2670
      %v2818 = vsel %vm1601, %v2574, %v2672
      %v2821 = vsel %vm1601, %v2575, %v2674
      %v2824 = vsel %vm1601, %v2576, %v2676
      %v2827 = vsel %vm1601, %v2577, %v2678
      %v2830 = vsel %vm1601, %v2578, %v2680
      %v2833 = vsel %vm1601, %v2579, %v2682
      %v2836 = vsel %vm1601, %v2580, %v2684
      %v2839 = vsel %vm1601, %v2581, %v2686
      %v2842 = vsel %vm1601, %v2582, %v2688
      %v2845 = vsel %vm1601, %v2583, %v2690
      %v2848 = vsel %vm1601, %v2584, %v2692
      %v2851 = vsel %vm1601, %v2585, %v2694
      %v2854 = vsel %vm1601, %v2586, %v2696
      %v2857 = vsel %vm1601, %v2587, %v2698
      %v2860 = vsel %vm1601, %v2588, %v2700
      %v2862 = vsel %vm1348, %v2815, %v2782
      %v2864 = vsel %vm1348, %v2818, %v2784
      %v2866 = vsel %vm1348, %v2821, %v2786
      %v2868 = vsel %vm1348, %v2824, %v2788
      %v2870 = vsel %vm1348, %v2827, %v2790
      %v2872 = vsel %vm1348, %v2830, %v2792
      %v2874 = vsel %vm1348, %v2833, %v2794
      %v2876 = vsel %vm1348, %v2836, %v2796
      %v2878 = vsel %vm1348, %v2839, %v2798
      %v2880 = vsel %vm1348, %v2842, %v2800
      %v2882 = vsel %vm1348, %v2845, %v2802
      %v2884 = vsel %vm1348, %v2848, %v2804
      %v2886 = vsel %vm1348, %v2851, %v2806
      %v2888 = vsel %vm1348, %v2854, %v2808
      %v2890 = vsel %vm1348, %v2857, %v2810
      %v2892 = vsel %vm1348, %v2860, %v2812
      %s2893 = scalar_lea.vmem %s6, 24
      %v2894 = vld [vmem:[%s2893] sm:$0xf]
      %v2895 = vld [vmem:[%s2893 + $0x4] sm:$0xf]
      %v2896 = vld [vmem:[%s2893 + $0x8] sm:$0xf]
      %v2897 = vld [vmem:[%s2893 + $0xc] sm:$0xf]
      %v2898 = vld [vmem:[%s2893 + $0x10] sm:$0xf]
      %v2899 = vld [vmem:[%s2893 + $0x14] sm:$0xf]
      %v2906 = vunpack.c.l.b16 %v2894
      %v2907 = vunpack.c.l.b16 %v2895
      %v2908 = vunpack.c.l.b16 %v2896
      %v2909 = vunpack.c.l.b16 %v2897
      %v2910 = vunpack.c.l.b16 %v2898
      %v2911 = vunpack.c.l.b16 %v2899
      %v2912 = vpack.c.b16 %v2907, %v2906
      %v2913 = vpack.c.b16 %v2909, %v2908
      %v2914 = vpack.c.b16 %v2911, %v2910
      %vm2918 = vcmask 392192
      %v2919 = vsel %vm2918, %v2862, 0
      %v2921 = vsel %vm2918, %v2864, 0
      %v2923 = vsel %vm2918, %v2866, 0
      %v2925 = vsel %vm2918, %v2868, 0
      %v2927 = vsel %vm2918, %v2870, 0
      %v2929 = vsel %vm2918, %v2872, 0
      %v2931 = vsel %vm2918, %v2874, 0
      %v2933 = vsel %vm2918, %v2876, 0
      %v2935 = vsel %vm2918, %v2878, 0
      %v2937 = vsel %vm2918, %v2880, 0
      %v2939 = vsel %vm2918, %v2882, 0
      %v2941 = vsel %vm2918, %v2884, 0
      %v2943 = vsel %vm2918, %v2886, 0
      %v2945 = vsel %vm2918, %v2888, 0
      %v2947 = vsel %vm2918, %v2890, 0
      %v2949 = vsel %vm2918, %v2892, 0
      %2951 = vmatpush.bf16.msra.mxu0 0
      %2952 = vmatpush.bf16.msra.mxu0 0
      %2953 = vmatpush.bf16.msra.mxu0 0
      %2954 = vmatpush.bf16.msra.mxu0 0
      %2955 = vmatpush.bf16.msra.mxu0 0
      %2956 = vmatpush.bf16.msra.mxu0 %v2914
      %2957 = vmatpush.bf16.msra.mxu0 %v2913
      %2958 = vmatpush.bf16.msra.mxu0 %v2912
      %2959 = vmatmul.bf16.gmra.mxu0 %v2919
      %v2960 = vpop.f32.mrf.mxu0
      %v2961 = vadd.f32 0.0, %v2960
      %v2962 = vpop.f32.mrf.mxu0
      %v2963 = vadd.f32 0.0, %v2962
      %2964 = vmatmul.bf16.gmra.mxu0 %v2921
      %v2965 = vpop.f32.mrf.mxu0
      %v2966 = vadd.f32 0.0, %v2965
      %v2967 = vpop.f32.mrf.mxu0
      %v2968 = vadd.f32 0.0, %v2967
      %2969 = vmatmul.bf16.gmra.mxu0 %v2923
      %v2970 = vpop.f32.mrf.mxu0
      %v2971 = vadd.f32 0.0, %v2970
      %v2972 = vpop.f32.mrf.mxu0
      %v2973 = vadd.f32 0.0, %v2972
      %2974 = vmatmul.bf16.gmra.mxu0 %v2925
      %v2975 = vpop.f32.mrf.mxu0
      %v2976 = vadd.f32 0.0, %v2975
      %v2977 = vpop.f32.mrf.mxu0
      %v2978 = vadd.f32 0.0, %v2977
      %2979 = vmatmul.bf16.gmra.mxu0 %v2927
      %v2980 = vpop.f32.mrf.mxu0
      %v2981 = vadd.f32 0.0, %v2980
      %v2982 = vpop.f32.mrf.mxu0
      %v2983 = vadd.f32 0.0, %v2982
      %2984 = vmatmul.bf16.gmra.mxu0 %v2929
      %v2985 = vpop.f32.mrf.mxu0
      %v2986 = vadd.f32 0.0, %v2985
      %v2987 = vpop.f32.mrf.mxu0
      %v2988 = vadd.f32 0.0, %v2987
      %2989 = vmatmul.bf16.gmra.mxu0 %v2931
      %v2990 = vpop.f32.mrf.mxu0
      %v2991 = vadd.f32 0.0, %v2990
      %v2992 = vpop.f32.mrf.mxu0
      %v2993 = vadd.f32 0.0, %v2992
      %2994 = vmatmul.bf16.gmra.mxu0 %v2933
      %v2995 = vpop.f32.mrf.mxu0
      %v2996 = vadd.f32 0.0, %v2995
      %v2997 = vpop.f32.mrf.mxu0
      %v2998 = vadd.f32 0.0, %v2997
      %2999 = vmatmul.bf16.gmra.mxu0 %v2935
      %v3000 = vpop.f32.mrf.mxu0
      %v3001 = vadd.f32 0.0, %v3000
      %v3002 = vpop.f32.mrf.mxu0
      %v3003 = vadd.f32 0.0, %v3002
      %3004 = vmatmul.bf16.gmra.mxu0 %v2937
      %v3005 = vpop.f32.mrf.mxu0
      %v3006 = vadd.f32 0.0, %v3005
      %v3007 = vpop.f32.mrf.mxu0
      %v3008 = vadd.f32 0.0, %v3007
      %3009 = vmatmul.bf16.gmra.mxu0 %v2939
      %v3010 = vpop.f32.mrf.mxu0
      %v3011 = vadd.f32 0.0, %v3010
      %v3012 = vpop.f32.mrf.mxu0
      %v3013 = vadd.f32 0.0, %v3012
      %3014 = vmatmul.bf16.gmra.mxu0 %v2941
      %v3015 = vpop.f32.mrf.mxu0
      %v3016 = vadd.f32 0.0, %v3015
      %v3017 = vpop.f32.mrf.mxu0
      %v3018 = vadd.f32 0.0, %v3017
      %3019 = vmatmul.bf16.gmra.mxu0 %v2943
      %v3020 = vpop.f32.mrf.mxu0
      %v3021 = vadd.f32 0.0, %v3020
      %v3022 = vpop.f32.mrf.mxu0
      %v3023 = vadd.f32 0.0, %v3022
      %3024 = vmatmul.bf16.gmra.mxu0 %v2945
      %v3025 = vpop.f32.mrf.mxu0
      %v3026 = vadd.f32 0.0, %v3025
      %v3027 = vpop.f32.mrf.mxu0
      %v3028 = vadd.f32 0.0, %v3027
      %3029 = vmatmul.bf16.gmra.mxu0 %v2947
      %v3030 = vpop.f32.mrf.mxu0
      %v3031 = vadd.f32 0.0, %v3030
      %v3032 = vpop.f32.mrf.mxu0
      %v3033 = vadd.f32 0.0, %v3032
      %3034 = vmatmul.bf16.gmra.mxu0 %v2949
      %v3035 = vpop.f32.mrf.mxu0
      %v3036 = vadd.f32 0.0, %v3035
      %v3037 = vpop.f32.mrf.mxu0
      %v3038 = vadd.f32 0.0, %v3037
      %3039 = vdwg.mxu0
      %vm3040 = vcmask 64512
      %3041 = vst.msk [vmem:[#allocation3] sm:$0xff] %vm3040, %v2961
      %3042 = vst.msk [vmem:[#allocation3 + $0x8] sm:$0xff] %vm3040, %v2963
      %3043 = vst.msk [vmem:[#allocation3 + $0x10] sm:$0xff] %vm3040, %v2966
      %3044 = vst.msk [vmem:[#allocation3 + $0x18] sm:$0xff] %vm3040, %v2968
      %3045 = vst.msk [vmem:[#allocation3 + $0x20] sm:$0xff] %vm3040, %v2971
      %3046 = vst.msk [vmem:[#allocation3 + $0x28] sm:$0xff] %vm3040, %v2973
      %3047 = vst.msk [vmem:[#allocation3 + $0x30] sm:$0xff] %vm3040, %v2976
      %3048 = vst.msk [vmem:[#allocation3 + $0x38] sm:$0xff] %vm3040, %v2978
      %3049 = vst.msk [vmem:[#allocation3 + $0x40] sm:$0xff] %vm3040, %v2981
      %3050 = vst.msk [vmem:[#allocation3 + $0x48] sm:$0xff] %vm3040, %v2983
      %3051 = vst.msk [vmem:[#allocation3 + $0x50] sm:$0xff] %vm3040, %v2986
      %3052 = vst.msk [vmem:[#allocation3 + $0x58] sm:$0xff] %vm3040, %v2988
      %3053 = vst.msk [vmem:[#allocation3 + $0x60] sm:$0xff] %vm3040, %v2991
      %3054 = vst.msk [vmem:[#allocation3 + $0x68] sm:$0xff] %vm3040, %v2993
      %3055 = vst.msk [vmem:[#allocation3 + $0x70] sm:$0xff] %vm3040, %v2996
      %3056 = vst.msk [vmem:[#allocation3 + $0x78] sm:$0xff] %vm3040, %v2998
      %3057 = vst.msk [vmem:[#allocation3 + $0x80] sm:$0xff] %vm3040, %v3001
      %3058 = vst.msk [vmem:[#allocation3 + $0x88] sm:$0xff] %vm3040, %v3003
      %3059 = vst.msk [vmem:[#allocation3 + $0x90] sm:$0xff] %vm3040, %v3006
      %3060 = vst.msk [vmem:[#allocation3 + $0x98] sm:$0xff] %vm3040, %v3008
      %3061 = vst.msk [vmem:[#allocation3 + $0xa0] sm:$0xff] %vm3040, %v3011
      %3062 = vst.msk [vmem:[#allocation3 + $0xa8] sm:$0xff] %vm3040, %v3013
      %3063 = vst.msk [vmem:[#allocation3 + $0xb0] sm:$0xff] %vm3040, %v3016
      %3064 = vst.msk [vmem:[#allocation3 + $0xb8] sm:$0xff] %vm3040, %v3018
      %3065 = vst.msk [vmem:[#allocation3 + $0xc0] sm:$0xff] %vm3040, %v3021
      %3066 = vst.msk [vmem:[#allocation3 + $0xc8] sm:$0xff] %vm3040, %v3023
      %3067 = vst.msk [vmem:[#allocation3 + $0xd0] sm:$0xff] %vm3040, %v3026
      %3068 = vst.msk [vmem:[#allocation3 + $0xd8] sm:$0xff] %vm3040, %v3028
      %3069 = vst.msk [vmem:[#allocation3 + $0xe0] sm:$0xff] %vm3040, %v3031
      %3070 = vst.msk [vmem:[#allocation3 + $0xe8] sm:$0xff] %vm3040, %v3033
      %3071 = vst.msk [vmem:[#allocation3 + $0xf0] sm:$0xff] %vm3040, %v3036
      %3072 = vst.msk [vmem:[#allocation3 + $0xf8] sm:$0xff] %vm3040, %v3038
      %v3073 = vld [vmem:[%s6] sm:$0xf]
      %v3074 = vld [vmem:[%s6 + $0x4] sm:$0xf]
      %v3075 = vld [vmem:[%s6 + $0x8] sm:$0xf]
      %v3076 = vld [vmem:[%s6 + $0xc] sm:$0xf]
      %v3077 = vld [vmem:[%s6 + $0x10] sm:$0xf]
      %v3078 = vld [vmem:[%s6 + $0x14] sm:$0xf]
      %v3085 = vunpack.c.l.b16 %v3073
      %v3086 = vunpack.c.l.b16 %v3074
      %v3087 = vunpack.c.l.b16 %v3075
      %v3088 = vunpack.c.l.b16 %v3076
      %v3089 = vunpack.c.l.b16 %v3077
      %v3090 = vunpack.c.l.b16 %v3078
      %v3091 = vpack.c.b16 %v3086, %v3085
      %v3092 = vpack.c.b16 %v3088, %v3087
      %v3093 = vpack.c.b16 %v3090, %v3089
      %3097 = vmatpush.bf16.msra.mxu0 0
      %3098 = vmatpush.bf16.msra.mxu0 0
      %3099 = vmatpush.bf16.msra.mxu0 0
      %3100 = vmatpush.bf16.msra.mxu0 0
      %3101 = vmatpush.bf16.msra.mxu0 0
      %3102 = vmatpush.bf16.msra.mxu0 %v3093
      %3103 = vmatpush.bf16.msra.mxu0 %v3092
      %3104 = vmatpush.bf16.msra.mxu0 %v3091
      %3105 = vmatmul.bf16.gmra.mxu0 %v2919
      %v3106 = vpop.f32.mrf.mxu0
      %v3107 = vadd.f32 0.0, %v3106
      %v3108 = vpop.f32.mrf.mxu0
      %v3109 = vadd.f32 0.0, %v3108
      %3110 = vmatmul.bf16.gmra.mxu0 %v2921
      %v3111 = vpop.f32.mrf.mxu0
      %v3112 = vadd.f32 0.0, %v3111
      %v3113 = vpop.f32.mrf.mxu0
      %v3114 = vadd.f32 0.0, %v3113
      %3115 = vmatmul.bf16.gmra.mxu0 %v2923
      %v3116 = vpop.f32.mrf.mxu0
      %v3117 = vadd.f32 0.0, %v3116
      %v3118 = vpop.f32.mrf.mxu0
      %v3119 = vadd.f32 0.0, %v3118
      %3120 = vmatmul.bf16.gmra.mxu0 %v2925
      %v3121 = vpop.f32.mrf.mxu0
      %v3122 = vadd.f32 0.0, %v3121
      %v3123 = vpop.f32.mrf.mxu0
      %v3124 = vadd.f32 0.0, %v3123
      %3125 = vmatmul.bf16.gmra.mxu0 %v2927
      %v3126 = vpop.f32.mrf.mxu0
      %v3127 = vadd.f32 0.0, %v3126
      %v3128 = vpop.f32.mrf.mxu0
      %v3129 = vadd.f32 0.0, %v3128
      %3130 = vmatmul.bf16.gmra.mxu0 %v2929
      %v3131 = vpop.f32.mrf.mxu0
      %v3132 = vadd.f32 0.0, %v3131
      %v3133 = vpop.f32.mrf.mxu0
      %v3134 = vadd.f32 0.0, %v3133
      %3135 = vmatmul.bf16.gmra.mxu0 %v2931
      %v3136 = vpop.f32.mrf.mxu0
      %v3137 = vadd.f32 0.0, %v3136
      %v3138 = vpop.f32.mrf.mxu0
      %v3139 = vadd.f32 0.0, %v3138
      %3140 = vmatmul.bf16.gmra.mxu0 %v2933
      %v3141 = vpop.f32.mrf.mxu0
      %v3142 = vadd.f32 0.0, %v3141
      %v3143 = vpop.f32.mrf.mxu0
      %v3144 = vadd.f32 0.0, %v3143
      %3145 = vmatmul.bf16.gmra.mxu0 %v2935
      %v3146 = vpop.f32.mrf.mxu0
      %v3147 = vadd.f32 0.0, %v3146
      %v3148 = vpop.f32.mrf.mxu0
      %v3149 = vadd.f32 0.0, %v3148
      %3150 = vmatmul.bf16.gmra.mxu0 %v2937
      %v3151 = vpop.f32.mrf.mxu0
      %v3152 = vadd.f32 0.0, %v3151
      %v3153 = vpop.f32.mrf.mxu0
      %v3154 = vadd.f32 0.0, %v3153
      %3155 = vmatmul.bf16.gmra.mxu0 %v2939
      %v3156 = vpop.f32.mrf.mxu0
      %v3157 = vadd.f32 0.0, %v3156
      %v3158 = vpop.f32.mrf.mxu0
      %v3159 = vadd.f32 0.0, %v3158
      %3160 = vmatmul.bf16.gmra.mxu0 %v2941
      %v3161 = vpop.f32.mrf.mxu0
      %v3162 = vadd.f32 0.0, %v3161
      %v3163 = vpop.f32.mrf.mxu0
      %v3164 = vadd.f32 0.0, %v3163
      %3165 = vmatmul.bf16.gmra.mxu0 %v2943
      %v3166 = vpop.f32.mrf.mxu0
      %v3167 = vadd.f32 0.0, %v3166
      %v3168 = vpop.f32.mrf.mxu0
      %v3169 = vadd.f32 0.0, %v3168
      %3170 = vmatmul.bf16.gmra.mxu0 %v2945
      %v3171 = vpop.f32.mrf.mxu0
      %v3172 = vadd.f32 0.0, %v3171
      %v3173 = vpop.f32.mrf.mxu0
      %v3174 = vadd.f32 0.0, %v3173
      %3175 = vmatmul.bf16.gmra.mxu0 %v2947
      %v3176 = vpop.f32.mrf.mxu0
      %v3177 = vadd.f32 0.0, %v3176
      %v3178 = vpop.f32.mrf.mxu0
      %v3179 = vadd.f32 0.0, %v3178
      %3180 = vmatmul.bf16.gmra.mxu0 %v2949
      %v3181 = vpop.f32.mrf.mxu0
      %v3182 = vpop.f32.mrf.mxu0
      %3183 = vdwg.mxu0
      %v3184 = vld [vmem:[#allocation3 + $0x10] sm:$0xff]
      %v3185 = vld [vmem:[#allocation3 + $0x18] sm:$0xff]
      %v3186 = vld [vmem:[#allocation3 + $0x20] sm:$0xff]
      %v3187 = vld [vmem:[#allocation3 + $0x28] sm:$0xff]
      %v3188 = vld [vmem:[#allocation3 + $0x30] sm:$0xff]
      %v3189 = vld [vmem:[#allocation3 + $0x38] sm:$0xff]
      %v3190 = vld [vmem:[#allocation3 + $0x40] sm:$0xff]
      %v3191 = vld [vmem:[#allocation3 + $0x48] sm:$0xff]
      %v3192 = vld [vmem:[#allocation3 + $0x50] sm:$0xff]
      %v3193 = vld [vmem:[#allocation3 + $0x58] sm:$0xff]
      %v3194 = vld [vmem:[#allocation3 + $0x60] sm:$0xff]
      %v3195 = vld [vmem:[#allocation3 + $0x68] sm:$0xff]
      %v3196 = vld [vmem:[#allocation3 + $0x70] sm:$0xff]
      %v3197 = vld [vmem:[#allocation3 + $0x78] sm:$0xff]
      %v3198 = vld [vmem:[#allocation3 + $0x80] sm:$0xff]
      %v3199 = vld [vmem:[#allocation3 + $0x88] sm:$0xff]
      %v3200 = vld [vmem:[#allocation3 + $0x90] sm:$0xff]
      %v3201 = vld [vmem:[#allocation3 + $0x98] sm:$0xff]
      %v3202 = vld [vmem:[#allocation3 + $0xa0] sm:$0xff]
      %v3203 = vld [vmem:[#allocation3 + $0xa8] sm:$0xff]
      %v3204 = vld [vmem:[#allocation3 + $0xb0] sm:$0xff]
      %v3205 = vld [vmem:[#allocation3 + $0xb8] sm:$0xff]
      %v3206 = vld [vmem:[#allocation3 + $0xc0] sm:$0xff]
      %v3207 = vld [vmem:[#allocation3 + $0xc8] sm:$0xff]
      %v3208 = vld [vmem:[#allocation3 + $0xd0] sm:$0xff]
      %v3209 = vld [vmem:[#allocation3 + $0xd8] sm:$0xff]
      %v3210 = vld [vmem:[#allocation3 + $0xe0] sm:$0xff]
      %v3211 = vld [vmem:[#allocation3 + $0xe8] sm:$0xff]
      %v3212 = vld [vmem:[#allocation3 + $0xf0] sm:$0xff]
      %v3213 = vld [vmem:[#allocation3 + $0xf8] sm:$0xff]
      %v3214 = vadd.f32 %v3184, %v3107
      %v3215 = vadd.f32 %v3185, %v3109
      %v3216 = vadd.f32 %v3186, %v3112
      %v3217 = vadd.f32 %v3187, %v3114
      %v3218 = vadd.f32 %v3188, %v3117
      %v3219 = vadd.f32 %v3189, %v3119
      %v3220 = vadd.f32 %v3190, %v3122
      %v3221 = vadd.f32 %v3191, %v3124
      %v3222 = vadd.f32 %v3192, %v3127
      %v3223 = vadd.f32 %v3193, %v3129
      %v3224 = vadd.f32 %v3194, %v3132
      %v3225 = vadd.f32 %v3195, %v3134
      %v3226 = vadd.f32 %v3196, %v3137
      %v3227 = vadd.f32 %v3197, %v3139
      %v3228 = vadd.f32 %v3198, %v3142
      %v3229 = vadd.f32 %v3199, %v3144
      %v3230 = vadd.f32 %v3200, %v3147
      %v3231 = vadd.f32 %v3201, %v3149
      %v3232 = vadd.f32 %v3202, %v3152
      %v3233 = vadd.f32 %v3203, %v3154
      %v3234 = vadd.f32 %v3204, %v3157
      %v3235 = vadd.f32 %v3205, %v3159
      %v3236 = vadd.f32 %v3206, %v3162
      %v3237 = vadd.f32 %v3207, %v3164
      %v3238 = vadd.f32 %v3208, %v3167
      %v3239 = vadd.f32 %v3209, %v3169
      %v3240 = vadd.f32 %v3210, %v3172
      %v3241 = vadd.f32 %v3211, %v3174
      %v3242 = vadd.f32 %v3212, %v3177
      %v3243 = vadd.f32 %v3213, %v3179
      %3244 = vst.msk [vmem:[#allocation3 + $0x10] sm:$0xff] %vm3040, %v3214
      %3245 = vst.msk [vmem:[#allocation3 + $0x18] sm:$0xff] %vm3040, %v3215
      %3246 = vst.msk [vmem:[#allocation3 + $0x20] sm:$0xff] %vm3040, %v3216
      %3247 = vst.msk [vmem:[#allocation3 + $0x28] sm:$0xff] %vm3040, %v3217
      %3248 = vst.msk [vmem:[#allocation3 + $0x30] sm:$0xff] %vm3040, %v3218
      %3249 = vst.msk [vmem:[#allocation3 + $0x38] sm:$0xff] %vm3040, %v3219
      %3250 = vst.msk [vmem:[#allocation3 + $0x40] sm:$0xff] %vm3040, %v3220
      %3251 = vst.msk [vmem:[#allocation3 + $0x48] sm:$0xff] %vm3040, %v3221
      %3252 = vst.msk [vmem:[#allocation3 + $0x50] sm:$0xff] %vm3040, %v3222
      %3253 = vst.msk [vmem:[#allocation3 + $0x58] sm:$0xff] %vm3040, %v3223
      %3254 = vst.msk [vmem:[#allocation3 + $0x60] sm:$0xff] %vm3040, %v3224
      %3255 = vst.msk [vmem:[#allocation3 + $0x68] sm:$0xff] %vm3040, %v3225
      %3256 = vst.msk [vmem:[#allocation3 + $0x70] sm:$0xff] %vm3040, %v3226
      %3257 = vst.msk [vmem:[#allocation3 + $0x78] sm:$0xff] %vm3040, %v3227
      %3258 = vst.msk [vmem:[#allocation3 + $0x80] sm:$0xff] %vm3040, %v3228
      %3259 = vst.msk [vmem:[#allocation3 + $0x88] sm:$0xff] %vm3040, %v3229
      %3260 = vst.msk [vmem:[#allocation3 + $0x90] sm:$0xff] %vm3040, %v3230
      %3261 = vst.msk [vmem:[#allocation3 + $0x98] sm:$0xff] %vm3040, %v3231
      %3262 = vst.msk [vmem:[#allocation3 + $0xa0] sm:$0xff] %vm3040, %v3232
      %3263 = vst.msk [vmem:[#allocation3 + $0xa8] sm:$0xff] %vm3040, %v3233
      %3264 = vst.msk [vmem:[#allocation3 + $0xb0] sm:$0xff] %vm3040, %v3234
      %3265 = vst.msk [vmem:[#allocation3 + $0xb8] sm:$0xff] %vm3040, %v3235
      %3266 = vst.msk [vmem:[#allocation3 + $0xc0] sm:$0xff] %vm3040, %v3236
      %3267 = vst.msk [vmem:[#allocation3 + $0xc8] sm:$0xff] %vm3040, %v3237
      %3268 = vst.msk [vmem:[#allocation3 + $0xd0] sm:$0xff] %vm3040, %v3238
      %3269 = vst.msk [vmem:[#allocation3 + $0xd8] sm:$0xff] %vm3040, %v3239
      %3270 = vst.msk [vmem:[#allocation3 + $0xe0] sm:$0xff] %vm3040, %v3240
      %3271 = vst.msk [vmem:[#allocation3 + $0xe8] sm:$0xff] %vm3040, %v3241
      %3272 = vst.msk [vmem:[#allocation3 + $0xf0] sm:$0xff] %vm3040, %v3242
      %3273 = vst.msk [vmem:[#allocation3 + $0xf8] sm:$0xff] %vm3040, %v3243
      %s3274 = scalar_lea.vmem %s6, 48
      %v3275 = vld [vmem:[%s3274] sm:$0xf]
      %v3276 = vld [vmem:[%s3274 + $0x4] sm:$0xf]
      %v3277 = vld [vmem:[%s3274 + $0x8] sm:$0xf]
      %v3278 = vld [vmem:[%s3274 + $0xc] sm:$0xf]
      %v3279 = vld [vmem:[%s3274 + $0x10] sm:$0xf]
      %v3280 = vld [vmem:[%s3274 + $0x14] sm:$0xf]
      %v3287 = vunpack.c.l.b16 %v3275
      %v3288 = vunpack.c.l.b16 %v3276
      %v3289 = vunpack.c.l.b16 %v3277
      %v3290 = vunpack.c.l.b16 %v3278
      %v3291 = vunpack.c.l.b16 %v3279
      %v3292 = vunpack.c.l.b16 %v3280
      %v3293 = vpack.c.b16 %v3288, %v3287
      %v3294 = vpack.c.b16 %v3290, %v3289
      %v3295 = vpack.c.b16 %v3292, %v3291
      %3299 = vmatpush.bf16.msra.mxu0 0
      %3300 = vmatpush.bf16.msra.mxu0 0
      %3301 = vmatpush.bf16.msra.mxu0 0
      %3302 = vmatpush.bf16.msra.mxu0 0
      %3303 = vmatpush.bf16.msra.mxu0 0
      %3304 = vmatpush.bf16.msra.mxu0 %v3295
      %3305 = vmatpush.bf16.msra.mxu0 %v3294
      %3306 = vmatpush.bf16.msra.mxu0 %v3293
      %3307 = vmatmul.bf16.gmra.mxu0 %v2919
      %v3308 = vpop.f32.mrf.mxu0
      %v3309 = vpop.f32.mrf.mxu0
      %3310 = vmatmul.bf16.gmra.mxu0 %v2921
      %v3311 = vpop.f32.mrf.mxu0
      %v3312 = vadd.f32 0.0, %v3311
      %v3313 = vpop.f32.mrf.mxu0
      %v3314 = vadd.f32 0.0, %v3313
      %3315 = vmatmul.bf16.gmra.mxu0 %v2923
      %v3316 = vpop.f32.mrf.mxu0
      %v3317 = vadd.f32 0.0, %v3316
      %v3318 = vpop.f32.mrf.mxu0
      %v3319 = vadd.f32 0.0, %v3318
      %3320 = vmatmul.bf16.gmra.mxu0 %v2925
      %v3321 = vpop.f32.mrf.mxu0
      %v3322 = vadd.f32 0.0, %v3321
      %v3323 = vpop.f32.mrf.mxu0
      %v3324 = vadd.f32 0.0, %v3323
      %3325 = vmatmul.bf16.gmra.mxu0 %v2927
      %v3326 = vpop.f32.mrf.mxu0
      %v3327 = vadd.f32 0.0, %v3326
      %v3328 = vpop.f32.mrf.mxu0
      %v3329 = vadd.f32 0.0, %v3328
      %3330 = vmatmul.bf16.gmra.mxu0 %v2929
      %v3331 = vpop.f32.mrf.mxu0
      %v3332 = vadd.f32 0.0, %v3331
      %v3333 = vpop.f32.mrf.mxu0
      %v3334 = vadd.f32 0.0, %v3333
      %3335 = vmatmul.bf16.gmra.mxu0 %v2931
      %v3336 = vpop.f32.mrf.mxu0
      %v3337 = vadd.f32 0.0, %v3336
      %v3338 = vpop.f32.mrf.mxu0
      %v3339 = vadd.f32 0.0, %v3338
      %3340 = vmatmul.bf16.gmra.mxu0 %v2933
      %v3341 = vpop.f32.mrf.mxu0
      %v3342 = vadd.f32 0.0, %v3341
      %v3343 = vpop.f32.mrf.mxu0
      %v3344 = vadd.f32 0.0, %v3343
      %3345 = vmatmul.bf16.gmra.mxu0 %v2935
      %v3346 = vpop.f32.mrf.mxu0
      %v3347 = vadd.f32 0.0, %v3346
      %v3348 = vpop.f32.mrf.mxu0
      %v3349 = vadd.f32 0.0, %v3348
      %3350 = vmatmul.bf16.gmra.mxu0 %v2937
      %v3351 = vpop.f32.mrf.mxu0
      %v3352 = vadd.f32 0.0, %v3351
      %v3353 = vpop.f32.mrf.mxu0
      %v3354 = vadd.f32 0.0, %v3353
      %3355 = vmatmul.bf16.gmra.mxu0 %v2939
      %v3356 = vpop.f32.mrf.mxu0
      %v3357 = vadd.f32 0.0, %v3356
      %v3358 = vpop.f32.mrf.mxu0
      %v3359 = vadd.f32 0.0, %v3358
      %3360 = vmatmul.bf16.gmra.mxu0 %v2941
      %v3361 = vpop.f32.mrf.mxu0
      %v3362 = vadd.f32 0.0, %v3361
      %v3363 = vpop.f32.mrf.mxu0
      %v3364 = vadd.f32 0.0, %v3363
      %3365 = vmatmul.bf16.gmra.mxu0 %v2943
      %v3366 = vpop.f32.mrf.mxu0
      %v3367 = vadd.f32 0.0, %v3366
      %v3368 = vpop.f32.mrf.mxu0
      %v3369 = vadd.f32 0.0, %v3368
      %3370 = vmatmul.bf16.gmra.mxu0 %v2945
      %v3371 = vpop.f32.mrf.mxu0
      %v3372 = vadd.f32 0.0, %v3371
      %v3373 = vpop.f32.mrf.mxu0
      %v3374 = vadd.f32 0.0, %v3373
      %3375 = vmatmul.bf16.gmra.mxu0 %v2947
      %v3376 = vpop.f32.mrf.mxu0
      %v3377 = vadd.f32 0.0, %v3376
      %v3378 = vpop.f32.mrf.mxu0
      %v3379 = vadd.f32 0.0, %v3378
      %3380 = vmatmul.bf16.gmra.mxu0 %v2949
      %v3381 = vpop.f32.mrf.mxu0
      %v3382 = vadd.f32 0.0, %v3381
      %v3383 = vpop.f32.mrf.mxu0
      %v3384 = vadd.f32 0.0, %v3383
      %3385 = vdwg.mxu0
      %v3386 = vld [vmem:[#allocation3] sm:$0xff]
      %v3387 = vld [vmem:[#allocation3 + $0x8] sm:$0xff]
      %v3388 = vld [vmem:[#allocation3 + $0x10] sm:$0xff]
      %v3389 = vld [vmem:[#allocation3 + $0x18] sm:$0xff]
      %v3390 = vld [vmem:[#allocation3 + $0x20] sm:$0xff]
      %v3391 = vld [vmem:[#allocation3 + $0x28] sm:$0xff]
      %v3392 = vld [vmem:[#allocation3 + $0x30] sm:$0xff]
      %v3393 = vld [vmem:[#allocation3 + $0x38] sm:$0xff]
      %v3394 = vld [vmem:[#allocation3 + $0x40] sm:$0xff]
      %v3395 = vld [vmem:[#allocation3 + $0x48] sm:$0xff]
      %v3396 = vld [vmem:[#allocation3 + $0x50] sm:$0xff]
      %v3397 = vld [vmem:[#allocation3 + $0x58] sm:$0xff]
      %v3398 = vld [vmem:[#allocation3 + $0x60] sm:$0xff]
      %v3399 = vld [vmem:[#allocation3 + $0x68] sm:$0xff]
      %v3400 = vld [vmem:[#allocation3 + $0x70] sm:$0xff]
      %v3401 = vld [vmem:[#allocation3 + $0x78] sm:$0xff]
      %v3402 = vld [vmem:[#allocation3 + $0x80] sm:$0xff]
      %v3403 = vld [vmem:[#allocation3 + $0x88] sm:$0xff]
      %v3404 = vld [vmem:[#allocation3 + $0x90] sm:$0xff]
      %v3405 = vld [vmem:[#allocation3 + $0x98] sm:$0xff]
      %v3406 = vld [vmem:[#allocation3 + $0xa0] sm:$0xff]
      %v3407 = vld [vmem:[#allocation3 + $0xa8] sm:$0xff]
      %v3408 = vld [vmem:[#allocation3 + $0xb0] sm:$0xff]
      %v3409 = vld [vmem:[#allocation3 + $0xb8] sm:$0xff]
      %v3410 = vld [vmem:[#allocation3 + $0xc0] sm:$0xff]
      %v3411 = vld [vmem:[#allocation3 + $0xc8] sm:$0xff]
      %v3412 = vld [vmem:[#allocation3 + $0xd0] sm:$0xff]
      %v3413 = vld [vmem:[#allocation3 + $0xd8] sm:$0xff]
      %v3414 = vld [vmem:[#allocation3 + $0xe0] sm:$0xff]
      %v3415 = vld [vmem:[#allocation3 + $0xe8] sm:$0xff]
      %v3416 = vadd.f32 %v3386, %v3312
      %v3417 = vadd.f32 %v3387, %v3314
      %v3418 = vadd.f32 %v3388, %v3317
      %v3419 = vadd.f32 %v3389, %v3319
      %v3420 = vadd.f32 %v3390, %v3322
      %v3421 = vadd.f32 %v3391, %v3324
      %v3422 = vadd.f32 %v3392, %v3327
      %v3423 = vadd.f32 %v3393, %v3329
      %v3424 = vadd.f32 %v3394, %v3332
      %v3425 = vadd.f32 %v3395, %v3334
      %v3426 = vadd.f32 %v3396, %v3337
      %v3427 = vadd.f32 %v3397, %v3339
      %v3428 = vadd.f32 %v3398, %v3342
      %v3429 = vadd.f32 %v3399, %v3344
      %v3430 = vadd.f32 %v3400, %v3347
      %v3431 = vadd.f32 %v3401, %v3349
      %v3432 = vadd.f32 %v3402, %v3352
      %v3433 = vadd.f32 %v3403, %v3354
      %v3434 = vadd.f32 %v3404, %v3357
      %v3435 = vadd.f32 %v3405, %v3359
      %v3436 = vadd.f32 %v3406, %v3362
      %v3437 = vadd.f32 %v3407, %v3364
      %v3438 = vadd.f32 %v3408, %v3367
      %v3439 = vadd.f32 %v3409, %v3369
      %v3440 = vadd.f32 %v3410, %v3372
      %v3441 = vadd.f32 %v3411, %v3374
      %v3442 = vadd.f32 %v3412, %v3377
      %v3443 = vadd.f32 %v3413, %v3379
      %v3444 = vadd.f32 %v3414, %v3382
      %v3445 = vadd.f32 %v3415, %v3384
      %3446 = vst.msk [vmem:[#allocation3] sm:$0xff] %vm3040, %v3416
      %3447 = vst.msk [vmem:[#allocation3 + $0x8] sm:$0xff] %vm3040, %v3417
      %3448 = vst.msk [vmem:[#allocation3 + $0x10] sm:$0xff] %vm3040, %v3418
      %3449 = vst.msk [vmem:[#allocation3 + $0x18] sm:$0xff] %vm3040, %v3419
      %3450 = vst.msk [vmem:[#allocation3 + $0x20] sm:$0xff] %vm3040, %v3420
      %3451 = vst.msk [vmem:[#allocation3 + $0x28] sm:$0xff] %vm3040, %v3421
      %3452 = vst.msk [vmem:[#allocation3 + $0x30] sm:$0xff] %vm3040, %v3422
      %3453 = vst.msk [vmem:[#allocation3 + $0x38] sm:$0xff] %vm3040, %v3423
      %3454 = vst.msk [vmem:[#allocation3 + $0x40] sm:$0xff] %vm3040, %v3424
      %3455 = vst.msk [vmem:[#allocation3 + $0x48] sm:$0xff] %vm3040, %v3425
      %3456 = vst.msk [vmem:[#allocation3 + $0x50] sm:$0xff] %vm3040, %v3426
      %3457 = vst.msk [vmem:[#allocation3 + $0x58] sm:$0xff] %vm3040, %v3427
      %3458 = vst.msk [vmem:[#allocation3 + $0x60] sm:$0xff] %vm3040, %v3428
      %3459 = vst.msk [vmem:[#allocation3 + $0x68] sm:$0xff] %vm3040, %v3429
      %3460 = vst.msk [vmem:[#allocation3 + $0x70] sm:$0xff] %vm3040, %v3430
      %3461 = vst.msk [vmem:[#allocation3 + $0x78] sm:$0xff] %vm3040, %v3431
      %3462 = vst.msk [vmem:[#allocation3 + $0x80] sm:$0xff] %vm3040, %v3432
      %3463 = vst.msk [vmem:[#allocation3 + $0x88] sm:$0xff] %vm3040, %v3433
      %3464 = vst.msk [vmem:[#allocation3 + $0x90] sm:$0xff] %vm3040, %v3434
      %3465 = vst.msk [vmem:[#allocation3 + $0x98] sm:$0xff] %vm3040, %v3435
      %3466 = vst.msk [vmem:[#allocation3 + $0xa0] sm:$0xff] %vm3040, %v3436
      %3467 = vst.msk [vmem:[#allocation3 + $0xa8] sm:$0xff] %vm3040, %v3437
      %3468 = vst.msk [vmem:[#allocation3 + $0xb0] sm:$0xff] %vm3040, %v3438
      %3469 = vst.msk [vmem:[#allocation3 + $0xb8] sm:$0xff] %vm3040, %v3439
      %3470 = vst.msk [vmem:[#allocation3 + $0xc0] sm:$0xff] %vm3040, %v3440
      %3471 = vst.msk [vmem:[#allocation3 + $0xc8] sm:$0xff] %vm3040, %v3441
      %3472 = vst.msk [vmem:[#allocation3 + $0xd0] sm:$0xff] %vm3040, %v3442
      %3473 = vst.msk [vmem:[#allocation3 + $0xd8] sm:$0xff] %vm3040, %v3443
      %3474 = vst.msk [vmem:[#allocation3 + $0xe0] sm:$0xff] %vm3040, %v3444
      %3475 = vst.msk [vmem:[#allocation3 + $0xe8] sm:$0xff] %vm3040, %v3445
      %v3476 = vld [vmem:[#allocation3] sm:$0xff]
      %v3477 = vld [vmem:[#allocation3 + $0x8] sm:$0xff]
      %v3478 = vld [vmem:[#allocation3 + $0x10] sm:$0xff]
      %v3479 = vld [vmem:[#allocation3 + $0x18] sm:$0xff]
      %v3480 = vld [vmem:[#allocation3 + $0x20] sm:$0xff]
      %v3481 = vld [vmem:[#allocation3 + $0x28] sm:$0xff]
      %v3482 = vld [vmem:[#allocation3 + $0x30] sm:$0xff]
      %v3483 = vld [vmem:[#allocation3 + $0x38] sm:$0xff]
      %v3484 = vld [vmem:[#allocation3 + $0x40] sm:$0xff]
      %v3485 = vld [vmem:[#allocation3 + $0x48] sm:$0xff]
      %v3486 = vld [vmem:[#allocation3 + $0x50] sm:$0xff]
      %v3487 = vld [vmem:[#allocation3 + $0x58] sm:$0xff]
      %v3488 = vld [vmem:[#allocation3 + $0x60] sm:$0xff]
      %v3489 = vld [vmem:[#allocation3 + $0x68] sm:$0xff]
      %v3490 = vld [vmem:[#allocation3 + $0x70] sm:$0xff]
      %v3491 = vld [vmem:[#allocation3 + $0x78] sm:$0xff]
      %v3492 = vld [vmem:[#allocation3 + $0x80] sm:$0xff]
      %v3493 = vld [vmem:[#allocation3 + $0x88] sm:$0xff]
      %v3494 = vld [vmem:[#allocation3 + $0x90] sm:$0xff]
      %v3495 = vld [vmem:[#allocation3 + $0x98] sm:$0xff]
      %v3496 = vld [vmem:[#allocation3 + $0xa0] sm:$0xff]
      %v3497 = vld [vmem:[#allocation3 + $0xa8] sm:$0xff]
      %v3498 = vld [vmem:[#allocation3 + $0xb0] sm:$0xff]
      %v3499 = vld [vmem:[#allocation3 + $0xb8] sm:$0xff]
      %v3500 = vld [vmem:[#allocation3 + $0xc0] sm:$0xff]
      %v3501 = vld [vmem:[#allocation3 + $0xc8] sm:$0xff]
      %v3502 = vld [vmem:[#allocation3 + $0xd0] sm:$0xff]
      %v3503 = vld [vmem:[#allocation3 + $0xd8] sm:$0xff]
      %v3504 = vld [vmem:[#allocation3 + $0xe0] sm:$0xff]
      %v3505 = vld [vmem:[#allocation3 + $0xe8] sm:$0xff]
      %v3506 = vld [vmem:[#allocation3 + $0xf0] sm:$0xff]
      %v3507 = vld [vmem:[#allocation3 + $0xf8] sm:$0xff]
      %v3508 = vld [vmem:[%s7] sm:$0x1]
      %v3510 = vperm.slane %v3508, 0
      %v3512 = vmul.f32 %v3476, %v3510
      %v3513 = vmul.f32 %v3477, %v3510
      %v3514 = vmul.f32 %v3478, %v3510
      %v3515 = vmul.f32 %v3479, %v3510
      %v3516 = vmul.f32 %v3480, %v3510
      %v3517 = vmul.f32 %v3481, %v3510
      %v3518 = vmul.f32 %v3482, %v3510
      %v3519 = vmul.f32 %v3483, %v3510
      %v3520 = vmul.f32 %v3484, %v3510
      %v3521 = vmul.f32 %v3485, %v3510
      %v3522 = vmul.f32 %v3486, %v3510
      %v3523 = vmul.f32 %v3487, %v3510
      %v3524 = vmul.f32 %v3488, %v3510
      %v3525 = vmul.f32 %v3489, %v3510
      %v3526 = vmul.f32 %v3490, %v3510
      %v3527 = vmul.f32 %v3491, %v3510
      %v3528 = vmul.f32 %v3492, %v3510
      %v3529 = vmul.f32 %v3493, %v3510
      %v3530 = vmul.f32 %v3494, %v3510
      %v3531 = vmul.f32 %v3495, %v3510
      %v3532 = vmul.f32 %v3496, %v3510
      %v3533 = vmul.f32 %v3497, %v3510
      %v3534 = vmul.f32 %v3498, %v3510
      %v3535 = vmul.f32 %v3499, %v3510
      %v3536 = vmul.f32 %v3500, %v3510
      %v3537 = vmul.f32 %v3501, %v3510
      %v3538 = vmul.f32 %v3502, %v3510
      %v3539 = vmul.f32 %v3503, %v3510
      %v3540 = vmul.f32 %v3504, %v3510
      %v3541 = vmul.f32 %v3505, %v3510
      %v3542 = vmul.f32 %v3506, %v3510
      %v3543 = vmul.f32 %v3507, %v3510
      %v3544 = vld [vmem:[%s8] sm:$0x1]
      %v3546 = vperm.slane %v3544, 0
      %v3548 = vadd.f32 %v3512, %v3546
      %v3549 = vadd.f32 %v3513, %v3546
      %v3550 = vadd.f32 %v3514, %v3546
      %v3551 = vadd.f32 %v3515, %v3546
      %v3552 = vadd.f32 %v3516, %v3546
      %v3553 = vadd.f32 %v3517, %v3546
      %v3554 = vadd.f32 %v3518, %v3546
      %v3555 = vadd.f32 %v3519, %v3546
      %v3556 = vadd.f32 %v3520, %v3546
      %v3557 = vadd.f32 %v3521, %v3546
      %v3558 = vadd.f32 %v3522, %v3546
      %v3559 = vadd.f32 %v3523, %v3546
      %v3560 = vadd.f32 %v3524, %v3546
      %v3561 = vadd.f32 %v3525, %v3546
      %v3562 = vadd.f32 %v3526, %v3546
      %v3563 = vadd.f32 %v3527, %v3546
      %v3564 = vadd.f32 %v3528, %v3546
      %v3565 = vadd.f32 %v3529, %v3546
      %v3566 = vadd.f32 %v3530, %v3546
      %v3567 = vadd.f32 %v3531, %v3546
      %v3568 = vadd.f32 %v3532, %v3546
      %v3569 = vadd.f32 %v3533, %v3546
      %v3570 = vadd.f32 %v3534, %v3546
      %v3571 = vadd.f32 %v3535, %v3546
      %v3572 = vadd.f32 %v3536, %v3546
      %v3573 = vadd.f32 %v3537, %v3546
      %v3574 = vadd.f32 %v3538, %v3546
      %v3575 = vadd.f32 %v3539, %v3546
      %v3576 = vadd.f32 %v3540, %v3546
      %v3577 = vadd.f32 %v3541, %v3546
      %v3578 = vadd.f32 %v3542, %v3546
      %v3579 = vadd.f32 %v3543, %v3546
      %v3580 = vmax.f32 %v3548, 0.0
      %v3581 = vmax.f32 %v3549, 0.0
      %v3582 = vmax.f32 %v3550, 0.0
      %v3583 = vmax.f32 %v3551, 0.0
      %v3584 = vmax.f32 %v3552, 0.0
      %v3585 = vmax.f32 %v3553, 0.0
      %v3586 = vmax.f32 %v3554, 0.0
      %v3587 = vmax.f32 %v3555, 0.0
      %v3588 = vmax.f32 %v3556, 0.0
      %v3589 = vmax.f32 %v3557, 0.0
      %v3590 = vmax.f32 %v3558, 0.0
      %v3591 = vmax.f32 %v3559, 0.0
      %v3592 = vmax.f32 %v3560, 0.0
      %v3593 = vmax.f32 %v3561, 0.0
      %v3594 = vmax.f32 %v3562, 0.0
      %v3595 = vmax.f32 %v3563, 0.0
      %v3596 = vmax.f32 %v3564, 0.0
      %v3597 = vmax.f32 %v3565, 0.0
      %v3598 = vmax.f32 %v3566, 0.0
      %v3599 = vmax.f32 %v3567, 0.0
      %v3600 = vmax.f32 %v3568, 0.0
      %v3601 = vmax.f32 %v3569, 0.0
      %v3602 = vmax.f32 %v3570, 0.0
      %v3603 = vmax.f32 %v3571, 0.0
      %v3604 = vmax.f32 %v3572, 0.0
      %v3605 = vmax.f32 %v3573, 0.0
      %v3606 = vmax.f32 %v3574, 0.0
      %v3607 = vmax.f32 %v3575, 0.0
      %v3608 = vmax.f32 %v3576, 0.0
      %v3609 = vmax.f32 %v3577, 0.0
      %v3610 = vmax.f32 %v3578, 0.0
      %v3611 = vmax.f32 %v3579, 0.0
      %v3612 = vrot.slane %v3580, 7
      %v3613 = vrot.slane %v3581, 7
      %v3614 = vrot.slane %v3582, 7
      %v3615 = vrot.slane %v3583, 7
      %v3616 = vrot.slane %v3584, 7
      %v3617 = vrot.slane %v3585, 7
      %v3618 = vrot.slane %v3586, 7
      %v3619 = vrot.slane %v3587, 7
      %v3620 = vrot.slane %v3588, 7
      %v3621 = vrot.slane %v3589, 7
      %v3622 = vrot.slane %v3590, 7
      %v3623 = vrot.slane %v3591, 7
      %v3624 = vrot.slane %v3592, 7
      %v3625 = vrot.slane %v3593, 7
      %v3626 = vrot.slane %v3594, 7
      %v3627 = vrot.slane %v3595, 7
      %v3628 = vrot.slane %v3596, 7
      %v3629 = vrot.slane %v3597, 7
      %v3630 = vrot.slane %v3598, 7
      %v3631 = vrot.slane %v3599, 7
      %v3632 = vrot.slane %v3600, 7
      %v3633 = vrot.slane %v3601, 7
      %v3634 = vrot.slane %v3602, 7
      %v3635 = vrot.slane %v3603, 7
      %v3636 = vrot.slane %v3604, 7
      %v3637 = vrot.slane %v3605, 7
      %v3638 = vrot.slane %v3606, 7
      %v3639 = vrot.slane %v3607, 7
      %v3640 = vrot.slane %v3608, 7
      %v3641 = vrot.slane %v3609, 7
      %v3642 = vrot.slane %v3610, 7
      %v3643 = vrot.slane %v3611, 7
      %v3644 = vsel %vm658, %v3642, %v3643
      %v3645 = vsel %vm658, %v3641, %v3642
      %v3646 = vsel %vm658, %v3640, %v3641
      %v3647 = vsel %vm658, %v3639, %v3640
      %v3648 = vsel %vm658, %v3638, %v3639
      %v3649 = vsel %vm658, %v3637, %v3638
      %v3650 = vsel %vm658, %v3636, %v3637
      %v3651 = vsel %vm658, %v3635, %v3636
      %v3652 = vsel %vm658, %v3634, %v3635
      %v3653 = vsel %vm658, %v3633, %v3634
      %v3654 = vsel %vm658, %v3632, %v3633
      %v3655 = vsel %vm658, %v3631, %v3632
      %v3656 = vsel %vm658, %v3630, %v3631
      %v3657 = vsel %vm658, %v3629, %v3630
      %v3658 = vsel %vm658, %v3628, %v3629
      %v3659 = vsel %vm658, %v3627, %v3628
      %v3660 = vsel %vm658, %v3626, %v3627
      %v3661 = vsel %vm658, %v3625, %v3626
      %v3662 = vsel %vm658, %v3624, %v3625
      %v3663 = vsel %vm658, %v3623, %v3624
      %v3664 = vsel %vm658, %v3622, %v3623
      %v3665 = vsel %vm658, %v3621, %v3622
      %v3666 = vsel %vm658, %v3620, %v3621
      %v3667 = vsel %vm658, %v3619, %v3620
      %v3668 = vsel %vm658, %v3618, %v3619
      %v3669 = vsel %vm658, %v3617, %v3618
      %v3670 = vsel %vm658, %v3616, %v3617
      %v3671 = vsel %vm658, %v3615, %v3616
      %v3672 = vsel %vm658, %v3614, %v3615
      %v3673 = vsel %vm658, %v3613, %v3614
      %v3674 = vsel %vm658, %v3612, %v3613
      %v3675 = vsel %vm658, %v3643, %v3612
      %v3676 = vsel %vm723, %v3675, 0.0
      %v3677 = vsel %vm724, %v3674, 0.0
      %v3678 = vsel %vm725, %v3673, 0.0
      %v3679 = vsel %vm726, %v3672, 0.0
      %v3680 = vsel %vm727, %v3671, 0.0
      %v3681 = vsel %vm728, %v3670, 0.0
      %v3682 = vsel %vm729, %v3669, 0.0
      %v3683 = vsel %vm730, %v3668, 0.0
      %v3684 = vsel %vm731, %v3667, 0.0
      %v3685 = vsel %vm732, %v3666, 0.0
      %v3686 = vsel %vm733, %v3665, 0.0
      %v3687 = vsel %vm734, %v3664, 0.0
      %v3688 = vsel %vm735, %v3663, 0.0
      %v3689 = vsel %vm736, %v3662, 0.0
      %v3690 = vsel %vm737, %v3661, 0.0
      %v3691 = vsel %vm738, %v3660, 0.0
      %v3692 = vsel %vm739, %v3659, 0.0
      %v3693 = vsel %vm740, %v3658, 0.0
      %v3694 = vsel %vm741, %v3657, 0.0
      %v3695 = vsel %vm742, %v3656, 0.0
      %v3696 = vsel %vm743, %v3655, 0.0
      %v3697 = vsel %vm744, %v3654, 0.0
      %v3698 = vsel %vm745, %v3653, 0.0
      %v3699 = vsel %vm746, %v3652, 0.0
      %v3700 = vsel %vm747, %v3651, 0.0
      %v3701 = vsel %vm748, %v3650, 0.0
      %v3702 = vsel %vm749, %v3649, 0.0
      %v3703 = vsel %vm750, %v3648, 0.0
      %v3704 = vsel %vm751, %v3647, 0.0
      %v3705 = vsel %vm752, %v3646, 0.0
      %v3706 = vsel %vm753, %v3645, 0.0
      %v3707 = vsel %vm754, %v3644, 0.0
      %v3708 = vrot.slane %v3580, 1
      %v3709 = vrot.slane %v3581, 1
      %v3710 = vrot.slane %v3582, 1
      %v3711 = vrot.slane %v3583, 1
      %v3712 = vrot.slane %v3584, 1
      %v3713 = vrot.slane %v3585, 1
      %v3714 = vrot.slane %v3586, 1
      %v3715 = vrot.slane %v3587, 1
      %v3716 = vrot.slane %v3588, 1
      %v3717 = vrot.slane %v3589, 1
      %v3718 = vrot.slane %v3590, 1
      %v3719 = vrot.slane %v3591, 1
      %v3720 = vrot.slane %v3592, 1
      %v3721 = vrot.slane %v3593, 1
      %v3722 = vrot.slane %v3594, 1
      %v3723 = vrot.slane %v3595, 1
      %v3724 = vrot.slane %v3596, 1
      %v3725 = vrot.slane %v3597, 1
      %v3726 = vrot.slane %v3598, 1
      %v3727 = vrot.slane %v3599, 1
      %v3728 = vrot.slane %v3600, 1
      %v3729 = vrot.slane %v3601, 1
      %v3730 = vrot.slane %v3602, 1
      %v3731 = vrot.slane %v3603, 1
      %v3732 = vrot.slane %v3604, 1
      %v3733 = vrot.slane %v3605, 1
      %v3734 = vrot.slane %v3606, 1
      %v3735 = vrot.slane %v3607, 1
      %v3736 = vrot.slane %v3608, 1
      %v3737 = vrot.slane %v3609, 1
      %v3738 = vrot.slane %v3610, 1
      %v3739 = vrot.slane %v3611, 1
      %v3740 = vsel %vm819, %v3738, %v3739
      %v3741 = vsel %vm819, %v3737, %v3738
      %v3742 = vsel %vm819, %v3736, %v3737
      %v3743 = vsel %vm819, %v3735, %v3736
      %v3744 = vsel %vm819, %v3734, %v3735
      %v3745 = vsel %vm819, %v3733, %v3734
      %v3746 = vsel %vm819, %v3732, %v3733
      %v3747 = vsel %vm819, %v3731, %v3732
      %v3748 = vsel %vm819, %v3730, %v3731
      %v3749 = vsel %vm819, %v3729, %v3730
      %v3750 = vsel %vm819, %v3728, %v3729
      %v3751 = vsel %vm819, %v3727, %v3728
      %v3752 = vsel %vm819, %v3726, %v3727
      %v3753 = vsel %vm819, %v3725, %v3726
      %v3754 = vsel %vm819, %v3724, %v3725
      %v3755 = vsel %vm819, %v3723, %v3724
      %v3756 = vsel %vm819, %v3722, %v3723
      %v3757 = vsel %vm819, %v3721, %v3722
      %v3758 = vsel %vm819, %v3720, %v3721
      %v3759 = vsel %vm819, %v3719, %v3720
      %v3760 = vsel %vm819, %v3718, %v3719
      %v3761 = vsel %vm819, %v3717, %v3718
      %v3762 = vsel %vm819, %v3716, %v3717
      %v3763 = vsel %vm819, %v3715, %v3716
      %v3764 = vsel %vm819, %v3714, %v3715
      %v3765 = vsel %vm819, %v3713, %v3714
      %v3766 = vsel %vm819, %v3712, %v3713
      %v3767 = vsel %vm819, %v3711, %v3712
      %v3768 = vsel %vm819, %v3710, %v3711
      %v3769 = vsel %vm819, %v3709, %v3710
      %v3770 = vsel %vm819, %v3708, %v3709
      %v3771 = vsel %vm819, %v3739, %v3708
      %v3772 = vsel %vm884, %v3770, 0.0
      %v3773 = vsel %vm885, %v3769, 0.0
      %v3774 = vsel %vm886, %v3768, 0.0
      %v3775 = vsel %vm887, %v3767, 0.0
      %v3776 = vsel %vm888, %v3766, 0.0
      %v3777 = vsel %vm889, %v3765, 0.0
      %v3778 = vsel %vm890, %v3764, 0.0
      %v3779 = vsel %vm891, %v3763, 0.0
      %v3780 = vsel %vm892, %v3762, 0.0
      %v3781 = vsel %vm893, %v3761, 0.0
      %v3782 = vsel %vm894, %v3760, 0.0
      %v3783 = vsel %vm895, %v3759, 0.0
      %v3784 = vsel %vm896, %v3758, 0.0
      %v3785 = vsel %vm897, %v3757, 0.0
      %v3786 = vsel %vm898, %v3756, 0.0
      %v3787 = vsel %vm899, %v3755, 0.0
      %v3788 = vsel %vm900, %v3754, 0.0
      %v3789 = vsel %vm901, %v3753, 0.0
      %v3790 = vsel %vm902, %v3752, 0.0
      %v3791 = vsel %vm903, %v3751, 0.0
      %v3792 = vsel %vm904, %v3750, 0.0
      %v3793 = vsel %vm905, %v3749, 0.0
      %v3794 = vsel %vm906, %v3748, 0.0
      %v3795 = vsel %vm907, %v3747, 0.0
      %v3796 = vsel %vm908, %v3746, 0.0
      %v3797 = vsel %vm909, %v3745, 0.0
      %v3798 = vsel %vm910, %v3744, 0.0
      %v3799 = vsel %vm911, %v3743, 0.0
      %v3800 = vsel %vm912, %v3742, 0.0
      %v3801 = vsel %vm913, %v3741, 0.0
      %v3802 = vsel %vm914, %v3740, 0.0
      %v3803 = vsel %vm915, %v3771, 0.0
      %v3804 = vpack.c.bf16 %v3676, %v3676
      %v3805 = vpack.c.bf16 %v3677, %v3677
      %v3806 = vpack.c.bf16 %v3678, %v3678
      %v3807 = vpack.c.bf16 %v3679, %v3679
      %v3808 = vpack.c.bf16 %v3680, %v3680
      %v3809 = vpack.c.bf16 %v3681, %v3681
      %v3810 = vpack.c.bf16 %v3682, %v3682
      %v3811 = vpack.c.bf16 %v3683, %v3683
      %v3812 = vpack.c.bf16 %v3684, %v3684
      %v3813 = vpack.c.bf16 %v3685, %v3685
      %v3814 = vpack.c.bf16 %v3686, %v3686
      %v3815 = vpack.c.bf16 %v3687, %v3687
      %v3816 = vpack.c.bf16 %v3688, %v3688
      %v3817 = vpack.c.bf16 %v3689, %v3689
      %v3818 = vpack.c.bf16 %v3690, %v3690
      %v3819 = vpack.c.bf16 %v3691, %v3691
      %v3820 = vpack.c.bf16 %v3692, %v3692
      %v3821 = vpack.c.bf16 %v3693, %v3693
      %v3822 = vpack.c.bf16 %v3694, %v3694
      %v3823 = vpack.c.bf16 %v3695, %v3695
      %v3824 = vpack.c.bf16 %v3696, %v3696
      %v3825 = vpack.c.bf16 %v3697, %v3697
      %v3826 = vpack.c.bf16 %v3698, %v3698
      %v3827 = vpack.c.bf16 %v3699, %v3699
      %v3828 = vpack.c.bf16 %v3700, %v3700
      %v3829 = vpack.c.bf16 %v3701, %v3701
      %v3830 = vpack.c.bf16 %v3702, %v3702
      %v3831 = vpack.c.bf16 %v3703, %v3703
      %v3832 = vpack.c.bf16 %v3704, %v3704
      %v3833 = vpack.c.bf16 %v3705, %v3705
      %v3834 = vpack.c.bf16 %v3706, %v3706
      %v3835 = vpack.c.bf16 %v3707, %v3707
      %v3836 = vpack.c.bf16 %v3580, %v3580
      %v3837 = vpack.c.bf16 %v3581, %v3581
      %v3838 = vpack.c.bf16 %v3582, %v3582
      %v3839 = vpack.c.bf16 %v3583, %v3583
      %v3840 = vpack.c.bf16 %v3584, %v3584
      %v3841 = vpack.c.bf16 %v3585, %v3585
      %v3842 = vpack.c.bf16 %v3586, %v3586
      %v3843 = vpack.c.bf16 %v3587, %v3587
      %v3844 = vpack.c.bf16 %v3588, %v3588
      %v3845 = vpack.c.bf16 %v3589, %v3589
      %v3846 = vpack.c.bf16 %v3590, %v3590
      %v3847 = vpack.c.bf16 %v3591, %v3591
      %v3848 = vpack.c.bf16 %v3592, %v3592
      %v3849 = vpack.c.bf16 %v3593, %v3593
      %v3850 = vpack.c.bf16 %v3594, %v3594
      %v3851 = vpack.c.bf16 %v3595, %v3595
      %v3852 = vpack.c.bf16 %v3596, %v3596
      %v3853 = vpack.c.bf16 %v3597, %v3597
      %v3854 = vpack.c.bf16 %v3598, %v3598
      %v3855 = vpack.c.bf16 %v3599, %v3599
      %v3856 = vpack.c.bf16 %v3600, %v3600
      %v3857 = vpack.c.bf16 %v3601, %v3601
      %v3858 = vpack.c.bf16 %v3602, %v3602
      %v3859 = vpack.c.bf16 %v3603, %v3603
      %v3860 = vpack.c.bf16 %v3604, %v3604
      %v3861 = vpack.c.bf16 %v3605, %v3605
      %v3862 = vpack.c.bf16 %v3606, %v3606
      %v3863 = vpack.c.bf16 %v3607, %v3607
      %v3864 = vpack.c.bf16 %v3608, %v3608
      %v3865 = vpack.c.bf16 %v3609, %v3609
      %v3866 = vpack.c.bf16 %v3610, %v3610
      %v3867 = vpack.c.bf16 %v3611, %v3611
      %v3868 = vpack.c.bf16 %v3772, %v3772
      %v3869 = vpack.c.bf16 %v3773, %v3773
      %v3870 = vpack.c.bf16 %v3774, %v3774
      %v3871 = vpack.c.bf16 %v3775, %v3775
      %v3872 = vpack.c.bf16 %v3776, %v3776
      %v3873 = vpack.c.bf16 %v3777, %v3777
      %v3874 = vpack.c.bf16 %v3778, %v3778
      %v3875 = vpack.c.bf16 %v3779, %v3779
      %v3876 = vpack.c.bf16 %v3780, %v3780
      %v3877 = vpack.c.bf16 %v3781, %v3781
      %v3878 = vpack.c.bf16 %v3782, %v3782
      %v3879 = vpack.c.bf16 %v3783, %v3783
      %v3880 = vpack.c.bf16 %v3784, %v3784
      %v3881 = vpack.c.bf16 %v3785, %v3785
      %v3882 = vpack.c.bf16 %v3786, %v3786
      %v3883 = vpack.c.bf16 %v3787, %v3787
      %v3884 = vpack.c.bf16 %v3788, %v3788
      %v3885 = vpack.c.bf16 %v3789, %v3789
      %v3886 = vpack.c.bf16 %v3790, %v3790
      %v3887 = vpack.c.bf16 %v3791, %v3791
      %v3888 = vpack.c.bf16 %v3792, %v3792
      %v3889 = vpack.c.bf16 %v3793, %v3793
      %v3890 = vpack.c.bf16 %v3794, %v3794
      %v3891 = vpack.c.bf16 %v3795, %v3795
      %v3892 = vpack.c.bf16 %v3796, %v3796
      %v3893 = vpack.c.bf16 %v3797, %v3797
      %v3894 = vpack.c.bf16 %v3798, %v3798
      %v3895 = vpack.c.bf16 %v3799, %v3799
      %v3896 = vpack.c.bf16 %v3800, %v3800
      %v3897 = vpack.c.bf16 %v3801, %v3801
      %v3898 = vpack.c.bf16 %v3802, %v3802
      %v3899 = vpack.c.bf16 %v3803, %v3803
      %v3932 = vunpack.c.l.b16 %v3804
      %v3933 = vunpack.c.l.b16 %v3805
      %v3934 = vunpack.c.l.b16 %v3806
      %v3935 = vunpack.c.l.b16 %v3807
      %v3936 = vunpack.c.l.b16 %v3808
      %v3937 = vunpack.c.l.b16 %v3809
      %v3938 = vunpack.c.l.b16 %v3810
      %v3939 = vunpack.c.l.b16 %v3811
      %v3940 = vunpack.c.l.b16 %v3812
      %v3941 = vunpack.c.l.b16 %v3813
      %v3942 = vunpack.c.l.b16 %v3814
      %v3943 = vunpack.c.l.b16 %v3815
      %v3944 = vunpack.c.l.b16 %v3816
      %v3945 = vunpack.c.l.b16 %v3817
      %v3946 = vunpack.c.l.b16 %v3818
      %v3947 = vunpack.c.l.b16 %v3819
      %v3948 = vunpack.c.l.b16 %v3820
      %v3949 = vunpack.c.l.b16 %v3821
      %v3950 = vunpack.c.l.b16 %v3822
      %v3951 = vunpack.c.l.b16 %v3823
      %v3952 = vunpack.c.l.b16 %v3824
      %v3953 = vunpack.c.l.b16 %v3825
      %v3954 = vunpack.c.l.b16 %v3826
      %v3955 = vunpack.c.l.b16 %v3827
      %v3956 = vunpack.c.l.b16 %v3828
      %v3957 = vunpack.c.l.b16 %v3829
      %v3958 = vunpack.c.l.b16 %v3830
      %v3959 = vunpack.c.l.b16 %v3831
      %v3960 = vunpack.c.l.b16 %v3832
      %v3961 = vunpack.c.l.b16 %v3833
      %v3962 = vunpack.c.l.b16 %v3834
      %v3963 = vunpack.c.l.b16 %v3835
      %v3964 = vpack.c.b16 %v3933, %v3932
      %v3965 = vpack.c.b16 %v3935, %v3934
      %v3966 = vpack.c.b16 %v3937, %v3936
      %v3967 = vpack.c.b16 %v3939, %v3938
      %v3968 = vpack.c.b16 %v3941, %v3940
      %v3969 = vpack.c.b16 %v3943, %v3942
      %v3970 = vpack.c.b16 %v3945, %v3944
      %v3971 = vpack.c.b16 %v3947, %v3946
      %v3972 = vpack.c.b16 %v3949, %v3948
      %v3973 = vpack.c.b16 %v3951, %v3950
      %v3974 = vpack.c.b16 %v3953, %v3952
      %v3975 = vpack.c.b16 %v3955, %v3954
      %v3976 = vpack.c.b16 %v3957, %v3956
      %v3977 = vpack.c.b16 %v3959, %v3958
      %v3978 = vpack.c.b16 %v3961, %v3960
      %v3979 = vpack.c.b16 %v3963, %v3962
      %v4012 = vunpack.c.l.b16 %v3836
      %v4013 = vunpack.c.l.b16 %v3837
      %v4014 = vunpack.c.l.b16 %v3838
      %v4015 = vunpack.c.l.b16 %v3839
      %v4016 = vunpack.c.l.b16 %v3840
      %v4017 = vunpack.c.l.b16 %v3841
      %v4018 = vunpack.c.l.b16 %v3842
      %v4019 = vunpack.c.l.b16 %v3843
      %v4020 = vunpack.c.l.b16 %v3844
      %v4021 = vunpack.c.l.b16 %v3845
      %v4022 = vunpack.c.l.b16 %v3846
      %v4023 = vunpack.c.l.b16 %v3847
      %v4024 = vunpack.c.l.b16 %v3848
      %v4025 = vunpack.c.l.b16 %v3849
      %v4026 = vunpack.c.l.b16 %v3850
      %v4027 = vunpack.c.l.b16 %v3851
      %v4028 = vunpack.c.l.b16 %v3852
      %v4029 = vunpack.c.l.b16 %v3853
      %v4030 = vunpack.c.l.b16 %v3854
      %v4031 = vunpack.c.l.b16 %v3855
      %v4032 = vunpack.c.l.b16 %v3856
      %v4033 = vunpack.c.l.b16 %v3857
      %v4034 = vunpack.c.l.b16 %v3858
      %v4035 = vunpack.c.l.b16 %v3859
      %v4036 = vunpack.c.l.b16 %v3860
      %v4037 = vunpack.c.l.b16 %v3861
      %v4038 = vunpack.c.l.b16 %v3862
      %v4039 = vunpack.c.l.b16 %v3863
      %v4040 = vunpack.c.l.b16 %v3864
      %v4041 = vunpack.c.l.b16 %v3865
      %v4042 = vunpack.c.l.b16 %v3866
      %v4043 = vunpack.c.l.b16 %v3867
      %v4044 = vpack.c.b16 %v4013, %v4012
      %v4045 = vpack.c.b16 %v4015, %v4014
      %v4046 = vpack.c.b16 %v4017, %v4016
      %v4047 = vpack.c.b16 %v4019, %v4018
      %v4048 = vpack.c.b16 %v4021, %v4020
      %v4049 = vpack.c.b16 %v4023, %v4022
      %v4050 = vpack.c.b16 %v4025, %v4024
      %v4051 = vpack.c.b16 %v4027, %v4026
      %v4052 = vpack.c.b16 %v4029, %v4028
      %v4053 = vpack.c.b16 %v4031, %v4030
      %v4054 = vpack.c.b16 %v4033, %v4032
      %v4055 = vpack.c.b16 %v4035, %v4034
      %v4056 = vpack.c.b16 %v4037, %v4036
      %v4057 = vpack.c.b16 %v4039, %v4038
      %v4058 = vpack.c.b16 %v4041, %v4040
      %v4059 = vpack.c.b16 %v4043, %v4042
      %4060 = vrot.lane.b32.xlu0 %v4044, 8
      %v4061 = vpop.permute.xlu0 %4060
      %4062 = vrot.lane.b32.xlu0 %v4045, 8
      %v4063 = vpop.permute.xlu0 %4062
      %4064 = vrot.lane.b32.xlu0 %v4046, 8
      %v4065 = vpop.permute.xlu0 %4064
      %4066 = vrot.lane.b32.xlu0 %v4047, 8
      %v4067 = vpop.permute.xlu0 %4066
      %4068 = vrot.lane.b32.xlu0 %v4048, 8
      %v4069 = vpop.permute.xlu0 %4068
      %4070 = vrot.lane.b32.xlu0 %v4049, 8
      %v4071 = vpop.permute.xlu0 %4070
      %4072 = vrot.lane.b32.xlu0 %v4050, 8
      %v4073 = vpop.permute.xlu0 %4072
      %4074 = vrot.lane.b32.xlu0 %v4051, 8
      %v4075 = vpop.permute.xlu0 %4074
      %4076 = vrot.lane.b32.xlu0 %v4052, 8
      %v4077 = vpop.permute.xlu0 %4076
      %4078 = vrot.lane.b32.xlu0 %v4053, 8
      %v4079 = vpop.permute.xlu0 %4078
      %4080 = vrot.lane.b32.xlu0 %v4054, 8
      %v4081 = vpop.permute.xlu0 %4080
      %4082 = vrot.lane.b32.xlu0 %v4055, 8
      %v4083 = vpop.permute.xlu0 %4082
      %4084 = vrot.lane.b32.xlu0 %v4056, 8
      %v4085 = vpop.permute.xlu0 %4084
      %4086 = vrot.lane.b32.xlu0 %v4057, 8
      %v4087 = vpop.permute.xlu0 %4086
      %4088 = vrot.lane.b32.xlu0 %v4058, 8
      %v4089 = vpop.permute.xlu0 %4088
      %4090 = vrot.lane.b32.xlu0 %v4059, 8
      %v4091 = vpop.permute.xlu0 %4090
      %v4124 = vunpack.c.l.b16 %v3868
      %v4125 = vunpack.c.l.b16 %v3869
      %v4126 = vunpack.c.l.b16 %v3870
      %v4127 = vunpack.c.l.b16 %v3871
      %v4128 = vunpack.c.l.b16 %v3872
      %v4129 = vunpack.c.l.b16 %v3873
      %v4130 = vunpack.c.l.b16 %v3874
      %v4131 = vunpack.c.l.b16 %v3875
      %v4132 = vunpack.c.l.b16 %v3876
      %v4133 = vunpack.c.l.b16 %v3877
      %v4134 = vunpack.c.l.b16 %v3878
      %v4135 = vunpack.c.l.b16 %v3879
      %v4136 = vunpack.c.l.b16 %v3880
      %v4137 = vunpack.c.l.b16 %v3881
      %v4138 = vunpack.c.l.b16 %v3882
      %v4139 = vunpack.c.l.b16 %v3883
      %v4140 = vunpack.c.l.b16 %v3884
      %v4141 = vunpack.c.l.b16 %v3885
      %v4142 = vunpack.c.l.b16 %v3886
      %v4143 = vunpack.c.l.b16 %v3887
      %v4144 = vunpack.c.l.b16 %v3888
      %v4145 = vunpack.c.l.b16 %v3889
      %v4146 = vunpack.c.l.b16 %v3890
      %v4147 = vunpack.c.l.b16 %v3891
      %v4148 = vunpack.c.l.b16 %v3892
      %v4149 = vunpack.c.l.b16 %v3893
      %v4150 = vunpack.c.l.b16 %v3894
      %v4151 = vunpack.c.l.b16 %v3895
      %v4152 = vunpack.c.l.b16 %v3896
      %v4153 = vunpack.c.l.b16 %v3897
      %v4154 = vunpack.c.l.b16 %v3898
      %v4155 = vunpack.c.l.b16 %v3899
      %v4156 = vpack.c.b16 %v4125, %v4124
      %v4157 = vpack.c.b16 %v4127, %v4126
      %v4158 = vpack.c.b16 %v4129, %v4128
      %v4159 = vpack.c.b16 %v4131, %v4130
      %v4160 = vpack.c.b16 %v4133, %v4132
      %v4161 = vpack.c.b16 %v4135, %v4134
      %v4162 = vpack.c.b16 %v4137, %v4136
      %v4163 = vpack.c.b16 %v4139, %v4138
      %v4164 = vpack.c.b16 %v4141, %v4140
      %v4165 = vpack.c.b16 %v4143, %v4142
      %v4166 = vpack.c.b16 %v4145, %v4144
      %v4167 = vpack.c.b16 %v4147, %v4146
      %v4168 = vpack.c.b16 %v4149, %v4148
      %v4169 = vpack.c.b16 %v4151, %v4150
      %v4170 = vpack.c.b16 %v4153, %v4152
      %v4171 = vpack.c.b16 %v4155, %v4154
      %4172 = vrot.lane.b32.xlu0 %v4156, 16
      %v4173 = vpop.permute.xlu0 %4172
      %4174 = vrot.lane.b32.xlu0 %v4157, 16
      %v4175 = vpop.permute.xlu0 %4174
      %4176 = vrot.lane.b32.xlu0 %v4158, 16
      %v4177 = vpop.permute.xlu0 %4176
      %4178 = vrot.lane.b32.xlu0 %v4159, 16
      %v4179 = vpop.permute.xlu0 %4178
      %4180 = vrot.lane.b32.xlu0 %v4160, 16
      %v4181 = vpop.permute.xlu0 %4180
      %4182 = vrot.lane.b32.xlu0 %v4161, 16
      %v4183 = vpop.permute.xlu0 %4182
      %4184 = vrot.lane.b32.xlu0 %v4162, 16
      %v4185 = vpop.permute.xlu0 %4184
      %4186 = vrot.lane.b32.xlu0 %v4163, 16
      %v4187 = vpop.permute.xlu0 %4186
      %4188 = vrot.lane.b32.xlu0 %v4164, 16
      %v4189 = vpop.permute.xlu0 %4188
      %4190 = vrot.lane.b32.xlu0 %v4165, 16
      %v4191 = vpop.permute.xlu0 %4190
      %4192 = vrot.lane.b32.xlu0 %v4166, 16
      %v4193 = vpop.permute.xlu0 %4192
      %4194 = vrot.lane.b32.xlu0 %v4167, 16
      %v4195 = vpop.permute.xlu0 %4194
      %4196 = vrot.lane.b32.xlu0 %v4168, 16
      %v4197 = vpop.permute.xlu0 %4196
      %4198 = vrot.lane.b32.xlu0 %v4169, 16
      %v4199 = vpop.permute.xlu0 %4198
      %4200 = vrot.lane.b32.xlu0 %v4170, 16
      %v4201 = vpop.permute.xlu0 %4200
      %4202 = vrot.lane.b32.xlu0 %v4171, 16
      %v4203 = vpop.permute.xlu0 %4202
      %v4206 = vsel %vm3040, %v3964, %v4061
      %v4209 = vsel %vm3040, %v3965, %v4063
      %v4212 = vsel %vm3040, %v3966, %v4065
      %v4215 = vsel %vm3040, %v3967, %v4067
      %v4218 = vsel %vm3040, %v3968, %v4069
      %v4221 = vsel %vm3040, %v3969, %v4071
      %v4224 = vsel %vm3040, %v3970, %v4073
      %v4227 = vsel %vm3040, %v3971, %v4075
      %v4230 = vsel %vm3040, %v3972, %v4077
      %v4233 = vsel %vm3040, %v3973, %v4079
      %v4236 = vsel %vm3040, %v3974, %v4081
      %v4239 = vsel %vm3040, %v3975, %v4083
      %v4242 = vsel %vm3040, %v3976, %v4085
      %v4245 = vsel %vm3040, %v3977, %v4087
      %v4248 = vsel %vm3040, %v3978, %v4089
      %v4251 = vsel %vm3040, %v3979, %v4091
      %v4253 = vsel %vm1601, %v4206, %v4173
      %v4255 = vsel %vm1601, %v4209, %v4175
      %v4257 = vsel %vm1601, %v4212, %v4177
      %v4259 = vsel %vm1601, %v4215, %v4179
      %v4261 = vsel %vm1601, %v4218, %v4181
      %v4263 = vsel %vm1601, %v4221, %v4183
      %v4265 = vsel %vm1601, %v4224, %v4185
      %v4267 = vsel %vm1601, %v4227, %v4187
      %v4269 = vsel %vm1601, %v4230, %v4189
      %v4271 = vsel %vm1601, %v4233, %v4191
      %v4273 = vsel %vm1601, %v4236, %v4193
      %v4275 = vsel %vm1601, %v4239, %v4195
      %v4277 = vsel %vm1601, %v4242, %v4197
      %v4279 = vsel %vm1601, %v4245, %v4199
      %v4281 = vsel %vm1601, %v4248, %v4201
      %v4283 = vsel %vm1601, %v4251, %v4203
      %s4284 = scalar_lea.vmem %s9, 12
      %v4285 = vld [vmem:[%s4284] sm:$0xf]
      %v4286 = vld [vmem:[%s4284 + $0x4] sm:$0xf]
      %v4287 = vld [vmem:[%s4284 + $0x8] sm:$0xf]
      %v4291 = vunpack.c.l.b16 %v4285
      %v4292 = vunpack.c.l.b16 %v4286
      %v4293 = vunpack.c.l.b16 %v4287
      %v4294 = vpack.c.b16 %v4292, %v4291
      %v4295 = vpack.c.b16 %v4293, %v4293
      %vm4297 = vcmask 195584
      %v4298 = vsel %vm4297, %v4253, 0
      %v4300 = vsel %vm4297, %v4255, 0
      %v4302 = vsel %vm4297, %v4257, 0
      %v4304 = vsel %vm4297, %v4259, 0
      %v4306 = vsel %vm4297, %v4261, 0
      %v4308 = vsel %vm4297, %v4263, 0
      %v4310 = vsel %vm4297, %v4265, 0
      %v4312 = vsel %vm4297, %v4267, 0
      %v4314 = vsel %vm4297, %v4269, 0
      %v4316 = vsel %vm4297, %v4271, 0
      %v4318 = vsel %vm4297, %v4273, 0
      %v4320 = vsel %vm4297, %v4275, 0
      %v4322 = vsel %vm4297, %v4277, 0
      %v4324 = vsel %vm4297, %v4279, 0
      %v4326 = vsel %vm4297, %v4281, 0
      %v4328 = vsel %vm4297, %v4283, 0
      %vm4330 = vcmask 1043456
      %v4332 = vsel %vm4330, %v4295, 0
      %4334 = vmatpush.bf16.msra.mxu0 0
      %4335 = vmatpush.bf16.msra.mxu0 0
      %4336 = vmatpush.bf16.msra.mxu0 0
      %4337 = vmatpush.bf16.msra.mxu0 0
      %4338 = vmatpush.bf16.msra.mxu0 0
      %4339 = vmatpush.bf16.msra.mxu0 0
      %4340 = vmatpush.bf16.msra.mxu0 %v4332
      %4341 = vmatpush.bf16.msra.mxu0 %v4294
      %4342 = vmatmul.bf16.gmra.mxu0 %v4298
      %v4343 = vpop.f32.mrf.mxu0
      %v4344 = vadd.f32 0.0, %v4343
      %v4345 = vpop.f32.mrf.mxu0
      %v4346 = vadd.f32 0.0, %v4345
      %4347 = vmatmul.bf16.gmra.mxu0 %v4300
      %v4348 = vpop.f32.mrf.mxu0
      %v4349 = vadd.f32 0.0, %v4348
      %v4350 = vpop.f32.mrf.mxu0
      %v4351 = vadd.f32 0.0, %v4350
      %4352 = vmatmul.bf16.gmra.mxu0 %v4302
      %v4353 = vpop.f32.mrf.mxu0
      %v4354 = vadd.f32 0.0, %v4353
      %v4355 = vpop.f32.mrf.mxu0
      %v4356 = vadd.f32 0.0, %v4355
      %4357 = vmatmul.bf16.gmra.mxu0 %v4304
      %v4358 = vpop.f32.mrf.mxu0
      %v4359 = vadd.f32 0.0, %v4358
      %v4360 = vpop.f32.mrf.mxu0
      %v4361 = vadd.f32 0.0, %v4360
      %4362 = vmatmul.bf16.gmra.mxu0 %v4306
      %v4363 = vpop.f32.mrf.mxu0
      %v4364 = vadd.f32 0.0, %v4363
      %v4365 = vpop.f32.mrf.mxu0
      %v4366 = vadd.f32 0.0, %v4365
      %4367 = vmatmul.bf16.gmra.mxu0 %v4308
      %v4368 = vpop.f32.mrf.mxu0
      %v4369 = vadd.f32 0.0, %v4368
      %v4370 = vpop.f32.mrf.mxu0
      %v4371 = vadd.f32 0.0, %v4370
      %4372 = vmatmul.bf16.gmra.mxu0 %v4310
      %v4373 = vpop.f32.mrf.mxu0
      %v4374 = vadd.f32 0.0, %v4373
      %v4375 = vpop.f32.mrf.mxu0
      %v4376 = vadd.f32 0.0, %v4375
      %4377 = vmatmul.bf16.gmra.mxu0 %v4312
      %v4378 = vpop.f32.mrf.mxu0
      %v4379 = vadd.f32 0.0, %v4378
      %v4380 = vpop.f32.mrf.mxu0
      %v4381 = vadd.f32 0.0, %v4380
      %4382 = vmatmul.bf16.gmra.mxu0 %v4314
      %v4383 = vpop.f32.mrf.mxu0
      %v4384 = vadd.f32 0.0, %v4383
      %v4385 = vpop.f32.mrf.mxu0
      %v4386 = vadd.f32 0.0, %v4385
      %4387 = vmatmul.bf16.gmra.mxu0 %v4316
      %v4388 = vpop.f32.mrf.mxu0
      %v4389 = vadd.f32 0.0, %v4388
      %v4390 = vpop.f32.mrf.mxu0
      %v4391 = vadd.f32 0.0, %v4390
      %4392 = vmatmul.bf16.gmra.mxu0 %v4318
      %v4393 = vpop.f32.mrf.mxu0
      %v4394 = vadd.f32 0.0, %v4393
      %v4395 = vpop.f32.mrf.mxu0
      %v4396 = vadd.f32 0.0, %v4395
      %4397 = vmatmul.bf16.gmra.mxu0 %v4320
      %v4398 = vpop.f32.mrf.mxu0
      %v4399 = vadd.f32 0.0, %v4398
      %v4400 = vpop.f32.mrf.mxu0
      %v4401 = vadd.f32 0.0, %v4400
      %4402 = vmatmul.bf16.gmra.mxu0 %v4322
      %v4403 = vpop.f32.mrf.mxu0
      %v4404 = vadd.f32 0.0, %v4403
      %v4405 = vpop.f32.mrf.mxu0
      %v4406 = vadd.f32 0.0, %v4405
      %4407 = vmatmul.bf16.gmra.mxu0 %v4324
      %v4408 = vpop.f32.mrf.mxu0
      %v4409 = vadd.f32 0.0, %v4408
      %v4410 = vpop.f32.mrf.mxu0
      %v4411 = vadd.f32 0.0, %v4410
      %4412 = vmatmul.bf16.gmra.mxu0 %v4326
      %v4413 = vpop.f32.mrf.mxu0
      %v4414 = vadd.f32 0.0, %v4413
      %v4415 = vpop.f32.mrf.mxu0
      %v4416 = vadd.f32 0.0, %v4415
      %4417 = vmatmul.bf16.gmra.mxu0 %v4328
      %v4418 = vpop.f32.mrf.mxu0
      %v4419 = vadd.f32 0.0, %v4418
      %v4420 = vpop.f32.mrf.mxu0
      %v4421 = vadd.f32 0.0, %v4420
      %4422 = vdwg.mxu0
      %4423 = vst.msk [vmem:[#allocation4] sm:$0xff] %vm3040, %v4344
      %4424 = vst.msk [vmem:[#allocation4 + $0x8] sm:$0xff] %vm3040, %v4346
      %4425 = vst.msk [vmem:[#allocation4 + $0x10] sm:$0xff] %vm3040, %v4349
      %4426 = vst.msk [vmem:[#allocation4 + $0x18] sm:$0xff] %vm3040, %v4351
      %4427 = vst.msk [vmem:[#allocation4 + $0x20] sm:$0xff] %vm3040, %v4354
      %4428 = vst.msk [vmem:[#allocation4 + $0x28] sm:$0xff] %vm3040, %v4356
      %4429 = vst.msk [vmem:[#allocation4 + $0x30] sm:$0xff] %vm3040, %v4359
      %4430 = vst.msk [vmem:[#allocation4 + $0x38] sm:$0xff] %vm3040, %v4361
      %4431 = vst.msk [vmem:[#allocation4 + $0x40] sm:$0xff] %vm3040, %v4364
      %4432 = vst.msk [vmem:[#allocation4 + $0x48] sm:$0xff] %vm3040, %v4366
      %4433 = vst.msk [vmem:[#allocation4 + $0x50] sm:$0xff] %vm3040, %v4369
      %4434 = vst.msk [vmem:[#allocation4 + $0x58] sm:$0xff] %vm3040, %v4371
      %4435 = vst.msk [vmem:[#allocation4 + $0x60] sm:$0xff] %vm3040, %v4374
      %4436 = vst.msk [vmem:[#allocation4 + $0x68] sm:$0xff] %vm3040, %v4376
      %4437 = vst.msk [vmem:[#allocation4 + $0x70] sm:$0xff] %vm3040, %v4379
      %4438 = vst.msk [vmem:[#allocation4 + $0x78] sm:$0xff] %vm3040, %v4381
      %4439 = vst.msk [vmem:[#allocation4 + $0x80] sm:$0xff] %vm3040, %v4384
      %4440 = vst.msk [vmem:[#allocation4 + $0x88] sm:$0xff] %vm3040, %v4386
      %4441 = vst.msk [vmem:[#allocation4 + $0x90] sm:$0xff] %vm3040, %v4389
      %4442 = vst.msk [vmem:[#allocation4 + $0x98] sm:$0xff] %vm3040, %v4391
      %4443 = vst.msk [vmem:[#allocation4 + $0xa0] sm:$0xff] %vm3040, %v4394
      %4444 = vst.msk [vmem:[#allocation4 + $0xa8] sm:$0xff] %vm3040, %v4396
      %4445 = vst.msk [vmem:[#allocation4 + $0xb0] sm:$0xff] %vm3040, %v4399
      %4446 = vst.msk [vmem:[#allocation4 + $0xb8] sm:$0xff] %vm3040, %v4401
      %4447 = vst.msk [vmem:[#allocation4 + $0xc0] sm:$0xff] %vm3040, %v4404
      %4448 = vst.msk [vmem:[#allocation4 + $0xc8] sm:$0xff] %vm3040, %v4406
      %4449 = vst.msk [vmem:[#allocation4 + $0xd0] sm:$0xff] %vm3040, %v4409
      %4450 = vst.msk [vmem:[#allocation4 + $0xd8] sm:$0xff] %vm3040, %v4411
      %4451 = vst.msk [vmem:[#allocation4 + $0xe0] sm:$0xff] %vm3040, %v4414
      %4452 = vst.msk [vmem:[#allocation4 + $0xe8] sm:$0xff] %vm3040, %v4416
      %4453 = vst.msk [vmem:[#allocation4 + $0xf0] sm:$0xff] %vm3040, %v4419
      %4454 = vst.msk [vmem:[#allocation4 + $0xf8] sm:$0xff] %vm3040, %v4421
      %v4455 = vld [vmem:[%s9] sm:$0xf]
      %v4456 = vld [vmem:[%s9 + $0x4] sm:$0xf]
      %v4457 = vld [vmem:[%s9 + $0x8] sm:$0xf]
      %v4461 = vunpack.c.l.b16 %v4455
      %v4462 = vunpack.c.l.b16 %v4456
      %v4463 = vunpack.c.l.b16 %v4457
      %v4464 = vpack.c.b16 %v4462, %v4461
      %v4465 = vpack.c.b16 %v4463, %v4463
      %v4468 = vsel %vm4330, %v4465, 0
      %4470 = vmatpush.bf16.msra.mxu0 0
      %4471 = vmatpush.bf16.msra.mxu0 0
      %4472 = vmatpush.bf16.msra.mxu0 0
      %4473 = vmatpush.bf16.msra.mxu0 0
      %4474 = vmatpush.bf16.msra.mxu0 0
      %4475 = vmatpush.bf16.msra.mxu0 0
      %4476 = vmatpush.bf16.msra.mxu0 %v4468
      %4477 = vmatpush.bf16.msra.mxu0 %v4464
      %4478 = vmatmul.bf16.gmra.mxu0 %v4298
      %v4479 = vpop.f32.mrf.mxu0
      %v4480 = vadd.f32 0.0, %v4479
      %v4481 = vpop.f32.mrf.mxu0
      %v4482 = vadd.f32 0.0, %v4481
      %4483 = vmatmul.bf16.gmra.mxu0 %v4300
      %v4484 = vpop.f32.mrf.mxu0
      %v4485 = vadd.f32 0.0, %v4484
      %v4486 = vpop.f32.mrf.mxu0
      %v4487 = vadd.f32 0.0, %v4486
      %4488 = vmatmul.bf16.gmra.mxu0 %v4302
      %v4489 = vpop.f32.mrf.mxu0
      %v4490 = vadd.f32 0.0, %v4489
      %v4491 = vpop.f32.mrf.mxu0
      %v4492 = vadd.f32 0.0, %v4491
      %4493 = vmatmul.bf16.gmra.mxu0 %v4304
      %v4494 = vpop.f32.mrf.mxu0
      %v4495 = vadd.f32 0.0, %v4494
      %v4496 = vpop.f32.mrf.mxu0
      %v4497 = vadd.f32 0.0, %v4496
      %4498 = vmatmul.bf16.gmra.mxu0 %v4306
      %v4499 = vpop.f32.mrf.mxu0
      %v4500 = vadd.f32 0.0, %v4499
      %v4501 = vpop.f32.mrf.mxu0
      %v4502 = vadd.f32 0.0, %v4501
      %4503 = vmatmul.bf16.gmra.mxu0 %v4308
      %v4504 = vpop.f32.mrf.mxu0
      %v4505 = vadd.f32 0.0, %v4504
      %v4506 = vpop.f32.mrf.mxu0
      %v4507 = vadd.f32 0.0, %v4506
      %4508 = vmatmul.bf16.gmra.mxu0 %v4310
      %v4509 = vpop.f32.mrf.mxu0
      %v4510 = vadd.f32 0.0, %v4509
      %v4511 = vpop.f32.mrf.mxu0
      %v4512 = vadd.f32 0.0, %v4511
      %4513 = vmatmul.bf16.gmra.mxu0 %v4312
      %v4514 = vpop.f32.mrf.mxu0
      %v4515 = vadd.f32 0.0, %v4514
      %v4516 = vpop.f32.mrf.mxu0
      %v4517 = vadd.f32 0.0, %v4516
      %4518 = vmatmul.bf16.gmra.mxu0 %v4314
      %v4519 = vpop.f32.mrf.mxu0
      %v4520 = vadd.f32 0.0, %v4519
      %v4521 = vpop.f32.mrf.mxu0
      %v4522 = vadd.f32 0.0, %v4521
      %4523 = vmatmul.bf16.gmra.mxu0 %v4316
      %v4524 = vpop.f32.mrf.mxu0
      %v4525 = vadd.f32 0.0, %v4524
      %v4526 = vpop.f32.mrf.mxu0
      %v4527 = vadd.f32 0.0, %v4526
      %4528 = vmatmul.bf16.gmra.mxu0 %v4318
      %v4529 = vpop.f32.mrf.mxu0
      %v4530 = vadd.f32 0.0, %v4529
      %v4531 = vpop.f32.mrf.mxu0
      %v4532 = vadd.f32 0.0, %v4531
      %4533 = vmatmul.bf16.gmra.mxu0 %v4320
      %v4534 = vpop.f32.mrf.mxu0
      %v4535 = vadd.f32 0.0, %v4534
      %v4536 = vpop.f32.mrf.mxu0
      %v4537 = vadd.f32 0.0, %v4536
      %4538 = vmatmul.bf16.gmra.mxu0 %v4322
      %v4539 = vpop.f32.mrf.mxu0
      %v4540 = vadd.f32 0.0, %v4539
      %v4541 = vpop.f32.mrf.mxu0
      %v4542 = vadd.f32 0.0, %v4541
      %4543 = vmatmul.bf16.gmra.mxu0 %v4324
      %v4544 = vpop.f32.mrf.mxu0
      %v4545 = vadd.f32 0.0, %v4544
      %v4546 = vpop.f32.mrf.mxu0
      %v4547 = vadd.f32 0.0, %v4546
      %4548 = vmatmul.bf16.gmra.mxu0 %v4326
      %v4549 = vpop.f32.mrf.mxu0
      %v4550 = vadd.f32 0.0, %v4549
      %v4551 = vpop.f32.mrf.mxu0
      %v4552 = vadd.f32 0.0, %v4551
      %4553 = vmatmul.bf16.gmra.mxu0 %v4328
      %v4554 = vpop.f32.mrf.mxu0
      %v4555 = vpop.f32.mrf.mxu0
      %4556 = vdwg.mxu0
      %v4557 = vld [vmem:[#allocation4 + $0x10] sm:$0xff]
      %v4558 = vld [vmem:[#allocation4 + $0x18] sm:$0xff]
      %v4559 = vld [vmem:[#allocation4 + $0x20] sm:$0xff]
      %v4560 = vld [vmem:[#allocation4 + $0x28] sm:$0xff]
      %v4561 = vld [vmem:[#allocation4 + $0x30] sm:$0xff]
      %v4562 = vld [vmem:[#allocation4 + $0x38] sm:$0xff]
      %v4563 = vld [vmem:[#allocation4 + $0x40] sm:$0xff]
      %v4564 = vld [vmem:[#allocation4 + $0x48] sm:$0xff]
      %v4565 = vld [vmem:[#allocation4 + $0x50] sm:$0xff]
      %v4566 = vld [vmem:[#allocation4 + $0x58] sm:$0xff]
      %v4567 = vld [vmem:[#allocation4 + $0x60] sm:$0xff]
      %v4568 = vld [vmem:[#allocation4 + $0x68] sm:$0xff]
      %v4569 = vld [vmem:[#allocation4 + $0x70] sm:$0xff]
      %v4570 = vld [vmem:[#allocation4 + $0x78] sm:$0xff]
      %v4571 = vld [vmem:[#allocation4 + $0x80] sm:$0xff]
      %v4572 = vld [vmem:[#allocation4 + $0x88] sm:$0xff]
      %v4573 = vld [vmem:[#allocation4 + $0x90] sm:$0xff]
      %v4574 = vld [vmem:[#allocation4 + $0x98] sm:$0xff]
      %v4575 = vld [vmem:[#allocation4 + $0xa0] sm:$0xff]
      %v4576 = vld [vmem:[#allocation4 + $0xa8] sm:$0xff]
      %v4577 = vld [vmem:[#allocation4 + $0xb0] sm:$0xff]
      %v4578 = vld [vmem:[#allocation4 + $0xb8] sm:$0xff]
      %v4579 = vld [vmem:[#allocation4 + $0xc0] sm:$0xff]
      %v4580 = vld [vmem:[#allocation4 + $0xc8] sm:$0xff]
      %v4581 = vld [vmem:[#allocation4 + $0xd0] sm:$0xff]
      %v4582 = vld [vmem:[#allocation4 + $0xd8] sm:$0xff]
      %v4583 = vld [vmem:[#allocation4 + $0xe0] sm:$0xff]
      %v4584 = vld [vmem:[#allocation4 + $0xe8] sm:$0xff]
      %v4585 = vld [vmem:[#allocation4 + $0xf0] sm:$0xff]
      %v4586 = vld [vmem:[#allocation4 + $0xf8] sm:$0xff]
      %v4587 = vadd.f32 %v4557, %v4480
      %v4588 = vadd.f32 %v4558, %v4482
      %v4589 = vadd.f32 %v4559, %v4485
      %v4590 = vadd.f32 %v4560, %v4487
      %v4591 = vadd.f32 %v4561, %v4490
      %v4592 = vadd.f32 %v4562, %v4492
      %v4593 = vadd.f32 %v4563, %v4495
      %v4594 = vadd.f32 %v4564, %v4497
      %v4595 = vadd.f32 %v4565, %v4500
      %v4596 = vadd.f32 %v4566, %v4502
      %v4597 = vadd.f32 %v4567, %v4505
      %v4598 = vadd.f32 %v4568, %v4507
      %v4599 = vadd.f32 %v4569, %v4510
      %v4600 = vadd.f32 %v4570, %v4512
      %v4601 = vadd.f32 %v4571, %v4515
      %v4602 = vadd.f32 %v4572, %v4517
      %v4603 = vadd.f32 %v4573, %v4520
      %v4604 = vadd.f32 %v4574, %v4522
      %v4605 = vadd.f32 %v4575, %v4525
      %v4606 = vadd.f32 %v4576, %v4527
      %v4607 = vadd.f32 %v4577, %v4530
      %v4608 = vadd.f32 %v4578, %v4532
      %v4609 = vadd.f32 %v4579, %v4535
      %v4610 = vadd.f32 %v4580, %v4537
      %v4611 = vadd.f32 %v4581, %v4540
      %v4612 = vadd.f32 %v4582, %v4542
      %v4613 = vadd.f32 %v4583, %v4545
      %v4614 = vadd.f32 %v4584, %v4547
      %v4615 = vadd.f32 %v4585, %v4550
      %v4616 = vadd.f32 %v4586, %v4552
      %4617 = vst.msk [vmem:[#allocation4 + $0x10] sm:$0xff] %vm3040, %v4587
      %4618 = vst.msk [vmem:[#allocation4 + $0x18] sm:$0xff] %vm3040, %v4588
      %4619 = vst.msk [vmem:[#allocation4 + $0x20] sm:$0xff] %vm3040, %v4589
      %4620 = vst.msk [vmem:[#allocation4 + $0x28] sm:$0xff] %vm3040, %v4590
      %4621 = vst.msk [vmem:[#allocation4 + $0x30] sm:$0xff] %vm3040, %v4591
      %4622 = vst.msk [vmem:[#allocation4 + $0x38] sm:$0xff] %vm3040, %v4592
      %4623 = vst.msk [vmem:[#allocation4 + $0x40] sm:$0xff] %vm3040, %v4593
      %4624 = vst.msk [vmem:[#allocation4 + $0x48] sm:$0xff] %vm3040, %v4594
      %4625 = vst.msk [vmem:[#allocation4 + $0x50] sm:$0xff] %vm3040, %v4595
      %4626 = vst.msk [vmem:[#allocation4 + $0x58] sm:$0xff] %vm3040, %v4596
      %4627 = vst.msk [vmem:[#allocation4 + $0x60] sm:$0xff] %vm3040, %v4597
      %4628 = vst.msk [vmem:[#allocation4 + $0x68] sm:$0xff] %vm3040, %v4598
      %4629 = vst.msk [vmem:[#allocation4 + $0x70] sm:$0xff] %vm3040, %v4599
      %4630 = vst.msk [vmem:[#allocation4 + $0x78] sm:$0xff] %vm3040, %v4600
      %4631 = vst.msk [vmem:[#allocation4 + $0x80] sm:$0xff] %vm3040, %v4601
      %4632 = vst.msk [vmem:[#allocation4 + $0x88] sm:$0xff] %vm3040, %v4602
      %4633 = vst.msk [vmem:[#allocation4 + $0x90] sm:$0xff] %vm3040, %v4603
      %4634 = vst.msk [vmem:[#allocation4 + $0x98] sm:$0xff] %vm3040, %v4604
      %4635 = vst.msk [vmem:[#allocation4 + $0xa0] sm:$0xff] %vm3040, %v4605
      %4636 = vst.msk [vmem:[#allocation4 + $0xa8] sm:$0xff] %vm3040, %v4606
      %4637 = vst.msk [vmem:[#allocation4 + $0xb0] sm:$0xff] %vm3040, %v4607
      %4638 = vst.msk [vmem:[#allocation4 + $0xb8] sm:$0xff] %vm3040, %v4608
      %4639 = vst.msk [vmem:[#allocation4 + $0xc0] sm:$0xff] %vm3040, %v4609
      %4640 = vst.msk [vmem:[#allocation4 + $0xc8] sm:$0xff] %vm3040, %v4610
      %4641 = vst.msk [vmem:[#allocation4 + $0xd0] sm:$0xff] %vm3040, %v4611
      %4642 = vst.msk [vmem:[#allocation4 + $0xd8] sm:$0xff] %vm3040, %v4612
      %4643 = vst.msk [vmem:[#allocation4 + $0xe0] sm:$0xff] %vm3040, %v4613
      %4644 = vst.msk [vmem:[#allocation4 + $0xe8] sm:$0xff] %vm3040, %v4614
      %4645 = vst.msk [vmem:[#allocation4 + $0xf0] sm:$0xff] %vm3040, %v4615
      %4646 = vst.msk [vmem:[#allocation4 + $0xf8] sm:$0xff] %vm3040, %v4616
      %s4647 = scalar_lea.vmem %s9, 24
      %v4648 = vld [vmem:[%s4647] sm:$0xf]
      %v4649 = vld [vmem:[%s4647 + $0x4] sm:$0xf]
      %v4650 = vld [vmem:[%s4647 + $0x8] sm:$0xf]
      %v4654 = vunpack.c.l.b16 %v4648
      %v4655 = vunpack.c.l.b16 %v4649
      %v4656 = vunpack.c.l.b16 %v4650
      %v4657 = vpack.c.b16 %v4655, %v4654
      %v4658 = vpack.c.b16 %v4656, %v4656
      %v4661 = vsel %vm4330, %v4658, 0
      %4663 = vmatpush.bf16.msra.mxu0 0
      %4664 = vmatpush.bf16.msra.mxu0 0
      %4665 = vmatpush.bf16.msra.mxu0 0
      %4666 = vmatpush.bf16.msra.mxu0 0
      %4667 = vmatpush.bf16.msra.mxu0 0
      %4668 = vmatpush.bf16.msra.mxu0 0
      %4669 = vmatpush.bf16.msra.mxu0 %v4661
      %4670 = vmatpush.bf16.msra.mxu0 %v4657
      %4671 = vmatmul.bf16.gmra.mxu0 %v4298
      %v4672 = vpop.f32.mrf.mxu0
      %v4673 = vpop.f32.mrf.mxu0
      %4674 = vmatmul.bf16.gmra.mxu0 %v4300
      %v4675 = vpop.f32.mrf.mxu0
      %v4676 = vadd.f32 0.0, %v4675
      %v4677 = vpop.f32.mrf.mxu0
      %v4678 = vadd.f32 0.0, %v4677
      %4679 = vmatmul.bf16.gmra.mxu0 %v4302
      %v4680 = vpop.f32.mrf.mxu0
      %v4681 = vadd.f32 0.0, %v4680
      %v4682 = vpop.f32.mrf.mxu0
      %v4683 = vadd.f32 0.0, %v4682
      %4684 = vmatmul.bf16.gmra.mxu0 %v4304
      %v4685 = vpop.f32.mrf.mxu0
      %v4686 = vadd.f32 0.0, %v4685
      %v4687 = vpop.f32.mrf.mxu0
      %v4688 = vadd.f32 0.0, %v4687
      %4689 = vmatmul.bf16.gmra.mxu0 %v4306
      %v4690 = vpop.f32.mrf.mxu0
      %v4691 = vadd.f32 0.0, %v4690
      %v4692 = vpop.f32.mrf.mxu0
      %v4693 = vadd.f32 0.0, %v4692
      %4694 = vmatmul.bf16.gmra.mxu0 %v4308
      %v4695 = vpop.f32.mrf.mxu0
      %v4696 = vadd.f32 0.0, %v4695
      %v4697 = vpop.f32.mrf.mxu0
      %v4698 = vadd.f32 0.0, %v4697
      %4699 = vmatmul.bf16.gmra.mxu0 %v4310
      %v4700 = vpop.f32.mrf.mxu0
      %v4701 = vadd.f32 0.0, %v4700
      %v4702 = vpop.f32.mrf.mxu0
      %v4703 = vadd.f32 0.0, %v4702
      %4704 = vmatmul.bf16.gmra.mxu0 %v4312
      %v4705 = vpop.f32.mrf.mxu0
      %v4706 = vadd.f32 0.0, %v4705
      %v4707 = vpop.f32.mrf.mxu0
      %v4708 = vadd.f32 0.0, %v4707
      %4709 = vmatmul.bf16.gmra.mxu0 %v4314
      %v4710 = vpop.f32.mrf.mxu0
      %v4711 = vadd.f32 0.0, %v4710
      %v4712 = vpop.f32.mrf.mxu0
      %v4713 = vadd.f32 0.0, %v4712
      %4714 = vmatmul.bf16.gmra.mxu0 %v4316
      %v4715 = vpop.f32.mrf.mxu0
      %v4716 = vadd.f32 0.0, %v4715
      %v4717 = vpop.f32.mrf.mxu0
      %v4718 = vadd.f32 0.0, %v4717
      %4719 = vmatmul.bf16.gmra.mxu0 %v4318
      %v4720 = vpop.f32.mrf.mxu0
      %v4721 = vadd.f32 0.0, %v4720
      %v4722 = vpop.f32.mrf.mxu0
      %v4723 = vadd.f32 0.0, %v4722
      %4724 = vmatmul.bf16.gmra.mxu0 %v4320
      %v4725 = vpop.f32.mrf.mxu0
      %v4726 = vadd.f32 0.0, %v4725
      %v4727 = vpop.f32.mrf.mxu0
      %v4728 = vadd.f32 0.0, %v4727
      %4729 = vmatmul.bf16.gmra.mxu0 %v4322
      %v4730 = vpop.f32.mrf.mxu0
      %v4731 = vadd.f32 0.0, %v4730
      %v4732 = vpop.f32.mrf.mxu0
      %v4733 = vadd.f32 0.0, %v4732
      %4734 = vmatmul.bf16.gmra.mxu0 %v4324
      %v4735 = vpop.f32.mrf.mxu0
      %v4736 = vadd.f32 0.0, %v4735
      %v4737 = vpop.f32.mrf.mxu0
      %v4738 = vadd.f32 0.0, %v4737
      %4739 = vmatmul.bf16.gmra.mxu0 %v4326
      %v4740 = vpop.f32.mrf.mxu0
      %v4741 = vadd.f32 0.0, %v4740
      %v4742 = vpop.f32.mrf.mxu0
      %v4743 = vadd.f32 0.0, %v4742
      %4744 = vmatmul.bf16.gmra.mxu0 %v4328
      %v4745 = vpop.f32.mrf.mxu0
      %v4746 = vadd.f32 0.0, %v4745
      %v4747 = vpop.f32.mrf.mxu0
      %v4748 = vadd.f32 0.0, %v4747
      %4749 = vdwg.mxu0
      %v4750 = vld [vmem:[#allocation4] sm:$0xff]
      %v4751 = vld [vmem:[#allocation4 + $0x8] sm:$0xff]
      %v4752 = vld [vmem:[#allocation4 + $0x10] sm:$0xff]
      %v4753 = vld [vmem:[#allocation4 + $0x18] sm:$0xff]
      %v4754 = vld [vmem:[#allocation4 + $0x20] sm:$0xff]
      %v4755 = vld [vmem:[#allocation4 + $0x28] sm:$0xff]
      %v4756 = vld [vmem:[#allocation4 + $0x30] sm:$0xff]
      %v4757 = vld [vmem:[#allocation4 + $0x38] sm:$0xff]
      %v4758 = vld [vmem:[#allocation4 + $0x40] sm:$0xff]
      %v4759 = vld [vmem:[#allocation4 + $0x48] sm:$0xff]
      %v4760 = vld [vmem:[#allocation4 + $0x50] sm:$0xff]
      %v4761 = vld [vmem:[#allocation4 + $0x58] sm:$0xff]
      %v4762 = vld [vmem:[#allocation4 + $0x60] sm:$0xff]
      %v4763 = vld [vmem:[#allocation4 + $0x68] sm:$0xff]
      %v4764 = vld [vmem:[#allocation4 + $0x70] sm:$0xff]
      %v4765 = vld [vmem:[#allocation4 + $0x78] sm:$0xff]
      %v4766 = vld [vmem:[#allocation4 + $0x80] sm:$0xff]
      %v4767 = vld [vmem:[#allocation4 + $0x88] sm:$0xff]
      %v4768 = vld [vmem:[#allocation4 + $0x90] sm:$0xff]
      %v4769 = vld [vmem:[#allocation4 + $0x98] sm:$0xff]
      %v4770 = vld [vmem:[#allocation4 + $0xa0] sm:$0xff]
      %v4771 = vld [vmem:[#allocation4 + $0xa8] sm:$0xff]
      %v4772 = vld [vmem:[#allocation4 + $0xb0] sm:$0xff]
      %v4773 = vld [vmem:[#allocation4 + $0xb8] sm:$0xff]
      %v4774 = vld [vmem:[#allocation4 + $0xc0] sm:$0xff]
      %v4775 = vld [vmem:[#allocation4 + $0xc8] sm:$0xff]
      %v4776 = vld [vmem:[#allocation4 + $0xd0] sm:$0xff]
      %v4777 = vld [vmem:[#allocation4 + $0xd8] sm:$0xff]
      %v4778 = vld [vmem:[#allocation4 + $0xe0] sm:$0xff]
      %v4779 = vld [vmem:[#allocation4 + $0xe8] sm:$0xff]
      %v4780 = vadd.f32 %v4750, %v4676
      %v4781 = vadd.f32 %v4751, %v4678
      %v4782 = vadd.f32 %v4752, %v4681
      %v4783 = vadd.f32 %v4753, %v4683
      %v4784 = vadd.f32 %v4754, %v4686
      %v4785 = vadd.f32 %v4755, %v4688
      %v4786 = vadd.f32 %v4756, %v4691
      %v4787 = vadd.f32 %v4757, %v4693
      %v4788 = vadd.f32 %v4758, %v4696
      %v4789 = vadd.f32 %v4759, %v4698
      %v4790 = vadd.f32 %v4760, %v4701
      %v4791 = vadd.f32 %v4761, %v4703
      %v4792 = vadd.f32 %v4762, %v4706
      %v4793 = vadd.f32 %v4763, %v4708
      %v4794 = vadd.f32 %v4764, %v4711
      %v4795 = vadd.f32 %v4765, %v4713
      %v4796 = vadd.f32 %v4766, %v4716
      %v4797 = vadd.f32 %v4767, %v4718
      %v4798 = vadd.f32 %v4768, %v4721
      %v4799 = vadd.f32 %v4769, %v4723
      %v4800 = vadd.f32 %v4770, %v4726
      %v4801 = vadd.f32 %v4771, %v4728
      %v4802 = vadd.f32 %v4772, %v4731
      %v4803 = vadd.f32 %v4773, %v4733
      %v4804 = vadd.f32 %v4774, %v4736
      %v4805 = vadd.f32 %v4775, %v4738
      %v4806 = vadd.f32 %v4776, %v4741
      %v4807 = vadd.f32 %v4777, %v4743
      %v4808 = vadd.f32 %v4778, %v4746
      %v4809 = vadd.f32 %v4779, %v4748
      %4810 = vst.msk [vmem:[#allocation4] sm:$0xff] %vm3040, %v4780
      %4811 = vst.msk [vmem:[#allocation4 + $0x8] sm:$0xff] %vm3040, %v4781
      %4812 = vst.msk [vmem:[#allocation4 + $0x10] sm:$0xff] %vm3040, %v4782
      %4813 = vst.msk [vmem:[#allocation4 + $0x18] sm:$0xff] %vm3040, %v4783
      %4814 = vst.msk [vmem:[#allocation4 + $0x20] sm:$0xff] %vm3040, %v4784
      %4815 = vst.msk [vmem:[#allocation4 + $0x28] sm:$0xff] %vm3040, %v4785
      %4816 = vst.msk [vmem:[#allocation4 + $0x30] sm:$0xff] %vm3040, %v4786
      %4817 = vst.msk [vmem:[#allocation4 + $0x38] sm:$0xff] %vm3040, %v4787
      %4818 = vst.msk [vmem:[#allocation4 + $0x40] sm:$0xff] %vm3040, %v4788
      %4819 = vst.msk [vmem:[#allocation4 + $0x48] sm:$0xff] %vm3040, %v4789
      %4820 = vst.msk [vmem:[#allocation4 + $0x50] sm:$0xff] %vm3040, %v4790
      %4821 = vst.msk [vmem:[#allocation4 + $0x58] sm:$0xff] %vm3040, %v4791
      %4822 = vst.msk [vmem:[#allocation4 + $0x60] sm:$0xff] %vm3040, %v4792
      %4823 = vst.msk [vmem:[#allocation4 + $0x68] sm:$0xff] %vm3040, %v4793
      %4824 = vst.msk [vmem:[#allocation4 + $0x70] sm:$0xff] %vm3040, %v4794
      %4825 = vst.msk [vmem:[#allocation4 + $0x78] sm:$0xff] %vm3040, %v4795
      %4826 = vst.msk [vmem:[#allocation4 + $0x80] sm:$0xff] %vm3040, %v4796
      %4827 = vst.msk [vmem:[#allocation4 + $0x88] sm:$0xff] %vm3040, %v4797
      %4828 = vst.msk [vmem:[#allocation4 + $0x90] sm:$0xff] %vm3040, %v4798
      %4829 = vst.msk [vmem:[#allocation4 + $0x98] sm:$0xff] %vm3040, %v4799
      %4830 = vst.msk [vmem:[#allocation4 + $0xa0] sm:$0xff] %vm3040, %v4800
      %4831 = vst.msk [vmem:[#allocation4 + $0xa8] sm:$0xff] %vm3040, %v4801
      %4832 = vst.msk [vmem:[#allocation4 + $0xb0] sm:$0xff] %vm3040, %v4802
      %4833 = vst.msk [vmem:[#allocation4 + $0xb8] sm:$0xff] %vm3040, %v4803
      %4834 = vst.msk [vmem:[#allocation4 + $0xc0] sm:$0xff] %vm3040, %v4804
      %4835 = vst.msk [vmem:[#allocation4 + $0xc8] sm:$0xff] %vm3040, %v4805
      %4836 = vst.msk [vmem:[#allocation4 + $0xd0] sm:$0xff] %vm3040, %v4806
      %4837 = vst.msk [vmem:[#allocation4 + $0xd8] sm:$0xff] %vm3040, %v4807
      %4838 = vst.msk [vmem:[#allocation4 + $0xe0] sm:$0xff] %vm3040, %v4808
      %4839 = vst.msk [vmem:[#allocation4 + $0xe8] sm:$0xff] %vm3040, %v4809
      %v4840 = vld [vmem:[#allocation4] sm:$0xff]
      %v4841 = vld [vmem:[#allocation4 + $0x8] sm:$0xff]
      %v4842 = vld [vmem:[#allocation4 + $0x10] sm:$0xff]
      %v4843 = vld [vmem:[#allocation4 + $0x18] sm:$0xff]
      %v4844 = vld [vmem:[#allocation4 + $0x20] sm:$0xff]
      %v4845 = vld [vmem:[#allocation4 + $0x28] sm:$0xff]
      %v4846 = vld [vmem:[#allocation4 + $0x30] sm:$0xff]
      %v4847 = vld [vmem:[#allocation4 + $0x38] sm:$0xff]
      %v4848 = vld [vmem:[#allocation4 + $0x40] sm:$0xff]
      %v4849 = vld [vmem:[#allocation4 + $0x48] sm:$0xff]
      %v4850 = vld [vmem:[#allocation4 + $0x50] sm:$0xff]
      %v4851 = vld [vmem:[#allocation4 + $0x58] sm:$0xff]
      %v4852 = vld [vmem:[#allocation4 + $0x60] sm:$0xff]
      %v4853 = vld [vmem:[#allocation4 + $0x68] sm:$0xff]
      %v4854 = vld [vmem:[#allocation4 + $0x70] sm:$0xff]
      %v4855 = vld [vmem:[#allocation4 + $0x78] sm:$0xff]
      %v4856 = vld [vmem:[#allocation4 + $0x80] sm:$0xff]
      %v4857 = vld [vmem:[#allocation4 + $0x88] sm:$0xff]
      %v4858 = vld [vmem:[#allocation4 + $0x90] sm:$0xff]
      %v4859 = vld [vmem:[#allocation4 + $0x98] sm:$0xff]
      %v4860 = vld [vmem:[#allocation4 + $0xa0] sm:$0xff]
      %v4861 = vld [vmem:[#allocation4 + $0xa8] sm:$0xff]
      %v4862 = vld [vmem:[#allocation4 + $0xb0] sm:$0xff]
      %v4863 = vld [vmem:[#allocation4 + $0xb8] sm:$0xff]
      %v4864 = vld [vmem:[#allocation4 + $0xc0] sm:$0xff]
      %v4865 = vld [vmem:[#allocation4 + $0xc8] sm:$0xff]
      %v4866 = vld [vmem:[#allocation4 + $0xd0] sm:$0xff]
      %v4867 = vld [vmem:[#allocation4 + $0xd8] sm:$0xff]
      %v4868 = vld [vmem:[#allocation4 + $0xe0] sm:$0xff]
      %v4869 = vld [vmem:[#allocation4 + $0xe8] sm:$0xff]
      %v4870 = vld [vmem:[#allocation4 + $0xf0] sm:$0xff]
      %v4871 = vld [vmem:[#allocation4 + $0xf8] sm:$0xff]
      %v4872 = vld [vmem:[%s354] sm:$0xff]
      %v4873 = vld [vmem:[%s354 + $0x8] sm:$0xff]
      %v4874 = vld [vmem:[%s354 + $0x10] sm:$0xff]
      %v4875 = vld [vmem:[%s354 + $0x18] sm:$0xff]
      %v4876 = vld [vmem:[%s354 + $0x20] sm:$0xff]
      %v4877 = vld [vmem:[%s354 + $0x28] sm:$0xff]
      %v4878 = vld [vmem:[%s354 + $0x30] sm:$0xff]
      %v4879 = vld [vmem:[%s354 + $0x38] sm:$0xff]
      %v4880 = vld [vmem:[%s354 + $0x40] sm:$0xff]
      %v4881 = vld [vmem:[%s354 + $0x48] sm:$0xff]
      %v4882 = vld [vmem:[%s354 + $0x50] sm:$0xff]
      %v4883 = vld [vmem:[%s354 + $0x58] sm:$0xff]
      %v4884 = vld [vmem:[%s354 + $0x60] sm:$0xff]
      %v4885 = vld [vmem:[%s354 + $0x68] sm:$0xff]
      %v4886 = vld [vmem:[%s354 + $0x70] sm:$0xff]
      %v4887 = vld [vmem:[%s354 + $0x78] sm:$0xff]
      %v4888 = vld [vmem:[%s354 + $0x80] sm:$0xff]
      %v4889 = vld [vmem:[%s354 + $0x88] sm:$0xff]
      %v4890 = vld [vmem:[%s354 + $0x90] sm:$0xff]
      %v4891 = vld [vmem:[%s354 + $0x98] sm:$0xff]
      %v4892 = vld [vmem:[%s354 + $0xa0] sm:$0xff]
      %v4893 = vld [vmem:[%s354 + $0xa8] sm:$0xff]
      %v4894 = vld [vmem:[%s354 + $0xb0] sm:$0xff]
      %v4895 = vld [vmem:[%s354 + $0xb8] sm:$0xff]
      %v4896 = vld [vmem:[%s354 + $0xc0] sm:$0xff]
      %v4897 = vld [vmem:[%s354 + $0xc8] sm:$0xff]
      %v4898 = vld [vmem:[%s354 + $0xd0] sm:$0xff]
      %v4899 = vld [vmem:[%s354 + $0xd8] sm:$0xff]
      %v4900 = vld [vmem:[%s354 + $0xe0] sm:$0xff]
      %v4901 = vld [vmem:[%s354 + $0xe8] sm:$0xff]
      %v4902 = vld [vmem:[%s354 + $0xf0] sm:$0xff]
      %v4903 = vld [vmem:[%s354 + $0xf8] sm:$0xff]
      %v4904 = vadd.f32 %v2085, %v4872
      %v4905 = vadd.f32 %v2086, %v4873
      %v4906 = vadd.f32 %v2087, %v4874
      %v4907 = vadd.f32 %v2088, %v4875
      %v4908 = vadd.f32 %v2089, %v4876
      %v4909 = vadd.f32 %v2090, %v4877
      %v4910 = vadd.f32 %v2091, %v4878
      %v4911 = vadd.f32 %v2092, %v4879
      %v4912 = vadd.f32 %v2093, %v4880
      %v4913 = vadd.f32 %v2094, %v4881
      %v4914 = vadd.f32 %v2095, %v4882
      %v4915 = vadd.f32 %v2096, %v4883
      %v4916 = vadd.f32 %v2097, %v4884
      %v4917 = vadd.f32 %v2098, %v4885
      %v4918 = vadd.f32 %v2099, %v4886
      %v4919 = vadd.f32 %v2100, %v4887
      %v4920 = vadd.f32 %v2101, %v4888
      %v4921 = vadd.f32 %v2102, %v4889
      %v4922 = vadd.f32 %v2103, %v4890
      %v4923 = vadd.f32 %v2104, %v4891
      %v4924 = vadd.f32 %v2105, %v4892
      %v4925 = vadd.f32 %v2106, %v4893
      %v4926 = vadd.f32 %v2107, %v4894
      %v4927 = vadd.f32 %v2108, %v4895
      %v4928 = vadd.f32 %v2109, %v4896
      %v4929 = vadd.f32 %v2110, %v4897
      %v4930 = vadd.f32 %v2111, %v4898
      %v4931 = vadd.f32 %v2112, %v4899
      %v4932 = vadd.f32 %v2113, %v4900
      %v4933 = vadd.f32 %v2114, %v4901
      %v4934 = vadd.f32 %v2115, %v4902
      %v4935 = vadd.f32 %v2116, %v4903
      %4936 = vst.msk [vmem:[%s359] sm:$0xff] %vm1601, %v4904
      %4937 = vst.msk [vmem:[%s359 + $0x8] sm:$0xff] %vm1601, %v4905
      %4938 = vst.msk [vmem:[%s359 + $0x10] sm:$0xff] %vm1601, %v4906
      %4939 = vst.msk [vmem:[%s359 + $0x18] sm:$0xff] %vm1601, %v4907
      %4940 = vst.msk [vmem:[%s359 + $0x20] sm:$0xff] %vm1601, %v4908
      %4941 = vst.msk [vmem:[%s359 + $0x28] sm:$0xff] %vm1601, %v4909
      %4942 = vst.msk [vmem:[%s359 + $0x30] sm:$0xff] %vm1601, %v4910
      %4943 = vst.msk [vmem:[%s359 + $0x38] sm:$0xff] %vm1601, %v4911
      %4944 = vst.msk [vmem:[%s359 + $0x40] sm:$0xff] %vm1601, %v4912
      %4945 = vst.msk [vmem:[%s359 + $0x48] sm:$0xff] %vm1601, %v4913
      %4946 = vst.msk [vmem:[%s359 + $0x50] sm:$0xff] %vm1601, %v4914
      %4947 = vst.msk [vmem:[%s359 + $0x58] sm:$0xff] %vm1601, %v4915
      %4948 = vst.msk [vmem:[%s359 + $0x60] sm:$0xff] %vm1601, %v4916
      %4949 = vst.msk [vmem:[%s359 + $0x68] sm:$0xff] %vm1601, %v4917
      %4950 = vst.msk [vmem:[%s359 + $0x70] sm:$0xff] %vm1601, %v4918
      %4951 = vst.msk [vmem:[%s359 + $0x78] sm:$0xff] %vm1601, %v4919
      %4952 = vst.msk [vmem:[%s359 + $0x80] sm:$0xff] %vm1601, %v4920
      %4953 = vst.msk [vmem:[%s359 + $0x88] sm:$0xff] %vm1601, %v4921
      %4954 = vst.msk [vmem:[%s359 + $0x90] sm:$0xff] %vm1601, %v4922
      %4955 = vst.msk [vmem:[%s359 + $0x98] sm:$0xff] %vm1601, %v4923
      %4956 = vst.msk [vmem:[%s359 + $0xa0] sm:$0xff] %vm1601, %v4924
      %4957 = vst.msk [vmem:[%s359 + $0xa8] sm:$0xff] %vm1601, %v4925
      %4958 = vst.msk [vmem:[%s359 + $0xb0] sm:$0xff] %vm1601, %v4926
      %4959 = vst.msk [vmem:[%s359 + $0xb8] sm:$0xff] %vm1601, %v4927
      %4960 = vst.msk [vmem:[%s359 + $0xc0] sm:$0xff] %vm1601, %v4928
      %4961 = vst.msk [vmem:[%s359 + $0xc8] sm:$0xff] %vm1601, %v4929
      %4962 = vst.msk [vmem:[%s359 + $0xd0] sm:$0xff] %vm1601, %v4930
      %4963 = vst.msk [vmem:[%s359 + $0xd8] sm:$0xff] %vm1601, %v4931
      %4964 = vst.msk [vmem:[%s359 + $0xe0] sm:$0xff] %vm1601, %v4932
      %4965 = vst.msk [vmem:[%s359 + $0xe8] sm:$0xff] %vm1601, %v4933
      %4966 = vst.msk [vmem:[%s359 + $0xf0] sm:$0xff] %vm1601, %v4934
      %4967 = vst.msk [vmem:[%s359 + $0xf8] sm:$0xff] %vm1601, %v4935
      %v4968 = vld [vmem:[%s354] sm:$0xff]
      %v4969 = vld [vmem:[%s354 + $0x8] sm:$0xff]
      %v4970 = vld [vmem:[%s354 + $0x10] sm:$0xff]
      %v4971 = vld [vmem:[%s354 + $0x18] sm:$0xff]
      %v4972 = vld [vmem:[%s354 + $0x20] sm:$0xff]
      %v4973 = vld [vmem:[%s354 + $0x28] sm:$0xff]
      %v4974 = vld [vmem:[%s354 + $0x30] sm:$0xff]
      %v4975 = vld [vmem:[%s354 + $0x38] sm:$0xff]
      %v4976 = vld [vmem:[%s354 + $0x40] sm:$0xff]
      %v4977 = vld [vmem:[%s354 + $0x48] sm:$0xff]
      %v4978 = vld [vmem:[%s354 + $0x50] sm:$0xff]
      %v4979 = vld [vmem:[%s354 + $0x58] sm:$0xff]
      %v4980 = vld [vmem:[%s354 + $0x60] sm:$0xff]
      %v4981 = vld [vmem:[%s354 + $0x68] sm:$0xff]
      %v4982 = vld [vmem:[%s354 + $0x70] sm:$0xff]
      %v4983 = vld [vmem:[%s354 + $0x78] sm:$0xff]
      %v4984 = vld [vmem:[%s354 + $0x80] sm:$0xff]
      %v4985 = vld [vmem:[%s354 + $0x88] sm:$0xff]
      %v4986 = vld [vmem:[%s354 + $0x90] sm:$0xff]
      %v4987 = vld [vmem:[%s354 + $0x98] sm:$0xff]
      %v4988 = vld [vmem:[%s354 + $0xa0] sm:$0xff]
      %v4989 = vld [vmem:[%s354 + $0xa8] sm:$0xff]
      %v4990 = vld [vmem:[%s354 + $0xb0] sm:$0xff]
      %v4991 = vld [vmem:[%s354 + $0xb8] sm:$0xff]
      %v4992 = vld [vmem:[%s354 + $0xc0] sm:$0xff]
      %v4993 = vld [vmem:[%s354 + $0xc8] sm:$0xff]
      %v4994 = vld [vmem:[%s354 + $0xd0] sm:$0xff]
      %v4995 = vld [vmem:[%s354 + $0xd8] sm:$0xff]
      %v4996 = vld [vmem:[%s354 + $0xe0] sm:$0xff]
      %v4997 = vld [vmem:[%s354 + $0xe8] sm:$0xff]
      %v4998 = vld [vmem:[%s354 + $0xf0] sm:$0xff]
      %v4999 = vld [vmem:[%s354 + $0xf8] sm:$0xff]
      %5032 = vrot.lane.b32.xlu0 %v4968, 112
      %v5033 = vpop.permute.xlu0 %5032
      %5034 = vrot.lane.b32.xlu0 %v4969, 112
      %v5035 = vpop.permute.xlu0 %5034
      %5036 = vrot.lane.b32.xlu0 %v4970, 112
      %v5037 = vpop.permute.xlu0 %5036
      %5038 = vrot.lane.b32.xlu0 %v4971, 112
      %v5039 = vpop.permute.xlu0 %5038
      %5040 = vrot.lane.b32.xlu0 %v4972, 112
      %v5041 = vpop.permute.xlu0 %5040
      %5042 = vrot.lane.b32.xlu0 %v4973, 112
      %v5043 = vpop.permute.xlu0 %5042
      %5044 = vrot.lane.b32.xlu0 %v4974, 112
      %v5045 = vpop.permute.xlu0 %5044
      %5046 = vrot.lane.b32.xlu0 %v4975, 112
      %v5047 = vpop.permute.xlu0 %5046
      %5048 = vrot.lane.b32.xlu0 %v4976, 112
      %v5049 = vpop.permute.xlu0 %5048
      %5050 = vrot.lane.b32.xlu0 %v4977, 112
      %v5051 = vpop.permute.xlu0 %5050
      %5052 = vrot.lane.b32.xlu0 %v4978, 112
      %v5053 = vpop.permute.xlu0 %5052
      %5054 = vrot.lane.b32.xlu0 %v4979, 112
      %v5055 = vpop.permute.xlu0 %5054
      %5056 = vrot.lane.b32.xlu0 %v4980, 112
      %v5057 = vpop.permute.xlu0 %5056
      %5058 = vrot.lane.b32.xlu0 %v4981, 112
      %v5059 = vpop.permute.xlu0 %5058
      %5060 = vrot.lane.b32.xlu0 %v4982, 112
      %v5061 = vpop.permute.xlu0 %5060
      %5062 = vrot.lane.b32.xlu0 %v4983, 112
      %v5063 = vpop.permute.xlu0 %5062
      %5064 = vrot.lane.b32.xlu0 %v4984, 112
      %v5065 = vpop.permute.xlu0 %5064
      %5066 = vrot.lane.b32.xlu0 %v4985, 112
      %v5067 = vpop.permute.xlu0 %5066
      %5068 = vrot.lane.b32.xlu0 %v4986, 112
      %v5069 = vpop.permute.xlu0 %5068
      %5070 = vrot.lane.b32.xlu0 %v4987, 112
      %v5071 = vpop.permute.xlu0 %5070
      %5072 = vrot.lane.b32.xlu0 %v4988, 112
      %v5073 = vpop.permute.xlu0 %5072
      %5074 = vrot.lane.b32.xlu0 %v4989, 112
      %v5075 = vpop.permute.xlu0 %5074
      %5076 = vrot.lane.b32.xlu0 %v4990, 112
      %v5077 = vpop.permute.xlu0 %5076
      %5078 = vrot.lane.b32.xlu0 %v4991, 112
      %v5079 = vpop.permute.xlu0 %5078
      %5080 = vrot.lane.b32.xlu0 %v4992, 112
      %v5081 = vpop.permute.xlu0 %5080
      %5082 = vrot.lane.b32.xlu0 %v4993, 112
      %v5083 = vpop.permute.xlu0 %5082
      %5084 = vrot.lane.b32.xlu0 %v4994, 112
      %v5085 = vpop.permute.xlu0 %5084
      %5086 = vrot.lane.b32.xlu0 %v4995, 112
      %v5087 = vpop.permute.xlu0 %5086
      %5088 = vrot.lane.b32.xlu0 %v4996, 112
      %v5089 = vpop.permute.xlu0 %5088
      %5090 = vrot.lane.b32.xlu0 %v4997, 112
      %v5091 = vpop.permute.xlu0 %5090
      %5092 = vrot.lane.b32.xlu0 %v4998, 112
      %v5093 = vpop.permute.xlu0 %5092
      %5094 = vrot.lane.b32.xlu0 %v4999, 112
      %v5095 = vpop.permute.xlu0 %5094
      %v5128 = vadd.f32 %v3476, %v5033
      %v5129 = vadd.f32 %v3477, %v5035
      %v5130 = vadd.f32 %v3478, %v5037
      %v5131 = vadd.f32 %v3479, %v5039
      %v5132 = vadd.f32 %v3480, %v5041
      %v5133 = vadd.f32 %v3481, %v5043
      %v5134 = vadd.f32 %v3482, %v5045
      %v5135 = vadd.f32 %v3483, %v5047
      %v5136 = vadd.f32 %v3484, %v5049
      %v5137 = vadd.f32 %v3485, %v5051
      %v5138 = vadd.f32 %v3486, %v5053
      %v5139 = vadd.f32 %v3487, %v5055
      %v5140 = vadd.f32 %v3488, %v5057
      %v5141 = vadd.f32 %v3489, %v5059
      %v5142 = vadd.f32 %v3490, %v5061
      %v5143 = vadd.f32 %v3491, %v5063
      %v5144 = vadd.f32 %v3492, %v5065
      %v5145 = vadd.f32 %v3493, %v5067
      %v5146 = vadd.f32 %v3494, %v5069
      %v5147 = vadd.f32 %v3495, %v5071
      %v5148 = vadd.f32 %v3496, %v5073
      %v5149 = vadd.f32 %v3497, %v5075
      %v5150 = vadd.f32 %v3498, %v5077
      %v5151 = vadd.f32 %v3499, %v5079
      %v5152 = vadd.f32 %v3500, %v5081
      %v5153 = vadd.f32 %v3501, %v5083
      %v5154 = vadd.f32 %v3502, %v5085
      %v5155 = vadd.f32 %v3503, %v5087
      %v5156 = vadd.f32 %v3504, %v5089
      %v5157 = vadd.f32 %v3505, %v5091
      %v5158 = vadd.f32 %v3506, %v5093
      %v5159 = vadd.f32 %v3507, %v5095
      %5192 = vrot.lane.b32.xlu0 %v5128, 16
      %v5193 = vpop.permute.xlu0 %5192
      %5194 = vrot.lane.b32.xlu0 %v5129, 16
      %v5195 = vpop.permute.xlu0 %5194
      %5196 = vrot.lane.b32.xlu0 %v5130, 16
      %v5197 = vpop.permute.xlu0 %5196
      %5198 = vrot.lane.b32.xlu0 %v5131, 16
      %v5199 = vpop.permute.xlu0 %5198
      %5200 = vrot.lane.b32.xlu0 %v5132, 16
      %v5201 = vpop.permute.xlu0 %5200
      %5202 = vrot.lane.b32.xlu0 %v5133, 16
      %v5203 = vpop.permute.xlu0 %5202
      %5204 = vrot.lane.b32.xlu0 %v5134, 16
      %v5205 = vpop.permute.xlu0 %5204
      %5206 = vrot.lane.b32.xlu0 %v5135, 16
      %v5207 = vpop.permute.xlu0 %5206
      %5208 = vrot.lane.b32.xlu0 %v5136, 16
      %v5209 = vpop.permute.xlu0 %5208
      %5210 = vrot.lane.b32.xlu0 %v5137, 16
      %v5211 = vpop.permute.xlu0 %5210
      %5212 = vrot.lane.b32.xlu0 %v5138, 16
      %v5213 = vpop.permute.xlu0 %5212
      %5214 = vrot.lane.b32.xlu0 %v5139, 16
      %v5215 = vpop.permute.xlu0 %5214
      %5216 = vrot.lane.b32.xlu0 %v5140, 16
      %v5217 = vpop.permute.xlu0 %5216
      %5218 = vrot.lane.b32.xlu0 %v5141, 16
      %v5219 = vpop.permute.xlu0 %5218
      %5220 = vrot.lane.b32.xlu0 %v5142, 16
      %v5221 = vpop.permute.xlu0 %5220
      %5222 = vrot.lane.b32.xlu0 %v5143, 16
      %v5223 = vpop.permute.xlu0 %5222
      %5224 = vrot.lane.b32.xlu0 %v5144, 16
      %v5225 = vpop.permute.xlu0 %5224
      %5226 = vrot.lane.b32.xlu0 %v5145, 16
      %v5227 = vpop.permute.xlu0 %5226
      %5228 = vrot.lane.b32.xlu0 %v5146, 16
      %v5229 = vpop.permute.xlu0 %5228
      %5230 = vrot.lane.b32.xlu0 %v5147, 16
      %v5231 = vpop.permute.xlu0 %5230
      %5232 = vrot.lane.b32.xlu0 %v5148, 16
      %v5233 = vpop.permute.xlu0 %5232
      %5234 = vrot.lane.b32.xlu0 %v5149, 16
      %v5235 = vpop.permute.xlu0 %5234
      %5236 = vrot.lane.b32.xlu0 %v5150, 16
      %v5237 = vpop.permute.xlu0 %5236
      %5238 = vrot.lane.b32.xlu0 %v5151, 16
      %v5239 = vpop.permute.xlu0 %5238
      %5240 = vrot.lane.b32.xlu0 %v5152, 16
      %v5241 = vpop.permute.xlu0 %5240
      %5242 = vrot.lane.b32.xlu0 %v5153, 16
      %v5243 = vpop.permute.xlu0 %5242
      %5244 = vrot.lane.b32.xlu0 %v5154, 16
      %v5245 = vpop.permute.xlu0 %5244
      %5246 = vrot.lane.b32.xlu0 %v5155, 16
      %v5247 = vpop.permute.xlu0 %5246
      %5248 = vrot.lane.b32.xlu0 %v5156, 16
      %v5249 = vpop.permute.xlu0 %5248
      %5250 = vrot.lane.b32.xlu0 %v5157, 16
      %v5251 = vpop.permute.xlu0 %5250
      %5252 = vrot.lane.b32.xlu0 %v5158, 16
      %v5253 = vpop.permute.xlu0 %5252
      %5254 = vrot.lane.b32.xlu0 %v5159, 16
      %v5255 = vpop.permute.xlu0 %5254
      %vm5288 = vcmask 195712
      %5289 = vst.msk [vmem:[%s359] sm:$0xff] %vm5288, %v5193
      %5290 = vst.msk [vmem:[%s359 + $0x8] sm:$0xff] %vm5288, %v5195
      %5291 = vst.msk [vmem:[%s359 + $0x10] sm:$0xff] %vm5288, %v5197
      %5292 = vst.msk [vmem:[%s359 + $0x18] sm:$0xff] %vm5288, %v5199
      %5293 = vst.msk [vmem:[%s359 + $0x20] sm:$0xff] %vm5288, %v5201
      %5294 = vst.msk [vmem:[%s359 + $0x28] sm:$0xff] %vm5288, %v5203
      %5295 = vst.msk [vmem:[%s359 + $0x30] sm:$0xff] %vm5288, %v5205
      %5296 = vst.msk [vmem:[%s359 + $0x38] sm:$0xff] %vm5288, %v5207
      %5297 = vst.msk [vmem:[%s359 + $0x40] sm:$0xff] %vm5288, %v5209
      %5298 = vst.msk [vmem:[%s359 + $0x48] sm:$0xff] %vm5288, %v5211
      %5299 = vst.msk [vmem:[%s359 + $0x50] sm:$0xff] %vm5288, %v5213
      %5300 = vst.msk [vmem:[%s359 + $0x58] sm:$0xff] %vm5288, %v5215
      %5301 = vst.msk [vmem:[%s359 + $0x60] sm:$0xff] %vm5288, %v5217
      %5302 = vst.msk [vmem:[%s359 + $0x68] sm:$0xff] %vm5288, %v5219
      %5303 = vst.msk [vmem:[%s359 + $0x70] sm:$0xff] %vm5288, %v5221
      %5304 = vst.msk [vmem:[%s359 + $0x78] sm:$0xff] %vm5288, %v5223
      %5305 = vst.msk [vmem:[%s359 + $0x80] sm:$0xff] %vm5288, %v5225
      %5306 = vst.msk [vmem:[%s359 + $0x88] sm:$0xff] %vm5288, %v5227
      %5307 = vst.msk [vmem:[%s359 + $0x90] sm:$0xff] %vm5288, %v5229
      %5308 = vst.msk [vmem:[%s359 + $0x98] sm:$0xff] %vm5288, %v5231
      %5309 = vst.msk [vmem:[%s359 + $0xa0] sm:$0xff] %vm5288, %v5233
      %5310 = vst.msk [vmem:[%s359 + $0xa8] sm:$0xff] %vm5288, %v5235
      %5311 = vst.msk [vmem:[%s359 + $0xb0] sm:$0xff] %vm5288, %v5237
      %5312 = vst.msk [vmem:[%s359 + $0xb8] sm:$0xff] %vm5288, %v5239
      %5313 = vst.msk [vmem:[%s359 + $0xc0] sm:$0xff] %vm5288, %v5241
      %5314 = vst.msk [vmem:[%s359 + $0xc8] sm:$0xff] %vm5288, %v5243
      %5315 = vst.msk [vmem:[%s359 + $0xd0] sm:$0xff] %vm5288, %v5245
      %5316 = vst.msk [vmem:[%s359 + $0xd8] sm:$0xff] %vm5288, %v5247
      %5317 = vst.msk [vmem:[%s359 + $0xe0] sm:$0xff] %vm5288, %v5249
      %5318 = vst.msk [vmem:[%s359 + $0xe8] sm:$0xff] %vm5288, %v5251
      %5319 = vst.msk [vmem:[%s359 + $0xf0] sm:$0xff] %vm5288, %v5253
      %5320 = vst.msk [vmem:[%s359 + $0xf8] sm:$0xff] %vm5288, %v5255
      %v5321 = vld [vmem:[%s354] sm:$0xff]
      %v5322 = vld [vmem:[%s354 + $0x8] sm:$0xff]
      %v5323 = vld [vmem:[%s354 + $0x10] sm:$0xff]
      %v5324 = vld [vmem:[%s354 + $0x18] sm:$0xff]
      %v5325 = vld [vmem:[%s354 + $0x20] sm:$0xff]
      %v5326 = vld [vmem:[%s354 + $0x28] sm:$0xff]
      %v5327 = vld [vmem:[%s354 + $0x30] sm:$0xff]
      %v5328 = vld [vmem:[%s354 + $0x38] sm:$0xff]
      %v5329 = vld [vmem:[%s354 + $0x40] sm:$0xff]
      %v5330 = vld [vmem:[%s354 + $0x48] sm:$0xff]
      %v5331 = vld [vmem:[%s354 + $0x50] sm:$0xff]
      %v5332 = vld [vmem:[%s354 + $0x58] sm:$0xff]
      %v5333 = vld [vmem:[%s354 + $0x60] sm:$0xff]
      %v5334 = vld [vmem:[%s354 + $0x68] sm:$0xff]
      %v5335 = vld [vmem:[%s354 + $0x70] sm:$0xff]
      %v5336 = vld [vmem:[%s354 + $0x78] sm:$0xff]
      %v5337 = vld [vmem:[%s354 + $0x80] sm:$0xff]
      %v5338 = vld [vmem:[%s354 + $0x88] sm:$0xff]
      %v5339 = vld [vmem:[%s354 + $0x90] sm:$0xff]
      %v5340 = vld [vmem:[%s354 + $0x98] sm:$0xff]
      %v5341 = vld [vmem:[%s354 + $0xa0] sm:$0xff]
      %v5342 = vld [vmem:[%s354 + $0xa8] sm:$0xff]
      %v5343 = vld [vmem:[%s354 + $0xb0] sm:$0xff]
      %v5344 = vld [vmem:[%s354 + $0xb8] sm:$0xff]
      %v5345 = vld [vmem:[%s354 + $0xc0] sm:$0xff]
      %v5346 = vld [vmem:[%s354 + $0xc8] sm:$0xff]
      %v5347 = vld [vmem:[%s354 + $0xd0] sm:$0xff]
      %v5348 = vld [vmem:[%s354 + $0xd8] sm:$0xff]
      %v5349 = vld [vmem:[%s354 + $0xe0] sm:$0xff]
      %v5350 = vld [vmem:[%s354 + $0xe8] sm:$0xff]
      %v5351 = vld [vmem:[%s354 + $0xf0] sm:$0xff]
      %v5352 = vld [vmem:[%s354 + $0xf8] sm:$0xff]
      %5385 = vrot.lane.b32.xlu0 %v5321, 104
      %v5386 = vpop.permute.xlu0 %5385
      %5387 = vrot.lane.b32.xlu0 %v5322, 104
      %v5388 = vpop.permute.xlu0 %5387
      %5389 = vrot.lane.b32.xlu0 %v5323, 104
      %v5390 = vpop.permute.xlu0 %5389
      %5391 = vrot.lane.b32.xlu0 %v5324, 104
      %v5392 = vpop.permute.xlu0 %5391
      %5393 = vrot.lane.b32.xlu0 %v5325, 104
      %v5394 = vpop.permute.xlu0 %5393
      %5395 = vrot.lane.b32.xlu0 %v5326, 104
      %v5396 = vpop.permute.xlu0 %5395
      %5397 = vrot.lane.b32.xlu0 %v5327, 104
      %v5398 = vpop.permute.xlu0 %5397
      %5399 = vrot.lane.b32.xlu0 %v5328, 104
      %v5400 = vpop.permute.xlu0 %5399
      %5401 = vrot.lane.b32.xlu0 %v5329, 104
      %v5402 = vpop.permute.xlu0 %5401
      %5403 = vrot.lane.b32.xlu0 %v5330, 104
      %v5404 = vpop.permute.xlu0 %5403
      %5405 = vrot.lane.b32.xlu0 %v5331, 104
      %v5406 = vpop.permute.xlu0 %5405
      %5407 = vrot.lane.b32.xlu0 %v5332, 104
      %v5408 = vpop.permute.xlu0 %5407
      %5409 = vrot.lane.b32.xlu0 %v5333, 104
      %v5410 = vpop.permute.xlu0 %5409
      %5411 = vrot.lane.b32.xlu0 %v5334, 104
      %v5412 = vpop.permute.xlu0 %5411
      %5413 = vrot.lane.b32.xlu0 %v5335, 104
      %v5414 = vpop.permute.xlu0 %5413
      %5415 = vrot.lane.b32.xlu0 %v5336, 104
      %v5416 = vpop.permute.xlu0 %5415
      %5417 = vrot.lane.b32.xlu0 %v5337, 104
      %v5418 = vpop.permute.xlu0 %5417
      %5419 = vrot.lane.b32.xlu0 %v5338, 104
      %v5420 = vpop.permute.xlu0 %5419
      %5421 = vrot.lane.b32.xlu0 %v5339, 104
      %v5422 = vpop.permute.xlu0 %5421
      %5423 = vrot.lane.b32.xlu0 %v5340, 104
      %v5424 = vpop.permute.xlu0 %5423
      %5425 = vrot.lane.b32.xlu0 %v5341, 104
      %v5426 = vpop.permute.xlu0 %5425
      %5427 = vrot.lane.b32.xlu0 %v5342, 104
      %v5428 = vpop.permute.xlu0 %5427
      %5429 = vrot.lane.b32.xlu0 %v5343, 104
      %v5430 = vpop.permute.xlu0 %5429
      %5431 = vrot.lane.b32.xlu0 %v5344, 104
      %v5432 = vpop.permute.xlu0 %5431
      %5433 = vrot.lane.b32.xlu0 %v5345, 104
      %v5434 = vpop.permute.xlu0 %5433
      %5435 = vrot.lane.b32.xlu0 %v5346, 104
      %v5436 = vpop.permute.xlu0 %5435
      %5437 = vrot.lane.b32.xlu0 %v5347, 104
      %v5438 = vpop.permute.xlu0 %5437
      %5439 = vrot.lane.b32.xlu0 %v5348, 104
      %v5440 = vpop.permute.xlu0 %5439
      %5441 = vrot.lane.b32.xlu0 %v5349, 104
      %v5442 = vpop.permute.xlu0 %5441
      %5443 = vrot.lane.b32.xlu0 %v5350, 104
      %v5444 = vpop.permute.xlu0 %5443
      %5445 = vrot.lane.b32.xlu0 %v5351, 104
      %v5446 = vpop.permute.xlu0 %5445
      %5447 = vrot.lane.b32.xlu0 %v5352, 104
      %v5448 = vpop.permute.xlu0 %5447
      %v5481 = vadd.f32 %v4840, %v5386
      %v5482 = vadd.f32 %v4841, %v5388
      %v5483 = vadd.f32 %v4842, %v5390
      %v5484 = vadd.f32 %v4843, %v5392
      %v5485 = vadd.f32 %v4844, %v5394
      %v5486 = vadd.f32 %v4845, %v5396
      %v5487 = vadd.f32 %v4846, %v5398
      %v5488 = vadd.f32 %v4847, %v5400
      %v5489 = vadd.f32 %v4848, %v5402
      %v5490 = vadd.f32 %v4849, %v5404
      %v5491 = vadd.f32 %v4850, %v5406
      %v5492 = vadd.f32 %v4851, %v5408
      %v5493 = vadd.f32 %v4852, %v5410
      %v5494 = vadd.f32 %v4853, %v5412
      %v5495 = vadd.f32 %v4854, %v5414
      %v5496 = vadd.f32 %v4855, %v5416
      %v5497 = vadd.f32 %v4856, %v5418
      %v5498 = vadd.f32 %v4857, %v5420
      %v5499 = vadd.f32 %v4858, %v5422
      %v5500 = vadd.f32 %v4859, %v5424
      %v5501 = vadd.f32 %v4860, %v5426
      %v5502 = vadd.f32 %v4861, %v5428
      %v5503 = vadd.f32 %v4862, %v5430
      %v5504 = vadd.f32 %v4863, %v5432
      %v5505 = vadd.f32 %v4864, %v5434
      %v5506 = vadd.f32 %v4865, %v5436
      %v5507 = vadd.f32 %v4866, %v5438
      %v5508 = vadd.f32 %v4867, %v5440
      %v5509 = vadd.f32 %v4868, %v5442
      %v5510 = vadd.f32 %v4869, %v5444
      %v5511 = vadd.f32 %v4870, %v5446
      %v5512 = vadd.f32 %v4871, %v5448
      %5545 = vrot.lane.b32.xlu0 %v5481, 24
      %v5546 = vpop.permute.xlu0 %5545
      %5547 = vrot.lane.b32.xlu0 %v5482, 24
      %v5548 = vpop.permute.xlu0 %5547
      %5549 = vrot.lane.b32.xlu0 %v5483, 24
      %v5550 = vpop.permute.xlu0 %5549
      %5551 = vrot.lane.b32.xlu0 %v5484, 24
      %v5552 = vpop.permute.xlu0 %5551
      %5553 = vrot.lane.b32.xlu0 %v5485, 24
      %v5554 = vpop.permute.xlu0 %5553
      %5555 = vrot.lane.b32.xlu0 %v5486, 24
      %v5556 = vpop.permute.xlu0 %5555
      %5557 = vrot.lane.b32.xlu0 %v5487, 24
      %v5558 = vpop.permute.xlu0 %5557
      %5559 = vrot.lane.b32.xlu0 %v5488, 24
      %v5560 = vpop.permute.xlu0 %5559
      %5561 = vrot.lane.b32.xlu0 %v5489, 24
      %v5562 = vpop.permute.xlu0 %5561
      %5563 = vrot.lane.b32.xlu0 %v5490, 24
      %v5564 = vpop.permute.xlu0 %5563
      %5565 = vrot.lane.b32.xlu0 %v5491, 24
      %v5566 = vpop.permute.xlu0 %5565
      %5567 = vrot.lane.b32.xlu0 %v5492, 24
      %v5568 = vpop.permute.xlu0 %5567
      %5569 = vrot.lane.b32.xlu0 %v5493, 24
      %v5570 = vpop.permute.xlu0 %5569
      %5571 = vrot.lane.b32.xlu0 %v5494, 24
      %v5572 = vpop.permute.xlu0 %5571
      %5573 = vrot.lane.b32.xlu0 %v5495, 24
      %v5574 = vpop.permute.xlu0 %5573
      %5575 = vrot.lane.b32.xlu0 %v5496, 24
      %v5576 = vpop.permute.xlu0 %5575
      %5577 = vrot.lane.b32.xlu0 %v5497, 24
      %v5578 = vpop.permute.xlu0 %5577
      %5579 = vrot.lane.b32.xlu0 %v5498, 24
      %v5580 = vpop.permute.xlu0 %5579
      %5581 = vrot.lane.b32.xlu0 %v5499, 24
      %v5582 = vpop.permute.xlu0 %5581
      %5583 = vrot.lane.b32.xlu0 %v5500, 24
      %v5584 = vpop.permute.xlu0 %5583
      %5585 = vrot.lane.b32.xlu0 %v5501, 24
      %v5586 = vpop.permute.xlu0 %5585
      %5587 = vrot.lane.b32.xlu0 %v5502, 24
      %v5588 = vpop.permute.xlu0 %5587
      %5589 = vrot.lane.b32.xlu0 %v5503, 24
      %v5590 = vpop.permute.xlu0 %5589
      %5591 = vrot.lane.b32.xlu0 %v5504, 24
      %v5592 = vpop.permute.xlu0 %5591
      %5593 = vrot.lane.b32.xlu0 %v5505, 24
      %v5594 = vpop.permute.xlu0 %5593
      %5595 = vrot.lane.b32.xlu0 %v5506, 24
      %v5596 = vpop.permute.xlu0 %5595
      %5597 = vrot.lane.b32.xlu0 %v5507, 24
      %v5598 = vpop.permute.xlu0 %5597
      %5599 = vrot.lane.b32.xlu0 %v5508, 24
      %v5600 = vpop.permute.xlu0 %5599
      %5601 = vrot.lane.b32.xlu0 %v5509, 24
      %v5602 = vpop.permute.xlu0 %5601
      %5603 = vrot.lane.b32.xlu0 %v5510, 24
      %v5604 = vpop.permute.xlu0 %5603
      %5605 = vrot.lane.b32.xlu0 %v5511, 24
      %v5606 = vpop.permute.xlu0 %5605
      %5607 = vrot.lane.b32.xlu0 %v5512, 24
      %v5608 = vpop.permute.xlu0 %5607
      %vm5641 = vcmask 261312
      %5642 = vst.msk [vmem:[%s359] sm:$0xff] %vm5641, %v5546
      %5643 = vst.msk [vmem:[%s359 + $0x8] sm:$0xff] %vm5641, %v5548
      %5644 = vst.msk [vmem:[%s359 + $0x10] sm:$0xff] %vm5641, %v5550
      %5645 = vst.msk [vmem:[%s359 + $0x18] sm:$0xff] %vm5641, %v5552
      %5646 = vst.msk [vmem:[%s359 + $0x20] sm:$0xff] %vm5641, %v5554
      %5647 = vst.msk [vmem:[%s359 + $0x28] sm:$0xff] %vm5641, %v5556
      %5648 = vst.msk [vmem:[%s359 + $0x30] sm:$0xff] %vm5641, %v5558
      %5649 = vst.msk [vmem:[%s359 + $0x38] sm:$0xff] %vm5641, %v5560
      %5650 = vst.msk [vmem:[%s359 + $0x40] sm:$0xff] %vm5641, %v5562
      %5651 = vst.msk [vmem:[%s359 + $0x48] sm:$0xff] %vm5641, %v5564
      %5652 = vst.msk [vmem:[%s359 + $0x50] sm:$0xff] %vm5641, %v5566
      %5653 = vst.msk [vmem:[%s359 + $0x58] sm:$0xff] %vm5641, %v5568
      %5654 = vst.msk [vmem:[%s359 + $0x60] sm:$0xff] %vm5641, %v5570
      %5655 = vst.msk [vmem:[%s359 + $0x68] sm:$0xff] %vm5641, %v5572
      %5656 = vst.msk [vmem:[%s359 + $0x70] sm:$0xff] %vm5641, %v5574
      %5657 = vst.msk [vmem:[%s359 + $0x78] sm:$0xff] %vm5641, %v5576
      %5658 = vst.msk [vmem:[%s359 + $0x80] sm:$0xff] %vm5641, %v5578
      %5659 = vst.msk [vmem:[%s359 + $0x88] sm:$0xff] %vm5641, %v5580
      %5660 = vst.msk [vmem:[%s359 + $0x90] sm:$0xff] %vm5641, %v5582
      %5661 = vst.msk [vmem:[%s359 + $0x98] sm:$0xff] %vm5641, %v5584
      %5662 = vst.msk [vmem:[%s359 + $0xa0] sm:$0xff] %vm5641, %v5586
      %5663 = vst.msk [vmem:[%s359 + $0xa8] sm:$0xff] %vm5641, %v5588
      %5664 = vst.msk [vmem:[%s359 + $0xb0] sm:$0xff] %vm5641, %v5590
      %5665 = vst.msk [vmem:[%s359 + $0xb8] sm:$0xff] %vm5641, %v5592
      %5666 = vst.msk [vmem:[%s359 + $0xc0] sm:$0xff] %vm5641, %v5594
      %5667 = vst.msk [vmem:[%s359 + $0xc8] sm:$0xff] %vm5641, %v5596
      %5668 = vst.msk [vmem:[%s359 + $0xd0] sm:$0xff] %vm5641, %v5598
      %5669 = vst.msk [vmem:[%s359 + $0xd8] sm:$0xff] %vm5641, %v5600
      %5670 = vst.msk [vmem:[%s359 + $0xe0] sm:$0xff] %vm5641, %v5602
      %5671 = vst.msk [vmem:[%s359 + $0xe8] sm:$0xff] %vm5641, %v5604
      %5672 = vst.msk [vmem:[%s359 + $0xf0] sm:$0xff] %vm5641, %v5606
      %5673 = vst.msk [vmem:[%s359 + $0xf8] sm:$0xff] %vm5641, %v5608
      %p5674 = scmp.lt.s32.totalorder %s21, 1
      %s5675 = scalar_select %p5674, %s21, 1
      %s5676 = smul.addr %s5675, 32
      %s5677 = smul.addr %s5676, 8
      %s5678 = scalar_lea.vmem %s10, %s5677
      // Predicated region
      $region61: #{tpu_custom_call.1} parent=59 // pred_check
        %p5679 = pneg %p254
      $region62: #{tpu_custom_call.1} parent=59 // pred_check_branch
        %5681 = sbr.rel (%p5679) target = $region64
      $region63: #{tpu_custom_call.1} parent=59 // pred_region
        _
      $region64: #{tpu_custom_call.1} parent=59 // pred_fallthru
        _
    $region60: #{tpu_custom_call.1} parent=5 // pred_fallthru
      _
    %p5682 = scmp.le.s32.totalorder 2, %s16
    // Predicated region
    $region65: #{tpu_custom_call.1} parent=5 // pred_check
      %p5683 = pneg %p5682
    $region66: #{tpu_custom_call.1} parent=5 // pred_check_branch
      %5685 = sbr.rel (%p5683) target = $region68
    $region67: #{tpu_custom_call.1} parent=5 // pred_region
      %s5686 = ssub.s32 %s16, 2
      // Predicated region
      $region69: #{tpu_custom_call.1} parent=67 // pred_check
        %p5687 = pneg %p260
      $region70: #{tpu_custom_call.1} parent=67 // pred_check_branch
        %5689 = sbr.rel (%p5687) target = $region72
      $region71: #{tpu_custom_call.1} parent=67 // pred_region
        %p5690 = scmp.lt.s32.totalorder %s22, 1
        %s5691 = scalar_select %p5690, %s22, 1
        %s5692 = smul.addr %s5691, 32
        %s5693 = smul.addr %s5692, 8
        %s5694 = scalar_lea.vmem %s10, %s5693
      $region72: #{tpu_custom_call.1} parent=67 // pred_fallthru
        _
    $region68: #{tpu_custom_call.1} parent=5 // pred_fallthru
      _
  $region6: #{tpu_custom_call.1} parent=0 // loop_footer
    %s20 = sadd.s32 1, %s16
  $region7: #{tpu_custom_call.1} parent=0 // loop_footer_branch
    %15 = sbr.rel target = $region3
  $region8: #{tpu_custom_call.1} parent=0 // loop_exit
    _

</llo_original>
